<compile_context>
chip_gen: v7x
topology: tpu7x:2x2x1
jax: 0.10.0
libtpu: 0.0.40
codegen_flags: <defaults>
</compile_context>

<pallas_src>
import functools

import jax
import jax.numpy as jnp
from jax.experimental import pallas as pl
from jax.experimental.pallas import tpu as pltpu

EPS = 1e-5


def _round_up(x, m):
    return (x + m - 1) // m * m


# ---------------------------------------------------------------------------
# Pallas kernel: fused 3x3 conv (9-tap accumulate) + bias + ReLU on one tile
# ---------------------------------------------------------------------------
def _conv3x3_tap_kernel(x_ref, w_ref, b_ref, o_ref, *, tap_offsets):
    """One row tile of a 3x3 SAME conv, expressed as 9 shifted matmuls.

    x_ref : (TM + HALO, Cin)   bf16  flattened width-padded rows (+ halo)
    w_ref : (9, Cin, Cout)     bf16  per-tap weights (fully resident)
    b_ref : (1, Cout)          f32
    o_ref : (TM, Cout)         f32
    """
    tm = o_ref.shape[0]
    cout = o_ref.shape[1]
    acc = jnp.zeros((tm, cout), jnp.float32)
    # Static python loop -> unrolled into 9 MXU matmuls, f32 accumulation.
    for d, off in enumerate(tap_offsets):
        xd = x_ref[pl.ds(off, tm), :]                  # static shift, VMEM-local
        acc = acc + jnp.dot(xd, w_ref[d], preferred_element_type=jnp.float32)
    acc = acc + b_ref[...]
    o_ref[...] = jnp.maximum(acc, 0.0).astype(o_ref.dtype)


# ---------------------------------------------------------------------------
# Per-layer wrapper: conv3x3(SAME) + bias + ReLU
# ---------------------------------------------------------------------------
def _conv3x3_bias_relu(x_nhwc, w_hwio, b, *, tm_target=512):
    n, h, w, cin = x_nhwc.shape
    cout = w_hwio.shape[-1]

    # Pad input channels up to a multiple of 16 (layer 1 has Cin=1) so the
    # MXU contraction dim is non-degenerate and bf16 sublane-packed; the
    # zero-padded weights keep the math exact.
    cin_p = _round_up(cin, 16)
    if cin_p != cin:
        x_nhwc = jnp.pad(x_nhwc, ((0, 0), (0, 0), (0, 0), (0, cin_p - cin)))
        w_hwio = jnp.pad(w_hwio, ((0, 0), (0, 0), (0, cin_p - cin), (0, 0)))
        cin = cin_p

    hp, wp = h + 2, w + 2              # spatially zero-padded (SAME) extents
    halo = 2 * wp + 2                  # extra flattened rows a tile must see
    m_valid = h * wp                   # flattened output rows we keep
    tm = _round_up(max(halo, min(tm_target, m_valid)), 8)
    mp = _round_up(m_valid, tm)        # padded row count (multiple of TM)
    nt = mp // tm                      # row tiles per image
    g = n * nt                         # total grid size

    # Zero-pad spatially, flatten each image row-major, and pad the flattened
    # stream so every tile sees a full TM + HALO window.
    xpad = jnp.pad(x_nhwc, ((0, 0), (1, 1), (1, 1), (0, 0)))
    xf = xpad.reshape(n, hp * wp, cin)
    xf = jnp.pad(xf, ((0, 0), (0, mp + tm - hp * wp), (0, 0)))
    xf = xf.astype(jnp.bfloat16)

    # Halo'd row tiles: tile j covers flattened rows [j*TM, j*TM + TM + HALO).
    # Duplication factor is (1 + HALO/TM), not the 9x of materialized im2col.
    main = xf[:, :mp, :].reshape(n, nt, tm, cin)
    nxt = xf[:, tm:tm + mp, :].reshape(n, nt, tm, cin)[:, :, :halo, :]
    xtiles = jnp.concatenate([main, nxt], axis=2).reshape(g, tm + halo, cin)

    w9 = w_hwio.reshape(9, cin, cout).astype(jnp.bfloat16)
    b2 = b.reshape(1, cout).astype(jnp.float32)

    # Tap (ky, kx) of the 3x3 stencil is a shift of ky*Wp + kx flattened rows.
    tap_offsets = tuple(ky * wp + kx for ky in range(3) for kx in range(3))
    kernel = functools.partial(_conv3x3_tap_kernel, tap_offsets=tap_offsets)

    out = pl.pallas_call(
        kernel,
        out_shape=jax.ShapeDtypeStruct((g, tm, cout), jnp.float32),
        grid=(g,),
        in_specs=[
            # Per-tile activation block (double-buffered by the pipeline).
            pl.BlockSpec((None, tm + halo, cin), lambda i: (i, 0, 0)),
            # Weights / bias: constant index map -> fetched once, kept resident.
            pl.BlockSpec((9, cin, cout), lambda i: (0, 0, 0)),
            pl.BlockSpec((1, cout), lambda i: (0, 0)),
        ],
        out_specs=pl.BlockSpec((None, tm, cout), lambda i: (i, 0, 0)),
        compiler_params=pltpu.CompilerParams(
            # Independent row tiles -> shard across both TCs on v7x megacore.
            dimension_semantics=("parallel",),
            # Per-step VMEM is ~1-2 MiB at these channel counts; 32 MiB is a
            # safe cap on every generation (well under v7x's 64 MiB physical).
            vmem_limit_bytes=32 * 1024 * 1024,
        ),
    )(xtiles, w9, b2)

    # Drop the width-padding garbage columns and the row padding.
    out = out.reshape(n, mp, cout)[:, :m_valid, :]
    out = out.reshape(n, h, wp, cout)[:, :, :w, :]
    return out


# ---------------------------------------------------------------------------
# BatchNorm2d (train mode) -- cheap per-channel reduction + affine; left to
# XLA so the conv kernel's row grid stays correct under tiling.
# ---------------------------------------------------------------------------
def _batchnorm_train(x_nhwc, gamma, beta, eps=EPS):
    mean = jnp.mean(x_nhwc, axis=(0, 1, 2), keepdims=True)
    var = jnp.mean(jnp.square(x_nhwc - mean), axis=(0, 1, 2), keepdims=True)
    return (x_nhwc - mean) * jax.lax.rsqrt(var + eps) \
        * gamma.reshape(1, 1, 1, -1) + beta.reshape(1, 1, 1, -1)


def encoder_forward(x_nchw, params, *, tm_target=512):
    """Encoder.forward: conv1-relu-bn -> conv2-relu-bn -> conv3-relu."""
    x = jnp.transpose(x_nchw, (0, 2, 3, 1))           # NCHW -> NHWC
    o1 = _conv3x3_bias_relu(x, params["w1"], params["b1"], tm_target=tm_target)
    o1 = _batchnorm_train(o1, params["bn_g"], params["bn_b"])
    o2 = _conv3x3_bias_relu(o1, params["w2"], params["b2"], tm_target=tm_target)
    o2 = _batchnorm_train(o2, params["bn_g"], params["bn_b"])
    o3 = _conv3x3_bias_relu(o2, params["w3"], params["b3"], tm_target=tm_target)
    return jnp.transpose(o3, (0, 3, 1, 2))            # NHWC -> NCHW


# ---------------------------------------------------------------------------
# Pure-JAX f32 reference (for correctness check)
# ---------------------------------------------------------------------------
def _ref_forward(x_nchw, params):
    def conv(x, w, b):
        y = jax.lax.conv_general_dilated(
            x, w, window_strides=(1, 1), padding="SAME",
            dimension_numbers=("NHWC", "HWIO", "NHWC"),
            precision=jax.lax.Precision.HIGHEST)
        return y + b.reshape(1, 1, 1, -1)

    def bn(y, g, bt):
        m = jnp.mean(y, axis=(0, 1, 2), keepdims=True)
        v = jnp.mean(jnp.square(y - m), axis=(0, 1, 2), keepdims=True)
        return (y - m) * jax.lax.rsqrt(v + EPS) * g.reshape(1, 1, 1, -1) \
            + bt.reshape(1, 1, 1, -1)

    x = jnp.transpose(x_nchw, (0, 2, 3, 1))
    o = bn(jax.nn.relu(conv(x, params["w1"], params["b1"])),
           params["bn_g"], params["bn_b"])
    o = bn(jax.nn.relu(conv(o, params["w2"], params["b2"])),
           params["bn_g"], params["bn_b"])
    o = jax.nn.relu(conv(o, params["w3"], params["b3"]))
    return jnp.transpose(o, (0, 3, 1, 2))


def init_params(key):
    ks = jax.random.split(key, 6)
    return {
        # HWIO conv weights, deterministic synthetic init.
        "w1": 0.3 * jax.random.normal(ks[0], (3, 3, 1, 64), jnp.float32),
        "b1": 0.1 * jax.random.normal(ks[1], (64,), jnp.float32),
        "w2": 0.05 * jax.random.normal(ks[2], (3, 3, 64, 64), jnp.float32),
        "b2": 0.1 * jax.random.normal(ks[3], (64,), jnp.float32),
        "w3": 0.05 * jax.random.normal(ks[4], (3, 3, 64, 32), jnp.float32),
        "b3": 0.1 * jax.random.normal(ks[5], (32,), jnp.float32),
        # nn.BatchNorm2d(64) default affine init: weight=1, bias=0.
        "bn_g": jnp.ones((64,), jnp.float32),
        "bn_b": jnp.zeros((64,), jnp.float32),
    }


if __name__ == "__main__":
    key = jax.random.PRNGKey(0)
    k_x, k_p = jax.random.split(key)

    # Small NCHW input consistent with Conv2d(1, 64, 3, padding=1).
    x = jax.random.normal(k_x, (2, 1, 16, 16), jnp.float32)
    params = init_params(k_p)

    # tm_target=128 at this toy size so each layer runs a multi-tile grid
    # (N=2 images x 3 row tiles = 6 grid steps per layer).
    fwd = jax.jit(functools.partial(encoder_forward, tm_target=128))
    out = jax.block_until_ready(fwd(x, params))

    ref = jax.block_until_ready(_ref_forward(x, params))
    assert out.shape == (2, 32, 16, 16), out.shape

    # bf16 MXU operands with f32 accumulation vs a pure-f32 reference:
    # per-element error is O(1e-2) on O(1) activations.
    max_err = float(jnp.max(jnp.abs(out - ref)))
    mean_err = float(jnp.mean(jnp.abs(out - ref)))
    assert jnp.allclose(out, ref, atol=1e-1, rtol=1e-1), (max_err, mean_err)
    assert mean_err < 2e-2, mean_err

    print("KERNEL_OK")
</pallas_src>

<mosaic_0001>
module attributes {stable_mosaic.version = 11 : i64} {
  func.func @_conv3x3_tap_kernel(%arg0: i32, %arg1: memref<1x166x16xbf16, #tpu.memory_space<vmem>>, %arg2: memref<9x16x64xbf16, #tpu.memory_space<vmem>>, %arg3: memref<1x64xf32, #tpu.memory_space<vmem>>, %arg4: memref<1x128x64xf32, #tpu.memory_space<vmem>>) attributes {dimension_semantics = [#tpu.dimension_semantics<parallel>], iteration_bounds = array<i64: 6>, scalar_prefetch = 0 : i64, scratch_operands = 0 : i64, tpu.core_type = #tpu.core_type<tc>, window_params = [{transform_indices = @transform_0, window_bounds = array<i64: 1, 166, 16>}, {pipeline_mode = #tpu.pipeline_mode<synchronous>, transform_indices = @transform_1, window_bounds = array<i64: 9, 16, 64>}, {pipeline_mode = #tpu.pipeline_mode<synchronous>, transform_indices = @transform_2, window_bounds = array<i64: 1, 64>}, {transform_indices = @transform_3, window_bounds = array<i64: 1, 128, 64>}]} {
    %cst = arith.constant 0.000000e+00 : f32
    %0 = vector.broadcast %cst : f32 to vector<128x64xf32>
    %c0 = arith.constant 0 : index
    %c0_0 = arith.constant 0 : index
    %c0_1 = arith.constant 0 : index
    %1 = vector.load %arg1[%c0, %c0_0, %c0_1] : memref<1x166x16xbf16, #tpu.memory_space<vmem>>, vector<1x128x16xbf16>
    %2 = vector.shape_cast %1 : vector<1x128x16xbf16> to vector<128x16xbf16>
    %c0_2 = arith.constant 0 : index
    %c0_3 = arith.constant 0 : index
    %c0_4 = arith.constant 0 : index
    %3 = vector.load %arg2[%c0_2, %c0_3, %c0_4] : memref<9x16x64xbf16, #tpu.memory_space<vmem>>, vector<1x16x64xbf16>
    %4 = vector.shape_cast %3 : vector<1x16x64xbf16> to vector<16x64xbf16>
    %cst_5 = arith.constant dense<0.000000e+00> : vector<128x64xf32>
    %5 = tpu.matmul %2, %4, %cst_5 {dimension_numbers = #tpu.dot_dimension_numbers<[1], [0], [0], [1], [0, 0, 1, 1], [], []>} : vector<128x16xbf16>, vector<16x64xbf16>, vector<128x64xf32> -> vector<128x64xf32>
    %6 = arith.addf %0, %5 : vector<128x64xf32>
    %c0_6 = arith.constant 0 : index
    %c1 = arith.constant 1 : index
    %c0_7 = arith.constant 0 : index
    %7 = vector.load %arg1[%c0_6, %c1, %c0_7] : memref<1x166x16xbf16, #tpu.memory_space<vmem>>, vector<1x128x16xbf16>
    %8 = vector.shape_cast %7 : vector<1x128x16xbf16> to vector<128x16xbf16>
    %c1_8 = arith.constant 1 : index
    %c0_9 = arith.constant 0 : index
    %c0_10 = arith.constant 0 : index
    %9 = vector.load %arg2[%c1_8, %c0_9, %c0_10] : memref<9x16x64xbf16, #tpu.memory_space<vmem>>, vector<1x16x64xbf16>
    %10 = vector.shape_cast %9 : vector<1x16x64xbf16> to vector<16x64xbf16>
    %cst_11 = arith.constant dense<0.000000e+00> : vector<128x64xf32>
    %11 = tpu.matmul %8, %10, %cst_11 {dimension_numbers = #tpu.dot_dimension_numbers<[1], [0], [0], [1], [0, 0, 1, 1], [], []>} : vector<128x16xbf16>, vector<16x64xbf16>, vector<128x64xf32> -> vector<128x64xf32>
    %12 = arith.addf %6, %11 : vector<128x64xf32>
    %c0_12 = arith.constant 0 : index
    %c2 = arith.constant 2 : index
    %c0_13 = arith.constant 0 : index
    %13 = vector.load %arg1[%c0_12, %c2, %c0_13] : memref<1x166x16xbf16, #tpu.memory_space<vmem>>, vector<1x128x16xbf16>
    %14 = vector.shape_cast %13 : vector<1x128x16xbf16> to vector<128x16xbf16>
    %c2_14 = arith.constant 2 : index
    %c0_15 = arith.constant 0 : index
    %c0_16 = arith.constant 0 : index
    %15 = vector.load %arg2[%c2_14, %c0_15, %c0_16] : memref<9x16x64xbf16, #tpu.memory_space<vmem>>, vector<1x16x64xbf16>
    %16 = vector.shape_cast %15 : vector<1x16x64xbf16> to vector<16x64xbf16>
    %cst_17 = arith.constant dense<0.000000e+00> : vector<128x64xf32>
    %17 = tpu.matmul %14, %16, %cst_17 {dimension_numbers = #tpu.dot_dimension_numbers<[1], [0], [0], [1], [0, 0, 1, 1], [], []>} : vector<128x16xbf16>, vector<16x64xbf16>, vector<128x64xf32> -> vector<128x64xf32>
    %18 = arith.addf %12, %17 : vector<128x64xf32>
    %c0_18 = arith.constant 0 : index
    %c18 = arith.constant 18 : index
    %c0_19 = arith.constant 0 : index
    %19 = vector.load %arg1[%c0_18, %c18, %c0_19] : memref<1x166x16xbf16, #tpu.memory_space<vmem>>, vector<1x128x16xbf16>
    %20 = vector.shape_cast %19 : vector<1x128x16xbf16> to vector<128x16xbf16>
    %c3 = arith.constant 3 : index
    %c0_20 = arith.constant 0 : index
    %c0_21 = arith.constant 0 : index
    %21 = vector.load %arg2[%c3, %c0_20, %c0_21] : memref<9x16x64xbf16, #tpu.memory_space<vmem>>, vector<1x16x64xbf16>
    %22 = vector.shape_cast %21 : vector<1x16x64xbf16> to vector<16x64xbf16>
    %cst_22 = arith.constant dense<0.000000e+00> : vector<128x64xf32>
    %23 = tpu.matmul %20, %22, %cst_22 {dimension_numbers = #tpu.dot_dimension_numbers<[1], [0], [0], [1], [0, 0, 1, 1], [], []>} : vector<128x16xbf16>, vector<16x64xbf16>, vector<128x64xf32> -> vector<128x64xf32>
    %24 = arith.addf %18, %23 : vector<128x64xf32>
    %c0_23 = arith.constant 0 : index
    %c19 = arith.constant 19 : index
    %c0_24 = arith.constant 0 : index
    %25 = vector.load %arg1[%c0_23, %c19, %c0_24] : memref<1x166x16xbf16, #tpu.memory_space<vmem>>, vector<1x128x16xbf16>
    %26 = vector.shape_cast %25 : vector<1x128x16xbf16> to vector<128x16xbf16>
    %c4 = arith.constant 4 : index
    %c0_25 = arith.constant 0 : index
    %c0_26 = arith.constant 0 : index
    %27 = vector.load %arg2[%c4, %c0_25, %c0_26] : memref<9x16x64xbf16, #tpu.memory_space<vmem>>, vector<1x16x64xbf16>
    %28 = vector.shape_cast %27 : vector<1x16x64xbf16> to vector<16x64xbf16>
    %cst_27 = arith.constant dense<0.000000e+00> : vector<128x64xf32>
    %29 = tpu.matmul %26, %28, %cst_27 {dimension_numbers = #tpu.dot_dimension_numbers<[1], [0], [0], [1], [0, 0, 1, 1], [], []>} : vector<128x16xbf16>, vector<16x64xbf16>, vector<128x64xf32> -> vector<128x64xf32>
    %30 = arith.addf %24, %29 : vector<128x64xf32>
    %c0_28 = arith.constant 0 : index
    %c20 = arith.constant 20 : index
    %c0_29 = arith.constant 0 : index
    %31 = vector.load %arg1[%c0_28, %c20, %c0_29] : memref<1x166x16xbf16, #tpu.memory_space<vmem>>, vector<1x128x16xbf16>
    %32 = vector.shape_cast %31 : vector<1x128x16xbf16> to vector<128x16xbf16>
    %c5 = arith.constant 5 : index
    %c0_30 = arith.constant 0 : index
    %c0_31 = arith.constant 0 : index
    %33 = vector.load %arg2[%c5, %c0_30, %c0_31] : memref<9x16x64xbf16, #tpu.memory_space<vmem>>, vector<1x16x64xbf16>
    %34 = vector.shape_cast %33 : vector<1x16x64xbf16> to vector<16x64xbf16>
    %cst_32 = arith.constant dense<0.000000e+00> : vector<128x64xf32>
    %35 = tpu.matmul %32, %34, %cst_32 {dimension_numbers = #tpu.dot_dimension_numbers<[1], [0], [0], [1], [0, 0, 1, 1], [], []>} : vector<128x16xbf16>, vector<16x64xbf16>, vector<128x64xf32> -> vector<128x64xf32>
    %36 = arith.addf %30, %35 : vector<128x64xf32>
    %c0_33 = arith.constant 0 : index
    %c36 = arith.constant 36 : index
    %c0_34 = arith.constant 0 : index
    %37 = vector.load %arg1[%c0_33, %c36, %c0_34] : memref<1x166x16xbf16, #tpu.memory_space<vmem>>, vector<1x128x16xbf16>
    %38 = vector.shape_cast %37 : vector<1x128x16xbf16> to vector<128x16xbf16>
    %c6 = arith.constant 6 : index
    %c0_35 = arith.constant 0 : index
    %c0_36 = arith.constant 0 : index
    %39 = vector.load %arg2[%c6, %c0_35, %c0_36] : memref<9x16x64xbf16, #tpu.memory_space<vmem>>, vector<1x16x64xbf16>
    %40 = vector.shape_cast %39 : vector<1x16x64xbf16> to vector<16x64xbf16>
    %cst_37 = arith.constant dense<0.000000e+00> : vector<128x64xf32>
    %41 = tpu.matmul %38, %40, %cst_37 {dimension_numbers = #tpu.dot_dimension_numbers<[1], [0], [0], [1], [0, 0, 1, 1], [], []>} : vector<128x16xbf16>, vector<16x64xbf16>, vector<128x64xf32> -> vector<128x64xf32>
    %42 = arith.addf %36, %41 : vector<128x64xf32>
    %c0_38 = arith.constant 0 : index
    %c37 = arith.constant 37 : index
    %c0_39 = arith.constant 0 : index
    %43 = vector.load %arg1[%c0_38, %c37, %c0_39] : memref<1x166x16xbf16, #tpu.memory_space<vmem>>, vector<1x128x16xbf16>
    %44 = vector.shape_cast %43 : vector<1x128x16xbf16> to vector<128x16xbf16>
    %c7 = arith.constant 7 : index
    %c0_40 = arith.constant 0 : index
    %c0_41 = arith.constant 0 : index
    %45 = vector.load %arg2[%c7, %c0_40, %c0_41] : memref<9x16x64xbf16, #tpu.memory_space<vmem>>, vector<1x16x64xbf16>
    %46 = vector.shape_cast %45 : vector<1x16x64xbf16> to vector<16x64xbf16>
    %cst_42 = arith.constant dense<0.000000e+00> : vector<128x64xf32>
    %47 = tpu.matmul %44, %46, %cst_42 {dimension_numbers = #tpu.dot_dimension_numbers<[1], [0], [0], [1], [0, 0, 1, 1], [], []>} : vector<128x16xbf16>, vector<16x64xbf16>, vector<128x64xf32> -> vector<128x64xf32>
    %48 = arith.addf %42, %47 : vector<128x64xf32>
    %c0_43 = arith.constant 0 : index
    %c38 = arith.constant 38 : index
    %c0_44 = arith.constant 0 : index
    %49 = vector.load %arg1[%c0_43, %c38, %c0_44] : memref<1x166x16xbf16, #tpu.memory_space<vmem>>, vector<1x128x16xbf16>
    %50 = vector.shape_cast %49 : vector<1x128x16xbf16> to vector<128x16xbf16>
    %c8 = arith.constant 8 : index
    %c0_45 = arith.constant 0 : index
    %c0_46 = arith.constant 0 : index
    %51 = vector.load %arg2[%c8, %c0_45, %c0_46] : memref<9x16x64xbf16, #tpu.memory_space<vmem>>, vector<1x16x64xbf16>
    %52 = vector.shape_cast %51 : vector<1x16x64xbf16> to vector<16x64xbf16>
    %cst_47 = arith.constant dense<0.000000e+00> : vector<128x64xf32>
    %53 = tpu.matmul %50, %52, %cst_47 {dimension_numbers = #tpu.dot_dimension_numbers<[1], [0], [0], [1], [0, 0, 1, 1], [], []>} : vector<128x16xbf16>, vector<16x64xbf16>, vector<128x64xf32> -> vector<128x64xf32>
    %54 = arith.addf %48, %53 : vector<128x64xf32>
    %c0_48 = arith.constant 0 : index
    %c0_49 = arith.constant 0 : index
    %55 = vector.load %arg3[%c0_48, %c0_49] : memref<1x64xf32, #tpu.memory_space<vmem>>, vector<1x64xf32>
    %56 = vector.broadcast %55 : vector<1x64xf32> to vector<128x64xf32>
    %57 = arith.addf %54, %56 : vector<128x64xf32>
    %cst_50 = arith.constant 0.000000e+00 : f32
    %58 = vector.broadcast %cst_50 : f32 to vector<128x64xf32>
    %59 = arith.maximumf %57, %58 : vector<128x64xf32>
    %c0_51 = arith.constant 0 : index
    %c0_52 = arith.constant 0 : index
    %c0_53 = arith.constant 0 : index
    %60 = vector.load %arg4[%c0_51, %c0_52, %c0_53] : memref<1x128x64xf32, #tpu.memory_space<vmem>>, vector<1x128x64xf32>
    %61 = vector.shape_cast %60 : vector<1x128x64xf32> to vector<128x64xf32>
    %62 = vector.shape_cast %59 : vector<128x64xf32> to vector<1x128x64xf32>
    tpu.vector_store %arg4[%c0_51, %c0_52, %c0_53], %62 {strides = array<i32>} : memref<1x128x64xf32, #tpu.memory_space<vmem>>, vector<1x128x64xf32>,
    return
  }
  func.func @transform_0(%arg0: i32) -> (i32, i32, i32) {
    %c0_i32 = arith.constant 0 : i32
    %c0_i32_0 = arith.constant 0 : i32
    %c0_i32_1 = arith.constant 0 : i32
    return %arg0, %c0_i32, %c0_i32_0 : i32, i32, i32
  }
  func.func @transform_1(%arg0: i32) -> (i32, i32, i32) {
    %c0_i32 = arith.constant 0 : i32
    %c0_i32_0 = arith.constant 0 : i32
    %c0_i32_1 = arith.constant 0 : i32
    %c0_i32_2 = arith.constant 0 : i32
    return %c0_i32, %c0_i32_0, %c0_i32_1 : i32, i32, i32
  }
  func.func @transform_2(%arg0: i32) -> (i32, i32) {
    %c0_i32 = arith.constant 0 : i32
    %c0_i32_0 = arith.constant 0 : i32
    %c0_i32_1 = arith.constant 0 : i32
    return %c0_i32, %c0_i32_0 : i32, i32
  }
  func.func @transform_3(%arg0: i32) -> (i32, i32, i32) {
    %c0_i32 = arith.constant 0 : i32
    %c0_i32_0 = arith.constant 0 : i32
    %c0_i32_1 = arith.constant 0 : i32
    return %arg0, %c0_i32, %c0_i32_0 : i32, i32, i32
  }
}

module attributes {stable_mosaic.version = 11 : i64} {
  func.func @_conv3x3_tap_kernel(%arg0: i32, %arg1: memref<1x166x64xbf16, #tpu.memory_space<vmem>>, %arg2: memref<9x64x64xbf16, #tpu.memory_space<vmem>>, %arg3: memref<1x64xf32, #tpu.memory_space<vmem>>, %arg4: memref<1x128x64xf32, #tpu.memory_space<vmem>>) attributes {dimension_semantics = [#tpu.dimension_semantics<parallel>], iteration_bounds = array<i64: 6>, scalar_prefetch = 0 : i64, scratch_operands = 0 : i64, tpu.core_type = #tpu.core_type<tc>, window_params = [{transform_indices = @transform_0, window_bounds = array<i64: 1, 166, 64>}, {pipeline_mode = #tpu.pipeline_mode<synchronous>, transform_indices = @transform_1, window_bounds = array<i64: 9, 64, 64>}, {pipeline_mode = #tpu.pipeline_mode<synchronous>, transform_indices = @transform_2, window_bounds = array<i64: 1, 64>}, {transform_indices = @transform_3, window_bounds = array<i64: 1, 128, 64>}]} {
    %cst = arith.constant 0.000000e+00 : f32
    %0 = vector.broadcast %cst : f32 to vector<128x64xf32>
    %c0 = arith.constant 0 : index
    %c0_0 = arith.constant 0 : index
    %c0_1 = arith.constant 0 : index
    %1 = vector.load %arg1[%c0, %c0_0, %c0_1] : memref<1x166x64xbf16, #tpu.memory_space<vmem>>, vector<1x128x64xbf16>
    %2 = vector.shape_cast %1 : vector<1x128x64xbf16> to vector<128x64xbf16>
    %c0_2 = arith.constant 0 : index
    %c0_3 = arith.constant 0 : index
    %c0_4 = arith.constant 0 : index
    %3 = vector.load %arg2[%c0_2, %c0_3, %c0_4] : memref<9x64x64xbf16, #tpu.memory_space<vmem>>, vector<1x64x64xbf16>
    %4 = vector.shape_cast %3 : vector<1x64x64xbf16> to vector<64x64xbf16>
    %cst_5 = arith.constant dense<0.000000e+00> : vector<128x64xf32>
    %5 = tpu.matmul %2, %4, %cst_5 {dimension_numbers = #tpu.dot_dimension_numbers<[1], [0], [0], [1], [0, 0, 1, 1], [], []>} : vector<128x64xbf16>, vector<64x64xbf16>, vector<128x64xf32> -> vector<128x64xf32>
    %6 = arith.addf %0, %5 : vector<128x64xf32>
    %c0_6 = arith.constant 0 : index
    %c1 = arith.constant 1 : index
    %c0_7 = arith.constant 0 : index
    %7 = vector.load %arg1[%c0_6, %c1, %c0_7] : memref<1x166x64xbf16, #tpu.memory_space<vmem>>, vector<1x128x64xbf16>
    %8 = vector.shape_cast %7 : vector<1x128x64xbf16> to vector<128x64xbf16>
    %c1_8 = arith.constant 1 : index
    %c0_9 = arith.constant 0 : index
    %c0_10 = arith.constant 0 : index
    %9 = vector.load %arg2[%c1_8, %c0_9, %c0_10] : memref<9x64x64xbf16, #tpu.memory_space<vmem>>, vector<1x64x64xbf16>
    %10 = vector.shape_cast %9 : vector<1x64x64xbf16> to vector<64x64xbf16>
    %cst_11 = arith.constant dense<0.000000e+00> : vector<128x64xf32>
    %11 = tpu.matmul %8, %10, %cst_11 {dimension_numbers = #tpu.dot_dimension_numbers<[1], [0], [0], [1], [0, 0, 1, 1], [], []>} : vector<128x64xbf16>, vector<64x64xbf16>, vector<128x64xf32> -> vector<128x64xf32>
    %12 = arith.addf %6, %11 : vector<128x64xf32>
    %c0_12 = arith.constant 0 : index
    %c2 = arith.constant 2 : index
    %c0_13 = arith.constant 0 : index
    %13 = vector.load %arg1[%c0_12, %c2, %c0_13] : memref<1x166x64xbf16, #tpu.memory_space<vmem>>, vector<1x128x64xbf16>
    %14 = vector.shape_cast %13 : vector<1x128x64xbf16> to vector<128x64xbf16>
    %c2_14 = arith.constant 2 : index
    %c0_15 = arith.constant 0 : index
    %c0_16 = arith.constant 0 : index
    %15 = vector.load %arg2[%c2_14, %c0_15, %c0_16] : memref<9x64x64xbf16, #tpu.memory_space<vmem>>, vector<1x64x64xbf16>
    %16 = vector.shape_cast %15 : vector<1x64x64xbf16> to vector<64x64xbf16>
    %cst_17 = arith.constant dense<0.000000e+00> : vector<128x64xf32>
    %17 = tpu.matmul %14, %16, %cst_17 {dimension_numbers = #tpu.dot_dimension_numbers<[1], [0], [0], [1], [0, 0, 1, 1], [], []>} : vector<128x64xbf16>, vector<64x64xbf16>, vector<128x64xf32> -> vector<128x64xf32>
    %18 = arith.addf %12, %17 : vector<128x64xf32>
    %c0_18 = arith.constant 0 : index
    %c18 = arith.constant 18 : index
    %c0_19 = arith.constant 0 : index
    %19 = vector.load %arg1[%c0_18, %c18, %c0_19] : memref<1x166x64xbf16, #tpu.memory_space<vmem>>, vector<1x128x64xbf16>
    %20 = vector.shape_cast %19 : vector<1x128x64xbf16> to vector<128x64xbf16>
    %c3 = arith.constant 3 : index
    %c0_20 = arith.constant 0 : index
    %c0_21 = arith.constant 0 : index
    %21 = vector.load %arg2[%c3, %c0_20, %c0_21] : memref<9x64x64xbf16, #tpu.memory_space<vmem>>, vector<1x64x64xbf16>
    %22 = vector.shape_cast %21 : vector<1x64x64xbf16> to vector<64x64xbf16>
    %cst_22 = arith.constant dense<0.000000e+00> : vector<128x64xf32>
    %23 = tpu.matmul %20, %22, %cst_22 {dimension_numbers = #tpu.dot_dimension_numbers<[1], [0], [0], [1], [0, 0, 1, 1], [], []>} : vector<128x64xbf16>, vector<64x64xbf16>, vector<128x64xf32> -> vector<128x64xf32>
    %24 = arith.addf %18, %23 : vector<128x64xf32>
    %c0_23 = arith.constant 0 : index
    %c19 = arith.constant 19 : index
    %c0_24 = arith.constant 0 : index
    %25 = vector.load %arg1[%c0_23, %c19, %c0_24] : memref<1x166x64xbf16, #tpu.memory_space<vmem>>, vector<1x128x64xbf16>
    %26 = vector.shape_cast %25 : vector<1x128x64xbf16> to vector<128x64xbf16>
    %c4 = arith.constant 4 : index
    %c0_25 = arith.constant 0 : index
    %c0_26 = arith.constant 0 : index
    %27 = vector.load %arg2[%c4, %c0_25, %c0_26] : memref<9x64x64xbf16, #tpu.memory_space<vmem>>, vector<1x64x64xbf16>
    %28 = vector.shape_cast %27 : vector<1x64x64xbf16> to vector<64x64xbf16>
    %cst_27 = arith.constant dense<0.000000e+00> : vector<128x64xf32>
    %29 = tpu.matmul %26, %28, %cst_27 {dimension_numbers = #tpu.dot_dimension_numbers<[1], [0], [0], [1], [0, 0, 1, 1], [], []>} : vector<128x64xbf16>, vector<64x64xbf16>, vector<128x64xf32> -> vector<128x64xf32>
    %30 = arith.addf %24, %29 : vector<128x64xf32>
    %c0_28 = arith.constant 0 : index
    %c20 = arith.constant 20 : index
    %c0_29 = arith.constant 0 : index
    %31 = vector.load %arg1[%c0_28, %c20, %c0_29] : memref<1x166x64xbf16, #tpu.memory_space<vmem>>, vector<1x128x64xbf16>
    %32 = vector.shape_cast %31 : vector<1x128x64xbf16> to vector<128x64xbf16>
    %c5 = arith.constant 5 : index
    %c0_30 = arith.constant 0 : index
    %c0_31 = arith.constant 0 : index
    %33 = vector.load %arg2[%c5, %c0_30, %c0_31] : memref<9x64x64xbf16, #tpu.memory_space<vmem>>, vector<1x64x64xbf16>
    %34 = vector.shape_cast %33 : vector<1x64x64xbf16> to vector<64x64xbf16>
    %cst_32 = arith.constant dense<0.000000e+00> : vector<128x64xf32>
    %35 = tpu.matmul %32, %34, %cst_32 {dimension_numbers = #tpu.dot_dimension_numbers<[1], [0], [0], [1], [0, 0, 1, 1], [], []>} : vector<128x64xbf16>, vector<64x64xbf16>, vector<128x64xf32> -> vector<128x64xf32>
    %36 = arith.addf %30, %35 : vector<128x64xf32>
    %c0_33 = arith.constant 0 : index
    %c36 = arith.constant 36 : index
    %c0_34 = arith.constant 0 : index
    %37 = vector.load %arg1[%c0_33, %c36, %c0_34] : memref<1x166x64xbf16, #tpu.memory_space<vmem>>, vector<1x128x64xbf16>
    %38 = vector.shape_cast %37 : vector<1x128x64xbf16> to vector<128x64xbf16>
    %c6 = arith.constant 6 : index
    %c0_35 = arith.constant 0 : index
    %c0_36 = arith.constant 0 : index
    %39 = vector.load %arg2[%c6, %c0_35, %c0_36] : memref<9x64x64xbf16, #tpu.memory_space<vmem>>, vector<1x64x64xbf16>
    %40 = vector.shape_cast %39 : vector<1x64x64xbf16> to vector<64x64xbf16>
    %cst_37 = arith.constant dense<0.000000e+00> : vector<128x64xf32>
    %41 = tpu.matmul %38, %40, %cst_37 {dimension_numbers = #tpu.dot_dimension_numbers<[1], [0], [0], [1], [0, 0, 1, 1], [], []>} : vector<128x64xbf16>, vector<64x64xbf16>, vector<128x64xf32> -> vector<128x64xf32>
    %42 = arith.addf %36, %41 : vector<128x64xf32>
    %c0_38 = arith.constant 0 : index
    %c37 = arith.constant 37 : index
    %c0_39 = arith.constant 0 : index
    %43 = vector.load %arg1[%c0_38, %c37, %c0_39] : memref<1x166x64xbf16, #tpu.memory_space<vmem>>, vector<1x128x64xbf16>
    %44 = vector.shape_cast %43 : vector<1x128x64xbf16> to vector<128x64xbf16>
    %c7 = arith.constant 7 : index
    %c0_40 = arith.constant 0 : index
    %c0_41 = arith.constant 0 : index
    %45 = vector.load %arg2[%c7, %c0_40, %c0_41] : memref<9x64x64xbf16, #tpu.memory_space<vmem>>, vector<1x64x64xbf16>
    %46 = vector.shape_cast %45 : vector<1x64x64xbf16> to vector<64x64xbf16>
    %cst_42 = arith.constant dense<0.000000e+00> : vector<128x64xf32>
    %47 = tpu.matmul %44, %46, %cst_42 {dimension_numbers = #tpu.dot_dimension_numbers<[1], [0], [0], [1], [0, 0, 1, 1], [], []>} : vector<128x64xbf16>, vector<64x64xbf16>, vector<128x64xf32> -> vector<128x64xf32>
    %48 = arith.addf %42, %47 : vector<128x64xf32>
    %c0_43 = arith.constant 0 : index
    %c38 = arith.constant 38 : index
    %c0_44 = arith.constant 0 : index
    %49 = vector.load %arg1[%c0_43, %c38, %c0_44] : memref<1x166x64xbf16, #tpu.memory_space<vmem>>, vector<1x128x64xbf16>
    %50 = vector.shape_cast %49 : vector<1x128x64xbf16> to vector<128x64xbf16>
    %c8 = arith.constant 8 : index
    %c0_45 = arith.constant 0 : index
    %c0_46 = arith.constant 0 : index
    %51 = vector.load %arg2[%c8, %c0_45, %c0_46] : memref<9x64x64xbf16, #tpu.memory_space<vmem>>, vector<1x64x64xbf16>
    %52 = vector.shape_cast %51 : vector<1x64x64xbf16> to vector<64x64xbf16>
    %cst_47 = arith.constant dense<0.000000e+00> : vector<128x64xf32>
    %53 = tpu.matmul %50, %52, %cst_47 {dimension_numbers = #tpu.dot_dimension_numbers<[1], [0], [0], [1], [0, 0, 1, 1], [], []>} : vector<128x64xbf16>, vector<64x64xbf16>, vector<128x64xf32> -> vector<128x64xf32>
    %54 = arith.addf %48, %53 : vector<128x64xf32>
    %c0_48 = arith.constant 0 : index
    %c0_49 = arith.constant 0 : index
    %55 = vector.load %arg3[%c0_48, %c0_49] : memref<1x64xf32, #tpu.memory_space<vmem>>, vector<1x64xf32>
    %56 = vector.broadcast %55 : vector<1x64xf32> to vector<128x64xf32>
    %57 = arith.addf %54, %56 : vector<128x64xf32>
    %cst_50 = arith.constant 0.000000e+00 : f32
    %58 = vector.broadcast %cst_50 : f32 to vector<128x64xf32>
    %59 = arith.maximumf %57, %58 : vector<128x64xf32>
    %c0_51 = arith.constant 0 : index
    %c0_52 = arith.constant 0 : index
    %c0_53 = arith.constant 0 : index
    %60 = vector.load %arg4[%c0_51, %c0_52, %c0_53] : memref<1x128x64xf32, #tpu.memory_space<vmem>>, vector<1x128x64xf32>
    %61 = vector.shape_cast %60 : vector<1x128x64xf32> to vector<128x64xf32>
    %62 = vector.shape_cast %59 : vector<128x64xf32> to vector<1x128x64xf32>
    tpu.vector_store %arg4[%c0_51, %c0_52, %c0_53], %62 {strides = array<i32>} : memref<1x128x64xf32, #tpu.memory_space<vmem>>, vector<1x128x64xf32>,
    return
  }
  func.func @transform_0(%arg0: i32) -> (i32, i32, i32) {
    %c0_i32 = arith.constant 0 : i32
    %c0_i32_0 = arith.constant 0 : i32
    %c0_i32_1 = arith.constant 0 : i32
    return %arg0, %c0_i32, %c0_i32_0 : i32, i32, i32
  }
  func.func @transform_1(%arg0: i32) -> (i32, i32, i32) {
    %c0_i32 = arith.constant 0 : i32
    %c0_i32_0 = arith.constant 0 : i32
    %c0_i32_1 = arith.constant 0 : i32
    %c0_i32_2 = arith.constant 0 : i32
    return %c0_i32, %c0_i32_0, %c0_i32_1 : i32, i32, i32
  }
  func.func @transform_2(%arg0: i32) -> (i32, i32) {
    %c0_i32 = arith.constant 0 : i32
    %c0_i32_0 = arith.constant 0 : i32
    %c0_i32_1 = arith.constant 0 : i32
    return %c0_i32, %c0_i32_0 : i32, i32
  }
  func.func @transform_3(%arg0: i32) -> (i32, i32, i32) {
    %c0_i32 = arith.constant 0 : i32
    %c0_i32_0 = arith.constant 0 : i32
    %c0_i32_1 = arith.constant 0 : i32
    return %arg0, %c0_i32, %c0_i32_0 : i32, i32, i32
  }
}

module attributes {stable_mosaic.version = 11 : i64} {
  func.func @_conv3x3_tap_kernel(%arg0: i32, %arg1: memref<1x166x64xbf16, #tpu.memory_space<vmem>>, %arg2: memref<9x64x32xbf16, #tpu.memory_space<vmem>>, %arg3: memref<1x32xf32, #tpu.memory_space<vmem>>, %arg4: memref<1x128x32xf32, #tpu.memory_space<vmem>>) attributes {dimension_semantics = [#tpu.dimension_semantics<parallel>], iteration_bounds = array<i64: 6>, scalar_prefetch = 0 : i64, scratch_operands = 0 : i64, tpu.core_type = #tpu.core_type<tc>, window_params = [{transform_indices = @transform_0, window_bounds = array<i64: 1, 166, 64>}, {pipeline_mode = #tpu.pipeline_mode<synchronous>, transform_indices = @transform_1, window_bounds = array<i64: 9, 64, 32>}, {pipeline_mode = #tpu.pipeline_mode<synchronous>, transform_indices = @transform_2, window_bounds = array<i64: 1, 32>}, {transform_indices = @transform_3, window_bounds = array<i64: 1, 128, 32>}]} {
    %cst = arith.constant 0.000000e+00 : f32
    %0 = vector.broadcast %cst : f32 to vector<128x32xf32>
    %c0 = arith.constant 0 : index
    %c0_0 = arith.constant 0 : index
    %c0_1 = arith.constant 0 : index
    %1 = vector.load %arg1[%c0, %c0_0, %c0_1] : memref<1x166x64xbf16, #tpu.memory_space<vmem>>, vector<1x128x64xbf16>
    %2 = vector.shape_cast %1 : vector<1x128x64xbf16> to vector<128x64xbf16>
    %c0_2 = arith.constant 0 : index
    %c0_3 = arith.constant 0 : index
    %c0_4 = arith.constant 0 : index
    %3 = vector.load %arg2[%c0_2, %c0_3, %c0_4] : memref<9x64x32xbf16, #tpu.memory_space<vmem>>, vector<1x64x32xbf16>
    %4 = vector.shape_cast %3 : vector<1x64x32xbf16> to vector<64x32xbf16>
    %cst_5 = arith.constant dense<0.000000e+00> : vector<128x32xf32>
    %5 = tpu.matmul %2, %4, %cst_5 {dimension_numbers = #tpu.dot_dimension_numbers<[1], [0], [0], [1], [0, 0, 1, 1], [], []>} : vector<128x64xbf16>, vector<64x32xbf16>, vector<128x32xf32> -> vector<128x32xf32>
    %6 = arith.addf %0, %5 : vector<128x32xf32>
    %c0_6 = arith.constant 0 : index
    %c1 = arith.constant 1 : index
    %c0_7 = arith.constant 0 : index
    %7 = vector.load %arg1[%c0_6, %c1, %c0_7] : memref<1x166x64xbf16, #tpu.memory_space<vmem>>, vector<1x128x64xbf16>
    %8 = vector.shape_cast %7 : vector<1x128x64xbf16> to vector<128x64xbf16>
    %c1_8 = arith.constant 1 : index
    %c0_9 = arith.constant 0 : index
    %c0_10 = arith.constant 0 : index
    %9 = vector.load %arg2[%c1_8, %c0_9, %c0_10] : memref<9x64x32xbf16, #tpu.memory_space<vmem>>, vector<1x64x32xbf16>
    %10 = vector.shape_cast %9 : vector<1x64x32xbf16> to vector<64x32xbf16>
    %cst_11 = arith.constant dense<0.000000e+00> : vector<128x32xf32>
    %11 = tpu.matmul %8, %10, %cst_11 {dimension_numbers = #tpu.dot_dimension_numbers<[1], [0], [0], [1], [0, 0, 1, 1], [], []>} : vector<128x64xbf16>, vector<64x32xbf16>, vector<128x32xf32> -> vector<128x32xf32>
    %12 = arith.addf %6, %11 : vector<128x32xf32>
    %c0_12 = arith.constant 0 : index
    %c2 = arith.constant 2 : index
    %c0_13 = arith.constant 0 : index
    %13 = vector.load %arg1[%c0_12, %c2, %c0_13] : memref<1x166x64xbf16, #tpu.memory_space<vmem>>, vector<1x128x64xbf16>
    %14 = vector.shape_cast %13 : vector<1x128x64xbf16> to vector<128x64xbf16>
    %c2_14 = arith.constant 2 : index
    %c0_15 = arith.constant 0 : index
    %c0_16 = arith.constant 0 : index
    %15 = vector.load %arg2[%c2_14, %c0_15, %c0_16] : memref<9x64x32xbf16, #tpu.memory_space<vmem>>, vector<1x64x32xbf16>
    %16 = vector.shape_cast %15 : vector<1x64x32xbf16> to vector<64x32xbf16>
    %cst_17 = arith.constant dense<0.000000e+00> : vector<128x32xf32>
    %17 = tpu.matmul %14, %16, %cst_17 {dimension_numbers = #tpu.dot_dimension_numbers<[1], [0], [0], [1], [0, 0, 1, 1], [], []>} : vector<128x64xbf16>, vector<64x32xbf16>, vector<128x32xf32> -> vector<128x32xf32>
    %18 = arith.addf %12, %17 : vector<128x32xf32>
    %c0_18 = arith.constant 0 : index
    %c18 = arith.constant 18 : index
    %c0_19 = arith.constant 0 : index
    %19 = vector.load %arg1[%c0_18, %c18, %c0_19] : memref<1x166x64xbf16, #tpu.memory_space<vmem>>, vector<1x128x64xbf16>
    %20 = vector.shape_cast %19 : vector<1x128x64xbf16> to vector<128x64xbf16>
    %c3 = arith.constant 3 : index
    %c0_20 = arith.constant 0 : index
    %c0_21 = arith.constant 0 : index
    %21 = vector.load %arg2[%c3, %c0_20, %c0_21] : memref<9x64x32xbf16, #tpu.memory_space<vmem>>, vector<1x64x32xbf16>
    %22 = vector.shape_cast %21 : vector<1x64x32xbf16> to vector<64x32xbf16>
    %cst_22 = arith.constant dense<0.000000e+00> : vector<128x32xf32>
    %23 = tpu.matmul %20, %22, %cst_22 {dimension_numbers = #tpu.dot_dimension_numbers<[1], [0], [0], [1], [0, 0, 1, 1], [], []>} : vector<128x64xbf16>, vector<64x32xbf16>, vector<128x32xf32> -> vector<128x32xf32>
    %24 = arith.addf %18, %23 : vector<128x32xf32>
    %c0_23 = arith.constant 0 : index
    %c19 = arith.constant 19 : index
    %c0_24 = arith.constant 0 : index
    %25 = vector.load %arg1[%c0_23, %c19, %c0_24] : memref<1x166x64xbf16, #tpu.memory_space<vmem>>, vector<1x128x64xbf16>
    %26 = vector.shape_cast %25 : vector<1x128x64xbf16> to vector<128x64xbf16>
    %c4 = arith.constant 4 : index
    %c0_25 = arith.constant 0 : index
    %c0_26 = arith.constant 0 : index
    %27 = vector.load %arg2[%c4, %c0_25, %c0_26] : memref<9x64x32xbf16, #tpu.memory_space<vmem>>, vector<1x64x32xbf16>
    %28 = vector.shape_cast %27 : vector<1x64x32xbf16> to vector<64x32xbf16>
    %cst_27 = arith.constant dense<0.000000e+00> : vector<128x32xf32>
    %29 = tpu.matmul %26, %28, %cst_27 {dimension_numbers = #tpu.dot_dimension_numbers<[1], [0], [0], [1], [0, 0, 1, 1], [], []>} : vector<128x64xbf16>, vector<64x32xbf16>, vector<128x32xf32> -> vector<128x32xf32>
    %30 = arith.addf %24, %29 : vector<128x32xf32>
    %c0_28 = arith.constant 0 : index
    %c20 = arith.constant 20 : index
    %c0_29 = arith.constant 0 : index
    %31 = vector.load %arg1[%c0_28, %c20, %c0_29] : memref<1x166x64xbf16, #tpu.memory_space<vmem>>, vector<1x128x64xbf16>
    %32 = vector.shape_cast %31 : vector<1x128x64xbf16> to vector<128x64xbf16>
    %c5 = arith.constant 5 : index
    %c0_30 = arith.constant 0 : index
    %c0_31 = arith.constant 0 : index
    %33 = vector.load %arg2[%c5, %c0_30, %c0_31] : memref<9x64x32xbf16, #tpu.memory_space<vmem>>, vector<1x64x32xbf16>
    %34 = vector.shape_cast %33 : vector<1x64x32xbf16> to vector<64x32xbf16>
    %cst_32 = arith.constant dense<0.000000e+00> : vector<128x32xf32>
    %35 = tpu.matmul %32, %34, %cst_32 {dimension_numbers = #tpu.dot_dimension_numbers<[1], [0], [0], [1], [0, 0, 1, 1], [], []>} : vector<128x64xbf16>, vector<64x32xbf16>, vector<128x32xf32> -> vector<128x32xf32>
    %36 = arith.addf %30, %35 : vector<128x32xf32>
    %c0_33 = arith.constant 0 : index
    %c36 = arith.constant 36 : index
    %c0_34 = arith.constant 0 : index
    %37 = vector.load %arg1[%c0_33, %c36, %c0_34] : memref<1x166x64xbf16, #tpu.memory_space<vmem>>, vector<1x128x64xbf16>
    %38 = vector.shape_cast %37 : vector<1x128x64xbf16> to vector<128x64xbf16>
    %c6 = arith.constant 6 : index
    %c0_35 = arith.constant 0 : index
    %c0_36 = arith.constant 0 : index
    %39 = vector.load %arg2[%c6, %c0_35, %c0_36] : memref<9x64x32xbf16, #tpu.memory_space<vmem>>, vector<1x64x32xbf16>
    %40 = vector.shape_cast %39 : vector<1x64x32xbf16> to vector<64x32xbf16>
    %cst_37 = arith.constant dense<0.000000e+00> : vector<128x32xf32>
    %41 = tpu.matmul %38, %40, %cst_37 {dimension_numbers = #tpu.dot_dimension_numbers<[1], [0], [0], [1], [0, 0, 1, 1], [], []>} : vector<128x64xbf16>, vector<64x32xbf16>, vector<128x32xf32> -> vector<128x32xf32>
    %42 = arith.addf %36, %41 : vector<128x32xf32>
    %c0_38 = arith.constant 0 : index
    %c37 = arith.constant 37 : index
    %c0_39 = arith.constant 0 : index
    %43 = vector.load %arg1[%c0_38, %c37, %c0_39] : memref<1x166x64xbf16, #tpu.memory_space<vmem>>, vector<1x128x64xbf16>
    %44 = vector.shape_cast %43 : vector<1x128x64xbf16> to vector<128x64xbf16>
    %c7 = arith.constant 7 : index
    %c0_40 = arith.constant 0 : index
    %c0_41 = arith.constant 0 : index
    %45 = vector.load %arg2[%c7, %c0_40, %c0_41] : memref<9x64x32xbf16, #tpu.memory_space<vmem>>, vector<1x64x32xbf16>
    %46 = vector.shape_cast %45 : vector<1x64x32xbf16> to vector<64x32xbf16>
    %cst_42 = arith.constant dense<0.000000e+00> : vector<128x32xf32>
    %47 = tpu.matmul %44, %46, %cst_42 {dimension_numbers = #tpu.dot_dimension_numbers<[1], [0], [0], [1], [0, 0, 1, 1], [], []>} : vector<128x64xbf16>, vector<64x32xbf16>, vector<128x32xf32> -> vector<128x32xf32>
    %48 = arith.addf %42, %47 : vector<128x32xf32>
    %c0_43 = arith.constant 0 : index
    %c38 = arith.constant 38 : index
    %c0_44 = arith.constant 0 : index
    %49 = vector.load %arg1[%c0_43, %c38, %c0_44] : memref<1x166x64xbf16, #tpu.memory_space<vmem>>, vector<1x128x64xbf16>
    %50 = vector.shape_cast %49 : vector<1x128x64xbf16> to vector<128x64xbf16>
    %c8 = arith.constant 8 : index
    %c0_45 = arith.constant 0 : index
    %c0_46 = arith.constant 0 : index
    %51 = vector.load %arg2[%c8, %c0_45, %c0_46] : memref<9x64x32xbf16, #tpu.memory_space<vmem>>, vector<1x64x32xbf16>
    %52 = vector.shape_cast %51 : vector<1x64x32xbf16> to vector<64x32xbf16>
    %cst_47 = arith.constant dense<0.000000e+00> : vector<128x32xf32>
    %53 = tpu.matmul %50, %52, %cst_47 {dimension_numbers = #tpu.dot_dimension_numbers<[1], [0], [0], [1], [0, 0, 1, 1], [], []>} : vector<128x64xbf16>, vector<64x32xbf16>, vector<128x32xf32> -> vector<128x32xf32>
    %54 = arith.addf %48, %53 : vector<128x32xf32>
    %c0_48 = arith.constant 0 : index
    %c0_49 = arith.constant 0 : index
    %55 = vector.load %arg3[%c0_48, %c0_49] : memref<1x32xf32, #tpu.memory_space<vmem>>, vector<1x32xf32>
    %56 = vector.broadcast %55 : vector<1x32xf32> to vector<128x32xf32>
    %57 = arith.addf %54, %56 : vector<128x32xf32>
    %cst_50 = arith.constant 0.000000e+00 : f32
    %58 = vector.broadcast %cst_50 : f32 to vector<128x32xf32>
    %59 = arith.maximumf %57, %58 : vector<128x32xf32>
    %c0_51 = arith.constant 0 : index
    %c0_52 = arith.constant 0 : index
    %c0_53 = arith.constant 0 : index
    %60 = vector.load %arg4[%c0_51, %c0_52, %c0_53] : memref<1x128x32xf32, #tpu.memory_space<vmem>>, vector<1x128x32xf32>
    %61 = vector.shape_cast %60 : vector<1x128x32xf32> to vector<128x32xf32>
    %62 = vector.shape_cast %59 : vector<128x32xf32> to vector<1x128x32xf32>
    tpu.vector_store %arg4[%c0_51, %c0_52, %c0_53], %62 {strides = array<i32>} : memref<1x128x32xf32, #tpu.memory_space<vmem>>, vector<1x128x32xf32>,
    return
  }
  func.func @transform_0(%arg0: i32) -> (i32, i32, i32) {
    %c0_i32 = arith.constant 0 : i32
    %c0_i32_0 = arith.constant 0 : i32
    %c0_i32_1 = arith.constant 0 : i32
    return %arg0, %c0_i32, %c0_i32_0 : i32, i32, i32
  }
  func.func @transform_1(%arg0: i32) -> (i32, i32, i32) {
    %c0_i32 = arith.constant 0 : i32
    %c0_i32_0 = arith.constant 0 : i32
    %c0_i32_1 = arith.constant 0 : i32
    %c0_i32_2 = arith.constant 0 : i32
    return %c0_i32, %c0_i32_0, %c0_i32_1 : i32, i32, i32
  }
  func.func @transform_2(%arg0: i32) -> (i32, i32) {
    %c0_i32 = arith.constant 0 : i32
    %c0_i32_0 = arith.constant 0 : i32
    %c0_i32_1 = arith.constant 0 : i32
    return %c0_i32, %c0_i32_0 : i32, i32
  }
  func.func @transform_3(%arg0: i32) -> (i32, i32, i32) {
    %c0_i32 = arith.constant 0 : i32
    %c0_i32_0 = arith.constant 0 : i32
    %c0_i32_1 = arith.constant 0 : i32
    return %arg0, %c0_i32, %c0_i32_0 : i32, i32, i32
  }
}

</mosaic_0001>

<llo_original>
// kernel: encoder_forward.3
$region0: #{encoder_forward.3}
  #allocation0 [shape = 'u32[]', space=smem, size = 0x4, offset = 0x4, fixed_abs, tag = 'smem constant byte address 0x4 - core index']
  #allocation1 [shape = 'u32[144,128]{1,0:T(1,128)}', space=vmem, size = 0x12000, scoped, tag = 'internal scratch']
  %s0 = inlined_call_operand.vmem [shape: bf16[6,166,16], index: 0, kind: input, shape index: {}]
  %s1 = inlined_call_operand.vmem [shape: bf16[9,16,64], index: 1, kind: input, shape index: {}]
  %s2 = inlined_call_operand.vmem [shape: f32[1,64], index: 2, kind: input, shape index: {}]
  %s3 = inlined_call_operand.vmem [shape: f32[6,128,64], index: 3, kind: output, shape index: {}]
  %s4 = sld [smem:[#allocation0]]
  $region45: #{encoder_forward.3} parent=0
    _
  %s6 = ssub.s32 1, %s4
  %s7 = scalar_select 0, %s6, %s4
  loop: start=0, step=1, limit=8
  $region2: #{encoder_forward.3} parent=0 // loop_pre_header
    _
  $region3: #{encoder_forward.3} parent=0 // loop_header
    %s9 = sphi 0, %s13
    %p10 = scmp.ge.s32.totalorder %s9, 8
    %s19 = sphi 0, %s21
    %s22 = sphi 0, %s19
    %s23 = sphi 0, %s22
    %s39 = sphi 0, %s23
    %s43 = sphi 0, %s43
    %s45 = sphi 0, %s43
    %s46 = sphi 0, %s45
    %s60 = sphi 0, %s46
    %s64 = sphi 0, %s64
    %s66 = sphi 0, %s64
    %s67 = sphi 0, %s66
    %s81 = sphi 0, %s67
    %s87 = sphi 0, %s89
    %s90 = sphi 0, %s87
    %s91 = sphi 0, %s90
    %s107 = sphi 0, %s91
  $region4: #{encoder_forward.3} parent=0 // loop_header_branch
    %12 = sbr.rel (%p10) target = $region8
  $region5: #{encoder_forward.3} parent=0 // loop_body
    %s14 = ssub.s32 %s9, 1
    %s15 = ssub.s32 %s9, 2
    %s16 = sadd.s32 %s9, 1
    %s17 = ssub.s32 %s9, %s16
    %p18 = scmp.eq.s32.totalorder %s17, 0
    %s20 = sadd.s32 %s19, 1
    %s21 = scalar_select %p18, %s19, %s20
    %p24 = pneg %p18
    %p25 = scmp.eq.s32.totalorder %s9, 5
    %p26 = por %p24, %p25
    %p27 = scmp.ne.s32.totalorder %s19, %s22
    %p28 = scmp.eq.s32.totalorder %s9, 0
    %p29 = por %p27, %p28
    %p30 = scmp.ne.s32.totalorder %s19, %s22
    %p31 = scmp.eq.s32.totalorder %s14, 5
    %p32 = por %p30, %p31
    %p33 = scmp.ne.s32.totalorder %s22, %s23
    %p34 = scmp.eq.s32.totalorder %s14, 0
    %p35 = por %p33, %p34
    %p36 = scmp.ne.s32.totalorder %s22, %s23
    %p37 = scmp.eq.s32.totalorder %s15, 5
    %p38 = por %p36, %p37
    %p40 = scmp.ne.s32.totalorder %s23, %s39
    %p41 = scmp.eq.s32.totalorder %s15, 0
    %p42 = por %p40, %p41
    %s44 = sadd.s32 %s43, 1
    %p47 = scmp.eq.s32.totalorder %s9, 5
    %p48 = scmp.ne.s32.totalorder %s43, %s45
    %p49 = scmp.eq.s32.totalorder %s9, 0
    %p50 = por %p48, %p49
    %p51 = scmp.ne.s32.totalorder %s43, %s45
    %p52 = scmp.eq.s32.totalorder %s14, 5
    %p53 = por %p51, %p52
    %p54 = scmp.ne.s32.totalorder %s45, %s46
    %p55 = scmp.eq.s32.totalorder %s14, 0
    %p56 = por %p54, %p55
    %p57 = scmp.ne.s32.totalorder %s45, %s46
    %p58 = scmp.eq.s32.totalorder %s15, 5
    %p59 = por %p57, %p58
    %p61 = scmp.ne.s32.totalorder %s46, %s60
    %p62 = scmp.eq.s32.totalorder %s15, 0
    %p63 = por %p61, %p62
    %s65 = sadd.s32 %s64, 1
    %p68 = scmp.eq.s32.totalorder %s9, 5
    %p69 = scmp.ne.s32.totalorder %s64, %s66
    %p70 = scmp.eq.s32.totalorder %s9, 0
    %p71 = por %p69, %p70
    %p72 = scmp.ne.s32.totalorder %s64, %s66
    %p73 = scmp.eq.s32.totalorder %s14, 5
    %p74 = por %p72, %p73
    %p75 = scmp.ne.s32.totalorder %s66, %s67
    %p76 = scmp.eq.s32.totalorder %s14, 0
    %p77 = por %p75, %p76
    %p78 = scmp.ne.s32.totalorder %s66, %s67
    %p79 = scmp.eq.s32.totalorder %s15, 5
    %p80 = por %p78, %p79
    %p82 = scmp.ne.s32.totalorder %s67, %s81
    %p83 = scmp.eq.s32.totalorder %s15, 0
    %p84 = por %p82, %p83
    %s85 = ssub.s32 %s9, %s16
    %p86 = scmp.eq.s32.totalorder %s85, 0
    %s88 = sadd.s32 %s87, 1
    %s89 = scalar_select %p86, %s87, %s88
    %p92 = pneg %p86
    %p93 = scmp.eq.s32.totalorder %s9, 5
    %p94 = por %p92, %p93
    %p95 = scmp.ne.s32.totalorder %s87, %s90
    %p96 = scmp.eq.s32.totalorder %s9, 0
    %p97 = por %p95, %p96
    %p98 = scmp.ne.s32.totalorder %s87, %s90
    %p99 = scmp.eq.s32.totalorder %s14, 5
    %p100 = por %p98, %p99
    %p101 = scmp.ne.s32.totalorder %s90, %s91
    %p102 = scmp.eq.s32.totalorder %s14, 0
    %p103 = por %p101, %p102
    %p104 = scmp.ne.s32.totalorder %s90, %s91
    %p105 = scmp.eq.s32.totalorder %s15, 5
    %p106 = por %p104, %p105
    %p108 = scmp.ne.s32.totalorder %s91, %s107
    %p109 = scmp.eq.s32.totalorder %s15, 0
    %p110 = por %p108, %p109
    %p111 = scmp.le.s32.totalorder 1, %s9
    %p112 = scmp.lt.s32.totalorder %s9, 7
    %p113 = pnand %p111, %p112
    %p114 = pneg %p113
    // Predicated region
    $region9: #{encoder_forward.3} parent=5 // pred_check
      _
    $region10: #{encoder_forward.3} parent=5 // pred_check_branch
      %116 = sbr.rel (%p113) target = $region12
    $region11: #{encoder_forward.3} parent=5 // pred_region
      %s117 = ssub.s32 %s9, 1
      // Predicated region
      $region13: #{encoder_forward.3} parent=11 // pred_check
        %p118 = pneg %p56
      $region14: #{encoder_forward.3} parent=11 // pred_check_branch
        %120 = sbr.rel (%p118) target = $region16
      $region15: #{encoder_forward.3} parent=11 // pred_region
        _
      $region16: #{encoder_forward.3} parent=11 // pred_fallthru
        _
      // Predicated region
      $region17: #{encoder_forward.3} parent=11 // pred_check
        %p121 = pneg %p77
      $region18: #{encoder_forward.3} parent=11 // pred_check_branch
        %123 = sbr.rel (%p121) target = $region20
      $region19: #{encoder_forward.3} parent=11 // pred_region
        _
      $region20: #{encoder_forward.3} parent=11 // pred_fallthru
        _
    $region12: #{encoder_forward.3} parent=5 // pred_fallthru
      _
    %p124 = scmp.lt.s32.totalorder %s9, 6
    // Predicated region
    $region21: #{encoder_forward.3} parent=5 // pred_check
      %p125 = pneg %p124
    $region22: #{encoder_forward.3} parent=5 // pred_check_branch
      %127 = sbr.rel (%p125) target = $region24
    $region23: #{encoder_forward.3} parent=5 // pred_region
      // Predicated region
      $region25: #{encoder_forward.3} parent=23 // pred_check
        %p128 = pneg %p29
      $region26: #{encoder_forward.3} parent=23 // pred_check_branch
        %130 = sbr.rel (%p128) target = $region28
      $region27: #{encoder_forward.3} parent=23 // pred_region
        %p131 = scmp.lt.s32.totalorder %s9, 5
        %s132 = scalar_select %p131, %s9, 5
        %s133 = smul.addr %s132, 21
        %s134 = smul.addr %s133, 4
        %s135 = scalar_lea.vmem %s0, %s134
      $region28: #{encoder_forward.3} parent=23 // pred_fallthru
        _
    $region24: #{encoder_forward.3} parent=5 // pred_fallthru
      _
    %p136 = scmp.le.s32.totalorder 1, %s9
    %p137 = scmp.lt.s32.totalorder %s9, 7
    %p138 = pnand %p136, %p137
    %p139 = pneg %p138
    // Predicated region
    $region29: #{encoder_forward.3} parent=5 // pred_check
      _
    $region30: #{encoder_forward.3} parent=5 // pred_check_branch
      %141 = sbr.rel (%p138) target = $region32
    $region31: #{encoder_forward.3} parent=5 // pred_region
      %s142 = ssub.s32 %s9, 1
      %p143 = scmp.lt.s32.totalorder %s14, 5
      %s144 = scalar_select %p143, %s14, 5
      %s145 = smul.addr %s144, 21
      %s146 = smul.addr %s145, 4
      %s147 = scalar_lea.vmem %s0, %s146
      %p148 = pneg %p35
      %p149 = pneg %p32
      %p150 = pneg %p56
      %p151 = pneg %p53
      %p152 = pneg %p77
      %p153 = pneg %p74
      %p154 = pneg %p103
      %p155 = pneg %p100
      %p156 = scmp.lt.s32.totalorder %s14, 5
      %s157 = scalar_select %p156, %s14, 5
      %s158 = smul.addr %s157, 16
      %s159 = smul.addr %s158, 8
      %s160 = scalar_lea.vmem %s3, %s159
      %p161 = scmp.lt.s32.totalorder %s14, 5
      %s162 = scalar_select %p161, %s14, 5
      %s163 = smul.addr %s162, 21
      %s164 = smul.addr %s163, 4
      %s165 = scalar_lea.vmem %s0, %s164
      %p166 = scmp.lt.s32.totalorder %s14, 5
      %s167 = scalar_select %p166, %s14, 5
      %s168 = smul.addr %s167, 16
      %s169 = smul.addr %s168, 8
      %s170 = scalar_lea.vmem %s3, %s169
      %v172 = vld [vmem:[%s165] sm:$0xf]
      %v173 = vld [vmem:[%s165 + $0x4] sm:$0xf]
      %v174 = vld [vmem:[%s165 + $0x8] sm:$0xf]
      %v175 = vld [vmem:[%s165 + $0xc] sm:$0xf]
      %v176 = vld [vmem:[%s165 + $0x10] sm:$0xf]
      %v177 = vld [vmem:[%s165 + $0x14] sm:$0xf]
      %v178 = vld [vmem:[%s165 + $0x18] sm:$0xf]
      %v179 = vld [vmem:[%s165 + $0x1c] sm:$0xf]
      %v180 = vld [vmem:[%s165 + $0x20] sm:$0xf]
      %v181 = vld [vmem:[%s165 + $0x24] sm:$0xf]
      %v182 = vld [vmem:[%s165 + $0x28] sm:$0xf]
      %v183 = vld [vmem:[%s165 + $0x2c] sm:$0xf]
      %v184 = vld [vmem:[%s165 + $0x30] sm:$0xf]
      %v185 = vld [vmem:[%s165 + $0x34] sm:$0xf]
      %v186 = vld [vmem:[%s165 + $0x38] sm:$0xf]
      %v187 = vld [vmem:[%s165 + $0x3c] sm:$0xf]
      %v188 = vld [vmem:[%s1] sm:$0xf]
      %v189 = vld [vmem:[%s1 + $0x4] sm:$0xf]
      %v190 = vld [vmem:[%s165 + $0x40] sm:$0x1]
      %s191 = scalar_lea.vmem %s1, 8
      %v192 = vld [vmem:[%s191] sm:$0xf]
      %v193 = vld [vmem:[%s191 + $0x4] sm:$0xf]
      %v211 = vunpack.c.l.b16 %v172
      %v212 = vunpack.c.l.b16 %v173
      %v213 = vunpack.c.l.b16 %v174
      %v214 = vunpack.c.l.b16 %v175
      %v215 = vunpack.c.l.b16 %v176
      %v216 = vunpack.c.l.b16 %v177
      %v217 = vunpack.c.l.b16 %v178
      %v218 = vunpack.c.l.b16 %v179
      %v219 = vunpack.c.l.b16 %v180
      %v220 = vunpack.c.l.b16 %v181
      %v221 = vunpack.c.l.b16 %v182
      %v222 = vunpack.c.l.b16 %v183
      %v223 = vunpack.c.l.b16 %v184
      %v224 = vunpack.c.l.b16 %v185
      %v225 = vunpack.c.l.b16 %v186
      %v226 = vunpack.c.l.b16 %v187
      %v227 = vunpack.c.l.b16 %v190
      %v228 = vpack.c.b16 %v212, %v211
      %v229 = vpack.c.b16 %v214, %v213
      %v230 = vpack.c.b16 %v216, %v215
      %v231 = vpack.c.b16 %v218, %v217
      %v232 = vpack.c.b16 %v220, %v219
      %v233 = vpack.c.b16 %v222, %v221
      %v234 = vpack.c.b16 %v224, %v223
      %v235 = vpack.c.b16 %v226, %v225
      %v236 = vpack.c.b16 %v227, %v227
      %vm237 = vsmask.f32 7424
      %v239 = vshrl.u32 %v228, 16
      %v241 = vshll.u32 %v228, 16
      %v243 = vrot.slane %v241, 1
      %v244 = vor.u32 %v239, %v243
      %v246 = vshll.u32 %v229, 16
      %v248 = vrot.slane %v246, 1
      %v249 = vsel %vm237, %v244, %v248
      %v250 = vshrl.u32 %v229, 16
      %v252 = vor.u32 %v250, %v248
      %v254 = vshll.u32 %v230, 16
      %v256 = vrot.slane %v254, 1
      %v257 = vsel %vm237, %v252, %v256
      %v258 = vshrl.u32 %v230, 16
      %v260 = vor.u32 %v258, %v256
      %v262 = vshll.u32 %v231, 16
      %v264 = vrot.slane %v262, 1
      %v265 = vsel %vm237, %v260, %v264
      %v266 = vshrl.u32 %v231, 16
      %v268 = vor.u32 %v266, %v264
      %v270 = vshll.u32 %v232, 16
      %v272 = vrot.slane %v270, 1
      %v273 = vsel %vm237, %v268, %v272
      %v274 = vshrl.u32 %v232, 16
      %v276 = vor.u32 %v274, %v272
      %v278 = vshll.u32 %v233, 16
      %v280 = vrot.slane %v278, 1
      %v281 = vsel %vm237, %v276, %v280
      %v282 = vshrl.u32 %v233, 16
      %v284 = vor.u32 %v282, %v280
      %v286 = vshll.u32 %v234, 16
      %v288 = vrot.slane %v286, 1
      %v289 = vsel %vm237, %v284, %v288
      %v290 = vshrl.u32 %v234, 16
      %v292 = vor.u32 %v290, %v288
      %v294 = vshll.u32 %v235, 16
      %v296 = vrot.slane %v294, 1
      %v297 = vsel %vm237, %v292, %v296
      %v298 = vshrl.u32 %v235, 16
      %v300 = vor.u32 %v298, %v296
      %v302 = vshll.u32 %v236, 16
      %v304 = vrot.slane %v302, 1
      %v305 = vsel %vm237, %v300, %v304
      %v308 = vunpack.c.l.b16 %v192
      %v309 = vunpack.c.l.b16 %v193
      %v310 = vpack.c.b16 %v309, %v308
      %vm312 = vcmask 130048
      %v314 = vsel %vm312, %v249, 0
      %v317 = vsel %vm312, %v257, 0
      %v320 = vsel %vm312, %v265, 0
      %v323 = vsel %vm312, %v273, 0
      %v326 = vsel %vm312, %v281, 0
      %v329 = vsel %vm312, %v289, 0
      %v332 = vsel %vm312, %v297, 0
      %v335 = vsel %vm312, %v305, 0
      %337 = vmatprep.subr.bf16.mxu0 0
      %338 = vmatpush1.bf16.msra.mxu0 %v310
      %339 = vmatprep.subr.bf16.mxu0 0
      %340 = vmatpush1.bf16.msra.mxu0 0
      %341 = vmatprep.subr.bf16.mxu0 0
      %342 = vmatpush1.bf16.msra.mxu0 0
      %343 = vmatprep.subr.bf16.mxu0 0
      %344 = vmatpush1.bf16.msra.mxu0 0
      %345 = vmatprep.subr.bf16.mxu0 0
      %346 = vmatpush1.bf16.msra.mxu0 0
      %347 = vmatprep.subr.bf16.mxu0 0
      %348 = vmatpush1.bf16.msra.mxu0 0
      %349 = vmatprep.subr.bf16.mxu0 0
      %350 = vmatpush1.bf16.msra.mxu0 0
      %351 = vmatprep.subr.bf16.mxu0 0
      %352 = vmatpush1.bf16.msra.mxu0 0
      %353 = vmatprep.subr.bf16.mxu0 0
      %354 = vmatpush1.bf16.msra.mxu0 0
      %355 = vmatprep.subr.bf16.mxu0 0
      %356 = vmatpush1.bf16.msra.mxu0 0
      %357 = vmatprep.subr.bf16.mxu0 0
      %358 = vmatpush1.bf16.msra.mxu0 0
      %359 = vmatprep.subr.bf16.mxu0 0
      %360 = vmatpush1.bf16.msra.mxu0 0
      %361 = vmatprep.subr.bf16.mxu0 0
      %362 = vmatpush1.bf16.msra.mxu0 0
      %363 = vmatprep.subr.bf16.mxu0 0
      %364 = vmatpush1.bf16.msra.mxu0 0
      %365 = vmatprep.subr.bf16.mxu0 0
      %366 = vmatpush1.bf16.msra.mxu0 0
      %367 = vmatprep.subr.bf16.mxu0 0
      %368 = vmatpush1.bf16.msra.mxu0 0
      %369 = vmatprep.mubr.bf16.mxu0 0
      %370 = vmatmul.mubr.bf16.gmra.mrb[0].mxu0 %v314
      %v371 = vpop.f32.mrb[0].mxu0
      %v372 = vadd.f32 0.0, %v371
      %v373 = vpop.f32.mrb[0].mxu0
      %v374 = vpop.f32.mrb[0].mxu0
      %v375 = vadd.f32 0.0, %v374
      %v376 = vpop.f32.mrb[0].mxu0
      %377 = vmatprep.mubr.bf16.mxu0 0
      %378 = vmatmul.mubr.bf16.gmra.mrb[0].mxu0 %v317
      %v379 = vpop.f32.mrb[0].mxu0
      %v380 = vadd.f32 0.0, %v379
      %v381 = vpop.f32.mrb[0].mxu0
      %v382 = vpop.f32.mrb[0].mxu0
      %v383 = vadd.f32 0.0, %v382
      %v384 = vpop.f32.mrb[0].mxu0
      %385 = vmatprep.mubr.bf16.mxu0 0
      %386 = vmatmul.mubr.bf16.gmra.mrb[0].mxu0 %v320
      %v387 = vpop.f32.mrb[0].mxu0
      %v388 = vadd.f32 0.0, %v387
      %v389 = vpop.f32.mrb[0].mxu0
      %v390 = vpop.f32.mrb[0].mxu0
      %v391 = vadd.f32 0.0, %v390
      %v392 = vpop.f32.mrb[0].mxu0
      %393 = vmatprep.mubr.bf16.mxu0 0
      %394 = vmatmul.mubr.bf16.gmra.mrb[0].mxu0 %v323
      %v395 = vpop.f32.mrb[0].mxu0
      %v396 = vadd.f32 0.0, %v395
      %v397 = vpop.f32.mrb[0].mxu0
      %v398 = vpop.f32.mrb[0].mxu0
      %v399 = vadd.f32 0.0, %v398
      %v400 = vpop.f32.mrb[0].mxu0
      %401 = vmatprep.mubr.bf16.mxu0 0
      %402 = vmatmul.mubr.bf16.gmra.mrb[0].mxu0 %v326
      %v403 = vpop.f32.mrb[0].mxu0
      %v404 = vadd.f32 0.0, %v403
      %v405 = vpop.f32.mrb[0].mxu0
      %v406 = vpop.f32.mrb[0].mxu0
      %v407 = vadd.f32 0.0, %v406
      %v408 = vpop.f32.mrb[0].mxu0
      %409 = vmatprep.mubr.bf16.mxu0 0
      %410 = vmatmul.mubr.bf16.gmra.mrb[0].mxu0 %v329
      %v411 = vpop.f32.mrb[0].mxu0
      %v412 = vadd.f32 0.0, %v411
      %v413 = vpop.f32.mrb[0].mxu0
      %v414 = vpop.f32.mrb[0].mxu0
      %v415 = vadd.f32 0.0, %v414
      %v416 = vpop.f32.mrb[0].mxu0
      %417 = vmatprep.mubr.bf16.mxu0 0
      %418 = vmatmul.mubr.bf16.gmra.mrb[0].mxu0 %v332
      %v419 = vpop.f32.mrb[0].mxu0
      %v420 = vadd.f32 0.0, %v419
      %v421 = vpop.f32.mrb[0].mxu0
      %v422 = vpop.f32.mrb[0].mxu0
      %v423 = vadd.f32 0.0, %v422
      %v424 = vpop.f32.mrb[0].mxu0
      %425 = vmatprep.mubr.bf16.mxu0 0
      %426 = vmatmul.mubr.bf16.gmra.mrb[0].mxu0 %v335
      %v427 = vpop.f32.mrb[0].mxu0
      %v428 = vadd.f32 0.0, %v427
      %v429 = vpop.f32.mrb[0].mxu0
      %v430 = vpop.f32.mrb[0].mxu0
      %v431 = vadd.f32 0.0, %v430
      %v432 = vpop.f32.mrb[0].mxu0
      %433 = vdwg.mxu0
      %v436 = vunpack.c.l.b16 %v188
      %v437 = vunpack.c.l.b16 %v189
      %v438 = vpack.c.b16 %v437, %v436
      %v440 = vsel %vm312, %v228, 0
      %v442 = vsel %vm312, %v229, 0
      %v444 = vsel %vm312, %v230, 0
      %v446 = vsel %vm312, %v231, 0
      %v448 = vsel %vm312, %v232, 0
      %v450 = vsel %vm312, %v233, 0
      %v452 = vsel %vm312, %v234, 0
      %v454 = vsel %vm312, %v235, 0
      %456 = vmatprep.subr.bf16.mxu0 0
      %457 = vmatpush1.bf16.msra.mxu0 %v438
      %458 = vmatprep.subr.bf16.mxu0 0
      %459 = vmatpush1.bf16.msra.mxu0 0
      %460 = vmatprep.subr.bf16.mxu0 0
      %461 = vmatpush1.bf16.msra.mxu0 0
      %462 = vmatprep.subr.bf16.mxu0 0
      %463 = vmatpush1.bf16.msra.mxu0 0
      %464 = vmatprep.subr.bf16.mxu0 0
      %465 = vmatpush1.bf16.msra.mxu0 0
      %466 = vmatprep.subr.bf16.mxu0 0
      %467 = vmatpush1.bf16.msra.mxu0 0
      %468 = vmatprep.subr.bf16.mxu0 0
      %469 = vmatpush1.bf16.msra.mxu0 0
      %470 = vmatprep.subr.bf16.mxu0 0
      %471 = vmatpush1.bf16.msra.mxu0 0
      %472 = vmatprep.subr.bf16.mxu0 0
      %473 = vmatpush1.bf16.msra.mxu0 0
      %474 = vmatprep.subr.bf16.mxu0 0
      %475 = vmatpush1.bf16.msra.mxu0 0
      %476 = vmatprep.subr.bf16.mxu0 0
      %477 = vmatpush1.bf16.msra.mxu0 0
      %478 = vmatprep.subr.bf16.mxu0 0
      %479 = vmatpush1.bf16.msra.mxu0 0
      %480 = vmatprep.subr.bf16.mxu0 0
      %481 = vmatpush1.bf16.msra.mxu0 0
      %482 = vmatprep.subr.bf16.mxu0 0
      %483 = vmatpush1.bf16.msra.mxu0 0
      %484 = vmatprep.subr.bf16.mxu0 0
      %485 = vmatpush1.bf16.msra.mxu0 0
      %486 = vmatprep.subr.bf16.mxu0 0
      %487 = vmatpush1.bf16.msra.mxu0 0
      %488 = vmatprep.mubr.bf16.mxu0 0
      %489 = vmatmul.mubr.bf16.gmra.mrb[0].mxu0 %v440
      %v490 = vpop.f32.mrb[0].mxu0
      %v491 = vadd.f32 %v372, %v490
      %v492 = vpop.f32.mrb[0].mxu0
      %v493 = vpop.f32.mrb[0].mxu0
      %v494 = vadd.f32 %v375, %v493
      %v495 = vpop.f32.mrb[0].mxu0
      %496 = vmatprep.mubr.bf16.mxu0 0
      %497 = vmatmul.mubr.bf16.gmra.mrb[0].mxu0 %v442
      %v498 = vpop.f32.mrb[0].mxu0
      %v499 = vadd.f32 %v380, %v498
      %v500 = vpop.f32.mrb[0].mxu0
      %v501 = vpop.f32.mrb[0].mxu0
      %v502 = vadd.f32 %v383, %v501
      %v503 = vpop.f32.mrb[0].mxu0
      %504 = vmatprep.mubr.bf16.mxu0 0
      %505 = vmatmul.mubr.bf16.gmra.mrb[0].mxu0 %v444
      %v506 = vpop.f32.mrb[0].mxu0
      %v507 = vadd.f32 %v388, %v506
      %v508 = vpop.f32.mrb[0].mxu0
      %v509 = vpop.f32.mrb[0].mxu0
      %v510 = vadd.f32 %v391, %v509
      %v511 = vpop.f32.mrb[0].mxu0
      %512 = vmatprep.mubr.bf16.mxu0 0
      %513 = vmatmul.mubr.bf16.gmra.mrb[0].mxu0 %v446
      %v514 = vpop.f32.mrb[0].mxu0
      %v515 = vadd.f32 %v396, %v514
      %v516 = vpop.f32.mrb[0].mxu0
      %v517 = vpop.f32.mrb[0].mxu0
      %v518 = vadd.f32 %v399, %v517
      %v519 = vpop.f32.mrb[0].mxu0
      %520 = vmatprep.mubr.bf16.mxu0 0
      %521 = vmatmul.mubr.bf16.gmra.mrb[0].mxu0 %v448
      %v522 = vpop.f32.mrb[0].mxu0
      %v523 = vadd.f32 %v404, %v522
      %v524 = vpop.f32.mrb[0].mxu0
      %v525 = vpop.f32.mrb[0].mxu0
      %v526 = vadd.f32 %v407, %v525
      %v527 = vpop.f32.mrb[0].mxu0
      %528 = vmatprep.mubr.bf16.mxu0 0
      %529 = vmatmul.mubr.bf16.gmra.mrb[0].mxu0 %v450
      %v530 = vpop.f32.mrb[0].mxu0
      %v531 = vadd.f32 %v412, %v530
      %v532 = vpop.f32.mrb[0].mxu0
      %v533 = vpop.f32.mrb[0].mxu0
      %v534 = vadd.f32 %v415, %v533
      %v535 = vpop.f32.mrb[0].mxu0
      %536 = vmatprep.mubr.bf16.mxu0 0
      %537 = vmatmul.mubr.bf16.gmra.mrb[0].mxu0 %v452
      %v538 = vpop.f32.mrb[0].mxu0
      %v539 = vadd.f32 %v420, %v538
      %v540 = vpop.f32.mrb[0].mxu0
      %v541 = vpop.f32.mrb[0].mxu0
      %v542 = vadd.f32 %v423, %v541
      %v543 = vpop.f32.mrb[0].mxu0
      %544 = vmatprep.mubr.bf16.mxu0 0
      %545 = vmatmul.mubr.bf16.gmra.mrb[0].mxu0 %v454
      %v546 = vpop.f32.mrb[0].mxu0
      %v547 = vadd.f32 %v428, %v546
      %v548 = vpop.f32.mrb[0].mxu0
      %v549 = vpop.f32.mrb[0].mxu0
      %v550 = vadd.f32 %v431, %v549
      %v551 = vpop.f32.mrb[0].mxu0
      %552 = vdwg.mxu0
      %v553 = vld [vmem:[%s165] sm:$0xe]
      %s554 = scalar_lea.vmem %s1, 16
      %v555 = vld [vmem:[%s554] sm:$0xf]
      %v556 = vld [vmem:[%s554 + $0x4] sm:$0xf]
      %v558 = vunpack.c.l.b16 %v553
      %v559 = vpack.c.b16 %v212, %v558
      %vm560 = vcmask 1046528
      %v561 = vrot.slane %v559, 1
      %v562 = vrot.slane %v229, 1
      %v563 = vsel %vm560, %v561, %v562
      %v564 = vrot.slane %v230, 1
      %v565 = vsel %vm560, %v562, %v564
      %v566 = vrot.slane %v231, 1
      %v567 = vsel %vm560, %v564, %v566
      %v568 = vrot.slane %v232, 1
      %v569 = vsel %vm560, %v566, %v568
      %v570 = vrot.slane %v233, 1
      %v571 = vsel %vm560, %v568, %v570
      %v572 = vrot.slane %v234, 1
      %v573 = vsel %vm560, %v570, %v572
      %v574 = vrot.slane %v235, 1
      %v575 = vsel %vm560, %v572, %v574
      %v576 = vrot.slane %v236, 1
      %v577 = vsel %vm560, %v574, %v576
      %v580 = vunpack.c.l.b16 %v555
      %v581 = vunpack.c.l.b16 %v556
      %v582 = vpack.c.b16 %v581, %v580
      %v585 = vsel %vm312, %v563, 0
      %v588 = vsel %vm312, %v565, 0
      %v591 = vsel %vm312, %v567, 0
      %v594 = vsel %vm312, %v569, 0
      %v597 = vsel %vm312, %v571, 0
      %v600 = vsel %vm312, %v573, 0
      %v603 = vsel %vm312, %v575, 0
      %v606 = vsel %vm312, %v577, 0
      %608 = vmatprep.subr.bf16.mxu0 0
      %609 = vmatpush1.bf16.msra.mxu0 %v582
      %610 = vmatprep.subr.bf16.mxu0 0
      %611 = vmatpush1.bf16.msra.mxu0 0
      %612 = vmatprep.subr.bf16.mxu0 0
      %613 = vmatpush1.bf16.msra.mxu0 0
      %614 = vmatprep.subr.bf16.mxu0 0
      %615 = vmatpush1.bf16.msra.mxu0 0
      %616 = vmatprep.subr.bf16.mxu0 0
      %617 = vmatpush1.bf16.msra.mxu0 0
      %618 = vmatprep.subr.bf16.mxu0 0
      %619 = vmatpush1.bf16.msra.mxu0 0
      %620 = vmatprep.subr.bf16.mxu0 0
      %621 = vmatpush1.bf16.msra.mxu0 0
      %622 = vmatprep.subr.bf16.mxu0 0
      %623 = vmatpush1.bf16.msra.mxu0 0
      %624 = vmatprep.subr.bf16.mxu0 0
      %625 = vmatpush1.bf16.msra.mxu0 0
      %626 = vmatprep.subr.bf16.mxu0 0
      %627 = vmatpush1.bf16.msra.mxu0 0
      %628 = vmatprep.subr.bf16.mxu0 0
      %629 = vmatpush1.bf16.msra.mxu0 0
      %630 = vmatprep.subr.bf16.mxu0 0
      %631 = vmatpush1.bf16.msra.mxu0 0
      %632 = vmatprep.subr.bf16.mxu0 0
      %633 = vmatpush1.bf16.msra.mxu0 0
      %634 = vmatprep.subr.bf16.mxu0 0
      %635 = vmatpush1.bf16.msra.mxu0 0
      %636 = vmatprep.subr.bf16.mxu0 0
      %637 = vmatpush1.bf16.msra.mxu0 0
      %638 = vmatprep.subr.bf16.mxu0 0
      %639 = vmatpush1.bf16.msra.mxu0 0
      %640 = vmatprep.mubr.bf16.mxu0 0
      %641 = vmatmul.mubr.bf16.gmra.mrb[0].mxu0 %v585
      %v642 = vpop.f32.mrb[0].mxu0
      %v643 = vadd.f32 0.0, %v642
      %v644 = vpop.f32.mrb[0].mxu0
      %v645 = vpop.f32.mrb[0].mxu0
      %v646 = vadd.f32 0.0, %v645
      %v647 = vpop.f32.mrb[0].mxu0
      %648 = vmatprep.mubr.bf16.mxu0 0
      %649 = vmatmul.mubr.bf16.gmra.mrb[0].mxu0 %v588
      %v650 = vpop.f32.mrb[0].mxu0
      %v651 = vadd.f32 0.0, %v650
      %v652 = vpop.f32.mrb[0].mxu0
      %v653 = vpop.f32.mrb[0].mxu0
      %v654 = vadd.f32 0.0, %v653
      %v655 = vpop.f32.mrb[0].mxu0
      %656 = vmatprep.mubr.bf16.mxu0 0
      %657 = vmatmul.mubr.bf16.gmra.mrb[0].mxu0 %v591
      %v658 = vpop.f32.mrb[0].mxu0
      %v659 = vadd.f32 0.0, %v658
      %v660 = vpop.f32.mrb[0].mxu0
      %v661 = vpop.f32.mrb[0].mxu0
      %v662 = vadd.f32 0.0, %v661
      %v663 = vpop.f32.mrb[0].mxu0
      %664 = vmatprep.mubr.bf16.mxu0 0
      %665 = vmatmul.mubr.bf16.gmra.mrb[0].mxu0 %v594
      %v666 = vpop.f32.mrb[0].mxu0
      %v667 = vadd.f32 0.0, %v666
      %v668 = vpop.f32.mrb[0].mxu0
      %v669 = vpop.f32.mrb[0].mxu0
      %v670 = vadd.f32 0.0, %v669
      %v671 = vpop.f32.mrb[0].mxu0
      %672 = vmatprep.mubr.bf16.mxu0 0
      %673 = vmatmul.mubr.bf16.gmra.mrb[0].mxu0 %v597
      %v674 = vpop.f32.mrb[0].mxu0
      %v675 = vadd.f32 0.0, %v674
      %v676 = vpop.f32.mrb[0].mxu0
      %v677 = vpop.f32.mrb[0].mxu0
      %v678 = vadd.f32 0.0, %v677
      %v679 = vpop.f32.mrb[0].mxu0
      %680 = vmatprep.mubr.bf16.mxu0 0
      %681 = vmatmul.mubr.bf16.gmra.mrb[0].mxu0 %v600
      %v682 = vpop.f32.mrb[0].mxu0
      %v683 = vadd.f32 0.0, %v682
      %v684 = vpop.f32.mrb[0].mxu0
      %v685 = vpop.f32.mrb[0].mxu0
      %v686 = vadd.f32 0.0, %v685
      %v687 = vpop.f32.mrb[0].mxu0
      %688 = vmatprep.mubr.bf16.mxu0 0
      %689 = vmatmul.mubr.bf16.gmra.mrb[0].mxu0 %v603
      %v690 = vpop.f32.mrb[0].mxu0
      %v691 = vadd.f32 0.0, %v690
      %v692 = vpop.f32.mrb[0].mxu0
      %v693 = vpop.f32.mrb[0].mxu0
      %v694 = vadd.f32 0.0, %v693
      %v695 = vpop.f32.mrb[0].mxu0
      %696 = vmatprep.mubr.bf16.mxu0 0
      %697 = vmatmul.mubr.bf16.gmra.mrb[0].mxu0 %v606
      %v698 = vpop.f32.mrb[0].mxu0
      %v699 = vadd.f32 0.0, %v698
      %v700 = vpop.f32.mrb[0].mxu0
      %v701 = vpop.f32.mrb[0].mxu0
      %v702 = vadd.f32 0.0, %v701
      %v703 = vpop.f32.mrb[0].mxu0
      %704 = vdwg.mxu0
      %v705 = vadd.f32 %v491, %v643
      %v706 = vadd.f32 %v494, %v646
      %v707 = vadd.f32 %v499, %v651
      %v708 = vadd.f32 %v502, %v654
      %v709 = vadd.f32 %v507, %v659
      %v710 = vadd.f32 %v510, %v662
      %v711 = vadd.f32 %v515, %v667
      %v712 = vadd.f32 %v518, %v670
      %v713 = vadd.f32 %v523, %v675
      %v714 = vadd.f32 %v526, %v678
      %v715 = vadd.f32 %v531, %v683
      %v716 = vadd.f32 %v534, %v686
      %v717 = vadd.f32 %v539, %v691
      %v718 = vadd.f32 %v542, %v694
      %v719 = vadd.f32 %v547, %v699
      %v720 = vadd.f32 %v550, %v702
      %v721 = vld [vmem:[%s165 + $0x8] sm:$0xe]
      %v722 = vld [vmem:[%s165 + $0xc] sm:$0xf]
      %v723 = vld [vmem:[%s165 + $0x10] sm:$0xf]
      %v724 = vld [vmem:[%s165 + $0x14] sm:$0xf]
      %v725 = vld [vmem:[%s165 + $0x18] sm:$0xf]
      %v726 = vld [vmem:[%s165 + $0x1c] sm:$0xf]
      %v727 = vld [vmem:[%s165 + $0x20] sm:$0xf]
      %v728 = vld [vmem:[%s165 + $0x24] sm:$0xf]
      %v729 = vld [vmem:[%s165 + $0x28] sm:$0xf]
      %v730 = vld [vmem:[%s165 + $0x2c] sm:$0xf]
      %v731 = vld [vmem:[%s165 + $0x30] sm:$0xf]
      %v732 = vld [vmem:[%s165 + $0x34] sm:$0xf]
      %v733 = vld [vmem:[%s165 + $0x38] sm:$0xf]
      %v734 = vld [vmem:[%s165 + $0x3c] sm:$0xf]
      %v735 = vld [vmem:[%s165 + $0x40] sm:$0xf]
      %v736 = vld [vmem:[%s165 + $0x44] sm:$0xf]
      %v737 = vld [vmem:[%s165 + $0x48] sm:$0x1]
      %s738 = scalar_lea.vmem %s1, 24
      %v739 = vld [vmem:[%s738] sm:$0xf]
      %v740 = vld [vmem:[%s738 + $0x4] sm:$0xf]
      %v758 = vunpack.c.l.b16 %v721
      %v759 = vunpack.c.l.b16 %v722
      %v760 = vunpack.c.l.b16 %v723
      %v761 = vunpack.c.l.b16 %v724
      %v762 = vunpack.c.l.b16 %v725
      %v763 = vunpack.c.l.b16 %v726
      %v764 = vunpack.c.l.b16 %v727
      %v765 = vunpack.c.l.b16 %v728
      %v766 = vunpack.c.l.b16 %v729
      %v767 = vunpack.c.l.b16 %v730
      %v768 = vunpack.c.l.b16 %v731
      %v769 = vunpack.c.l.b16 %v732
      %v770 = vunpack.c.l.b16 %v733
      %v771 = vunpack.c.l.b16 %v734
      %v772 = vunpack.c.l.b16 %v735
      %v773 = vunpack.c.l.b16 %v736
      %v774 = vunpack.c.l.b16 %v737
      %v775 = vpack.c.b16 %v759, %v758
      %v776 = vpack.c.b16 %v761, %v760
      %v777 = vpack.c.b16 %v763, %v762
      %v778 = vpack.c.b16 %v765, %v764
      %v779 = vpack.c.b16 %v767, %v766
      %v780 = vpack.c.b16 %v769, %v768
      %v781 = vpack.c.b16 %v771, %v770
      %v782 = vpack.c.b16 %v773, %v772
      %v783 = vpack.c.b16 %v774, %v774
      %v784 = vrot.slane %v775, 1
      %v785 = vrot.slane %v776, 1
      %v786 = vsel %vm560, %v784, %v785
      %v787 = vrot.slane %v777, 1
      %v788 = vsel %vm560, %v785, %v787
      %v789 = vrot.slane %v778, 1
      %v790 = vsel %vm560, %v787, %v789
      %v791 = vrot.slane %v779, 1
      %v792 = vsel %vm560, %v789, %v791
      %v793 = vrot.slane %v780, 1
      %v794 = vsel %vm560, %v791, %v793
      %v795 = vrot.slane %v781, 1
      %v796 = vsel %vm560, %v793, %v795
      %v797 = vrot.slane %v782, 1
      %v798 = vsel %vm560, %v795, %v797
      %v799 = vrot.slane %v783, 1
      %v800 = vsel %vm560, %v797, %v799
      %v803 = vunpack.c.l.b16 %v739
      %v804 = vunpack.c.l.b16 %v740
      %v805 = vpack.c.b16 %v804, %v803
      %v808 = vsel %vm312, %v786, 0
      %v811 = vsel %vm312, %v788, 0
      %v814 = vsel %vm312, %v790, 0
      %v817 = vsel %vm312, %v792, 0
      %v820 = vsel %vm312, %v794, 0
      %v823 = vsel %vm312, %v796, 0
      %v826 = vsel %vm312, %v798, 0
      %v829 = vsel %vm312, %v800, 0
      %831 = vmatprep.subr.bf16.mxu0 0
      %832 = vmatpush1.bf16.msra.mxu0 %v805
      %833 = vmatprep.subr.bf16.mxu0 0
      %834 = vmatpush1.bf16.msra.mxu0 0
      %835 = vmatprep.subr.bf16.mxu0 0
      %836 = vmatpush1.bf16.msra.mxu0 0
      %837 = vmatprep.subr.bf16.mxu0 0
      %838 = vmatpush1.bf16.msra.mxu0 0
      %839 = vmatprep.subr.bf16.mxu0 0
      %840 = vmatpush1.bf16.msra.mxu0 0
      %841 = vmatprep.subr.bf16.mxu0 0
      %842 = vmatpush1.bf16.msra.mxu0 0
      %843 = vmatprep.subr.bf16.mxu0 0
      %844 = vmatpush1.bf16.msra.mxu0 0
      %845 = vmatprep.subr.bf16.mxu0 0
      %846 = vmatpush1.bf16.msra.mxu0 0
      %847 = vmatprep.subr.bf16.mxu0 0
      %848 = vmatpush1.bf16.msra.mxu0 0
      %849 = vmatprep.subr.bf16.mxu0 0
      %850 = vmatpush1.bf16.msra.mxu0 0
      %851 = vmatprep.subr.bf16.mxu0 0
      %852 = vmatpush1.bf16.msra.mxu0 0
      %853 = vmatprep.subr.bf16.mxu0 0
      %854 = vmatpush1.bf16.msra.mxu0 0
      %855 = vmatprep.subr.bf16.mxu0 0
      %856 = vmatpush1.bf16.msra.mxu0 0
      %857 = vmatprep.subr.bf16.mxu0 0
      %858 = vmatpush1.bf16.msra.mxu0 0
      %859 = vmatprep.subr.bf16.mxu0 0
      %860 = vmatpush1.bf16.msra.mxu0 0
      %861 = vmatprep.subr.bf16.mxu0 0
      %862 = vmatpush1.bf16.msra.mxu0 0
      %863 = vmatprep.mubr.bf16.mxu0 0
      %864 = vmatmul.mubr.bf16.gmra.mrb[0].mxu0 %v808
      %v865 = vpop.f32.mrb[0].mxu0
      %v866 = vadd.f32 0.0, %v865
      %v867 = vpop.f32.mrb[0].mxu0
      %v868 = vpop.f32.mrb[0].mxu0
      %v869 = vadd.f32 0.0, %v868
      %v870 = vpop.f32.mrb[0].mxu0
      %871 = vmatprep.mubr.bf16.mxu0 0
      %872 = vmatmul.mubr.bf16.gmra.mrb[0].mxu0 %v811
      %v873 = vpop.f32.mrb[0].mxu0
      %v874 = vadd.f32 0.0, %v873
      %v875 = vpop.f32.mrb[0].mxu0
      %v876 = vpop.f32.mrb[0].mxu0
      %v877 = vadd.f32 0.0, %v876
      %v878 = vpop.f32.mrb[0].mxu0
      %879 = vmatprep.mubr.bf16.mxu0 0
      %880 = vmatmul.mubr.bf16.gmra.mrb[0].mxu0 %v814
      %v881 = vpop.f32.mrb[0].mxu0
      %v882 = vadd.f32 0.0, %v881
      %v883 = vpop.f32.mrb[0].mxu0
      %v884 = vpop.f32.mrb[0].mxu0
      %v885 = vadd.f32 0.0, %v884
      %v886 = vpop.f32.mrb[0].mxu0
      %887 = vmatprep.mubr.bf16.mxu0 0
      %888 = vmatmul.mubr.bf16.gmra.mrb[0].mxu0 %v817
      %v889 = vpop.f32.mrb[0].mxu0
      %v890 = vadd.f32 0.0, %v889
      %v891 = vpop.f32.mrb[0].mxu0
      %v892 = vpop.f32.mrb[0].mxu0
      %v893 = vadd.f32 0.0, %v892
      %v894 = vpop.f32.mrb[0].mxu0
      %895 = vmatprep.mubr.bf16.mxu0 0
      %896 = vmatmul.mubr.bf16.gmra.mrb[0].mxu0 %v820
      %v897 = vpop.f32.mrb[0].mxu0
      %v898 = vadd.f32 0.0, %v897
      %v899 = vpop.f32.mrb[0].mxu0
      %v900 = vpop.f32.mrb[0].mxu0
      %v901 = vadd.f32 0.0, %v900
      %v902 = vpop.f32.mrb[0].mxu0
      %903 = vmatprep.mubr.bf16.mxu0 0
      %904 = vmatmul.mubr.bf16.gmra.mrb[0].mxu0 %v823
      %v905 = vpop.f32.mrb[0].mxu0
      %v906 = vadd.f32 0.0, %v905
      %v907 = vpop.f32.mrb[0].mxu0
      %v908 = vpop.f32.mrb[0].mxu0
      %v909 = vadd.f32 0.0, %v908
      %v910 = vpop.f32.mrb[0].mxu0
      %911 = vmatprep.mubr.bf16.mxu0 0
      %912 = vmatmul.mubr.bf16.gmra.mrb[0].mxu0 %v826
      %v913 = vpop.f32.mrb[0].mxu0
      %v914 = vadd.f32 0.0, %v913
      %v915 = vpop.f32.mrb[0].mxu0
      %v916 = vpop.f32.mrb[0].mxu0
      %v917 = vadd.f32 0.0, %v916
      %v918 = vpop.f32.mrb[0].mxu0
      %919 = vmatprep.mubr.bf16.mxu0 0
      %920 = vmatmul.mubr.bf16.gmra.mrb[0].mxu0 %v829
      %v921 = vpop.f32.mrb[0].mxu0
      %v922 = vadd.f32 0.0, %v921
      %v923 = vpop.f32.mrb[0].mxu0
      %v924 = vpop.f32.mrb[0].mxu0
      %v925 = vadd.f32 0.0, %v924
      %v926 = vpop.f32.mrb[0].mxu0
      %927 = vdwg.mxu0
      %v928 = vadd.f32 %v705, %v866
      %v929 = vadd.f32 %v706, %v869
      %v930 = vadd.f32 %v707, %v874
      %v931 = vadd.f32 %v708, %v877
      %v932 = vadd.f32 %v709, %v882
      %v933 = vadd.f32 %v710, %v885
      %v934 = vadd.f32 %v711, %v890
      %v935 = vadd.f32 %v712, %v893
      %v936 = vadd.f32 %v713, %v898
      %v937 = vadd.f32 %v714, %v901
      %v938 = vadd.f32 %v715, %v906
      %v939 = vadd.f32 %v716, %v909
      %v940 = vadd.f32 %v717, %v914
      %v941 = vadd.f32 %v718, %v917
      %v942 = vadd.f32 %v719, %v922
      %v943 = vadd.f32 %v720, %v925
      %v944 = vld [vmem:[%s165 + $0x48] sm:$0x3]
      %s945 = scalar_lea.vmem %s1, 32
      %v946 = vld [vmem:[%s945] sm:$0xf]
      %v947 = vld [vmem:[%s945 + $0x4] sm:$0xf]
      %v949 = vunpack.c.l.b16 %v944
      %v950 = vpack.c.b16 %v949, %v949
      %vm951 = vsmask.f32 6400
      %v953 = vshrl.u32 %v775, 16
      %v955 = vrot.slane %v953, 1
      %v956 = vshll.u32 %v775, 16
      %v958 = vrot.slane %v956, 2
      %v959 = vor.u32 %v955, %v958
      %v961 = vshrl.u32 %v776, 16
      %v963 = vrot.slane %v961, 1
      %v964 = vshll.u32 %v776, 16
      %v966 = vrot.slane %v964, 2
      %v967 = vor.u32 %v963, %v966
      %v968 = vsel %vm951, %v959, %v967
      %v970 = vshrl.u32 %v777, 16
      %v972 = vrot.slane %v970, 1
      %v973 = vshll.u32 %v777, 16
      %v975 = vrot.slane %v973, 2
      %v976 = vor.u32 %v972, %v975
      %v977 = vsel %vm951, %v967, %v976
      %v979 = vshrl.u32 %v778, 16
      %v981 = vrot.slane %v979, 1
      %v982 = vshll.u32 %v778, 16
      %v984 = vrot.slane %v982, 2
      %v985 = vor.u32 %v981, %v984
      %v986 = vsel %vm951, %v976, %v985
      %v988 = vshrl.u32 %v779, 16
      %v990 = vrot.slane %v988, 1
      %v991 = vshll.u32 %v779, 16
      %v993 = vrot.slane %v991, 2
      %v994 = vor.u32 %v990, %v993
      %v995 = vsel %vm951, %v985, %v994
      %v997 = vshrl.u32 %v780, 16
      %v999 = vrot.slane %v997, 1
      %v1000 = vshll.u32 %v780, 16
      %v1002 = vrot.slane %v1000, 2
      %v1003 = vor.u32 %v999, %v1002
      %v1004 = vsel %vm951, %v994, %v1003
      %v1006 = vshrl.u32 %v781, 16
      %v1008 = vrot.slane %v1006, 1
      %v1009 = vshll.u32 %v781, 16
      %v1011 = vrot.slane %v1009, 2
      %v1012 = vor.u32 %v1008, %v1011
      %v1013 = vsel %vm951, %v1003, %v1012
      %v1015 = vshrl.u32 %v782, 16
      %v1017 = vrot.slane %v1015, 1
      %v1018 = vshll.u32 %v782, 16
      %v1020 = vrot.slane %v1018, 2
      %v1021 = vor.u32 %v1017, %v1020
      %v1022 = vsel %vm951, %v1012, %v1021
      %v1024 = vshrl.u32 %v950, 16
      %v1026 = vrot.slane %v1024, 1
      %v1027 = vshll.u32 %v950, 16
      %v1029 = vrot.slane %v1027, 2
      %v1030 = vor.u32 %v1026, %v1029
      %v1031 = vsel %vm951, %v1021, %v1030
      %v1034 = vunpack.c.l.b16 %v946
      %v1035 = vunpack.c.l.b16 %v947
      %v1036 = vpack.c.b16 %v1035, %v1034
      %v1039 = vsel %vm312, %v968, 0
      %v1042 = vsel %vm312, %v977, 0
      %v1045 = vsel %vm312, %v986, 0
      %v1048 = vsel %vm312, %v995, 0
      %v1051 = vsel %vm312, %v1004, 0
      %v1054 = vsel %vm312, %v1013, 0
      %v1057 = vsel %vm312, %v1022, 0
      %v1060 = vsel %vm312, %v1031, 0
      %1062 = vmatprep.subr.bf16.mxu0 0
      %1063 = vmatpush1.bf16.msra.mxu0 %v1036
      %1064 = vmatprep.subr.bf16.mxu0 0
      %1065 = vmatpush1.bf16.msra.mxu0 0
      %1066 = vmatprep.subr.bf16.mxu0 0
      %1067 = vmatpush1.bf16.msra.mxu0 0
      %1068 = vmatprep.subr.bf16.mxu0 0
      %1069 = vmatpush1.bf16.msra.mxu0 0
      %1070 = vmatprep.subr.bf16.mxu0 0
      %1071 = vmatpush1.bf16.msra.mxu0 0
      %1072 = vmatprep.subr.bf16.mxu0 0
      %1073 = vmatpush1.bf16.msra.mxu0 0
      %1074 = vmatprep.subr.bf16.mxu0 0
      %1075 = vmatpush1.bf16.msra.mxu0 0
      %1076 = vmatprep.subr.bf16.mxu0 0
      %1077 = vmatpush1.bf16.msra.mxu0 0
      %1078 = vmatprep.subr.bf16.mxu0 0
      %1079 = vmatpush1.bf16.msra.mxu0 0
      %1080 = vmatprep.subr.bf16.mxu0 0
      %1081 = vmatpush1.bf16.msra.mxu0 0
      %1082 = vmatprep.subr.bf16.mxu0 0
      %1083 = vmatpush1.bf16.msra.mxu0 0
      %1084 = vmatprep.subr.bf16.mxu0 0
      %1085 = vmatpush1.bf16.msra.mxu0 0
      %1086 = vmatprep.subr.bf16.mxu0 0
      %1087 = vmatpush1.bf16.msra.mxu0 0
      %1088 = vmatprep.subr.bf16.mxu0 0
      %1089 = vmatpush1.bf16.msra.mxu0 0
      %1090 = vmatprep.subr.bf16.mxu0 0
      %1091 = vmatpush1.bf16.msra.mxu0 0
      %1092 = vmatprep.subr.bf16.mxu0 0
      %1093 = vmatpush1.bf16.msra.mxu0 0
      %1094 = vmatprep.mubr.bf16.mxu0 0
      %1095 = vmatmul.mubr.bf16.gmra.mrb[0].mxu0 %v1039
      %v1096 = vpop.f32.mrb[0].mxu0
      %v1097 = vadd.f32 0.0, %v1096
      %v1098 = vpop.f32.mrb[0].mxu0
      %v1099 = vpop.f32.mrb[0].mxu0
      %v1100 = vadd.f32 0.0, %v1099
      %v1101 = vpop.f32.mrb[0].mxu0
      %1102 = vmatprep.mubr.bf16.mxu0 0
      %1103 = vmatmul.mubr.bf16.gmra.mrb[0].mxu0 %v1042
      %v1104 = vpop.f32.mrb[0].mxu0
      %v1105 = vadd.f32 0.0, %v1104
      %v1106 = vpop.f32.mrb[0].mxu0
      %v1107 = vpop.f32.mrb[0].mxu0
      %v1108 = vadd.f32 0.0, %v1107
      %v1109 = vpop.f32.mrb[0].mxu0
      %1110 = vmatprep.mubr.bf16.mxu0 0
      %1111 = vmatmul.mubr.bf16.gmra.mrb[0].mxu0 %v1045
      %v1112 = vpop.f32.mrb[0].mxu0
      %v1113 = vadd.f32 0.0, %v1112
      %v1114 = vpop.f32.mrb[0].mxu0
      %v1115 = vpop.f32.mrb[0].mxu0
      %v1116 = vadd.f32 0.0, %v1115
      %v1117 = vpop.f32.mrb[0].mxu0
      %1118 = vmatprep.mubr.bf16.mxu0 0
      %1119 = vmatmul.mubr.bf16.gmra.mrb[0].mxu0 %v1048
      %v1120 = vpop.f32.mrb[0].mxu0
      %v1121 = vadd.f32 0.0, %v1120
      %v1122 = vpop.f32.mrb[0].mxu0
      %v1123 = vpop.f32.mrb[0].mxu0
      %v1124 = vadd.f32 0.0, %v1123
      %v1125 = vpop.f32.mrb[0].mxu0
      %1126 = vmatprep.mubr.bf16.mxu0 0
      %1127 = vmatmul.mubr.bf16.gmra.mrb[0].mxu0 %v1051
      %v1128 = vpop.f32.mrb[0].mxu0
      %v1129 = vadd.f32 0.0, %v1128
      %v1130 = vpop.f32.mrb[0].mxu0
      %v1131 = vpop.f32.mrb[0].mxu0
      %v1132 = vadd.f32 0.0, %v1131
      %v1133 = vpop.f32.mrb[0].mxu0
      %1134 = vmatprep.mubr.bf16.mxu0 0
      %1135 = vmatmul.mubr.bf16.gmra.mrb[0].mxu0 %v1054
      %v1136 = vpop.f32.mrb[0].mxu0
      %v1137 = vadd.f32 0.0, %v1136
      %v1138 = vpop.f32.mrb[0].mxu0
      %v1139 = vpop.f32.mrb[0].mxu0
      %v1140 = vadd.f32 0.0, %v1139
      %v1141 = vpop.f32.mrb[0].mxu0
      %1142 = vmatprep.mubr.bf16.mxu0 0
      %1143 = vmatmul.mubr.bf16.gmra.mrb[0].mxu0 %v1057
      %v1144 = vpop.f32.mrb[0].mxu0
      %v1145 = vadd.f32 0.0, %v1144
      %v1146 = vpop.f32.mrb[0].mxu0
      %v1147 = vpop.f32.mrb[0].mxu0
      %v1148 = vadd.f32 0.0, %v1147
      %v1149 = vpop.f32.mrb[0].mxu0
      %1150 = vmatprep.mubr.bf16.mxu0 0
      %1151 = vmatmul.mubr.bf16.gmra.mrb[0].mxu0 %v1060
      %v1152 = vpop.f32.mrb[0].mxu0
      %v1153 = vadd.f32 0.0, %v1152
      %v1154 = vpop.f32.mrb[0].mxu0
      %v1155 = vpop.f32.mrb[0].mxu0
      %v1156 = vadd.f32 0.0, %v1155
      %v1157 = vpop.f32.mrb[0].mxu0
      %1158 = vdwg.mxu0
      %v1159 = vadd.f32 %v928, %v1097
      %v1160 = vadd.f32 %v929, %v1100
      %v1161 = vadd.f32 %v930, %v1105
      %v1162 = vadd.f32 %v931, %v1108
      %v1163 = vadd.f32 %v932, %v1113
      %v1164 = vadd.f32 %v933, %v1116
      %v1165 = vadd.f32 %v934, %v1121
      %v1166 = vadd.f32 %v935, %v1124
      %v1167 = vadd.f32 %v936, %v1129
      %v1168 = vadd.f32 %v937, %v1132
      %v1169 = vadd.f32 %v938, %v1137
      %v1170 = vadd.f32 %v939, %v1140
      %v1171 = vadd.f32 %v940, %v1145
      %v1172 = vadd.f32 %v941, %v1148
      %v1173 = vadd.f32 %v942, %v1153
      %v1174 = vadd.f32 %v943, %v1156
      %v1175 = vld [vmem:[%s165 + $0x8] sm:$0xc]
      %s1176 = scalar_lea.vmem %s1, 40
      %v1177 = vld [vmem:[%s1176] sm:$0xf]
      %v1178 = vld [vmem:[%s1176 + $0x4] sm:$0xf]
      %v1180 = vunpack.c.l.b16 %v1175
      %v1181 = vpack.c.b16 %v759, %v1180
      %vm1182 = vcmask 1045504
      %v1183 = vrot.slane %v1181, 2
      %v1184 = vrot.slane %v776, 2
      %v1185 = vsel %vm1182, %v1183, %v1184
      %v1186 = vrot.slane %v777, 2
      %v1187 = vsel %vm1182, %v1184, %v1186
      %v1188 = vrot.slane %v778, 2
      %v1189 = vsel %vm1182, %v1186, %v1188
      %v1190 = vrot.slane %v779, 2
      %v1191 = vsel %vm1182, %v1188, %v1190
      %v1192 = vrot.slane %v780, 2
      %v1193 = vsel %vm1182, %v1190, %v1192
      %v1194 = vrot.slane %v781, 2
      %v1195 = vsel %vm1182, %v1192, %v1194
      %v1196 = vrot.slane %v782, 2
      %v1197 = vsel %vm1182, %v1194, %v1196
      %v1198 = vrot.slane %v950, 2
      %v1199 = vsel %vm1182, %v1196, %v1198
      %v1202 = vunpack.c.l.b16 %v1177
      %v1203 = vunpack.c.l.b16 %v1178
      %v1204 = vpack.c.b16 %v1203, %v1202
      %v1207 = vsel %vm312, %v1185, 0
      %v1210 = vsel %vm312, %v1187, 0
      %v1213 = vsel %vm312, %v1189, 0
      %v1216 = vsel %vm312, %v1191, 0
      %v1219 = vsel %vm312, %v1193, 0
      %v1222 = vsel %vm312, %v1195, 0
      %v1225 = vsel %vm312, %v1197, 0
      %v1228 = vsel %vm312, %v1199, 0
      %1230 = vmatprep.subr.bf16.mxu0 0
      %1231 = vmatpush1.bf16.msra.mxu0 %v1204
      %1232 = vmatprep.subr.bf16.mxu0 0
      %1233 = vmatpush1.bf16.msra.mxu0 0
      %1234 = vmatprep.subr.bf16.mxu0 0
      %1235 = vmatpush1.bf16.msra.mxu0 0
      %1236 = vmatprep.subr.bf16.mxu0 0
      %1237 = vmatpush1.bf16.msra.mxu0 0
      %1238 = vmatprep.subr.bf16.mxu0 0
      %1239 = vmatpush1.bf16.msra.mxu0 0
      %1240 = vmatprep.subr.bf16.mxu0 0
      %1241 = vmatpush1.bf16.msra.mxu0 0
      %1242 = vmatprep.subr.bf16.mxu0 0
      %1243 = vmatpush1.bf16.msra.mxu0 0
      %1244 = vmatprep.subr.bf16.mxu0 0
      %1245 = vmatpush1.bf16.msra.mxu0 0
      %1246 = vmatprep.subr.bf16.mxu0 0
      %1247 = vmatpush1.bf16.msra.mxu0 0
      %1248 = vmatprep.subr.bf16.mxu0 0
      %1249 = vmatpush1.bf16.msra.mxu0 0
      %1250 = vmatprep.subr.bf16.mxu0 0
      %1251 = vmatpush1.bf16.msra.mxu0 0
      %1252 = vmatprep.subr.bf16.mxu0 0
      %1253 = vmatpush1.bf16.msra.mxu0 0
      %1254 = vmatprep.subr.bf16.mxu0 0
      %1255 = vmatpush1.bf16.msra.mxu0 0
      %1256 = vmatprep.subr.bf16.mxu0 0
      %1257 = vmatpush1.bf16.msra.mxu0 0
      %1258 = vmatprep.subr.bf16.mxu0 0
      %1259 = vmatpush1.bf16.msra.mxu0 0
      %1260 = vmatprep.subr.bf16.mxu0 0
      %1261 = vmatpush1.bf16.msra.mxu0 0
      %1262 = vmatprep.mubr.bf16.mxu0 0
      %1263 = vmatmul.mubr.bf16.gmra.mrb[0].mxu0 %v1207
      %v1264 = vpop.f32.mrb[0].mxu0
      %v1265 = vadd.f32 0.0, %v1264
      %v1266 = vpop.f32.mrb[0].mxu0
      %v1267 = vpop.f32.mrb[0].mxu0
      %v1268 = vadd.f32 0.0, %v1267
      %v1269 = vpop.f32.mrb[0].mxu0
      %1270 = vmatprep.mubr.bf16.mxu0 0
      %1271 = vmatmul.mubr.bf16.gmra.mrb[0].mxu0 %v1210
      %v1272 = vpop.f32.mrb[0].mxu0
      %v1273 = vadd.f32 0.0, %v1272
      %v1274 = vpop.f32.mrb[0].mxu0
      %v1275 = vpop.f32.mrb[0].mxu0
      %v1276 = vadd.f32 0.0, %v1275
      %v1277 = vpop.f32.mrb[0].mxu0
      %1278 = vmatprep.mubr.bf16.mxu0 0
      %1279 = vmatmul.mubr.bf16.gmra.mrb[0].mxu0 %v1213
      %v1280 = vpop.f32.mrb[0].mxu0
      %v1281 = vadd.f32 0.0, %v1280
      %v1282 = vpop.f32.mrb[0].mxu0
      %v1283 = vpop.f32.mrb[0].mxu0
      %v1284 = vadd.f32 0.0, %v1283
      %v1285 = vpop.f32.mrb[0].mxu0
      %1286 = vmatprep.mubr.bf16.mxu0 0
      %1287 = vmatmul.mubr.bf16.gmra.mrb[0].mxu0 %v1216
      %v1288 = vpop.f32.mrb[0].mxu0
      %v1289 = vadd.f32 0.0, %v1288
      %v1290 = vpop.f32.mrb[0].mxu0
      %v1291 = vpop.f32.mrb[0].mxu0
      %v1292 = vadd.f32 0.0, %v1291
      %v1293 = vpop.f32.mrb[0].mxu0
      %1294 = vmatprep.mubr.bf16.mxu0 0
      %1295 = vmatmul.mubr.bf16.gmra.mrb[0].mxu0 %v1219
      %v1296 = vpop.f32.mrb[0].mxu0
      %v1297 = vadd.f32 0.0, %v1296
      %v1298 = vpop.f32.mrb[0].mxu0
      %v1299 = vpop.f32.mrb[0].mxu0
      %v1300 = vadd.f32 0.0, %v1299
      %v1301 = vpop.f32.mrb[0].mxu0
      %1302 = vmatprep.mubr.bf16.mxu0 0
      %1303 = vmatmul.mubr.bf16.gmra.mrb[0].mxu0 %v1222
      %v1304 = vpop.f32.mrb[0].mxu0
      %v1305 = vadd.f32 0.0, %v1304
      %v1306 = vpop.f32.mrb[0].mxu0
      %v1307 = vpop.f32.mrb[0].mxu0
      %v1308 = vadd.f32 0.0, %v1307
      %v1309 = vpop.f32.mrb[0].mxu0
      %1310 = vmatprep.mubr.bf16.mxu0 0
      %1311 = vmatmul.mubr.bf16.gmra.mrb[0].mxu0 %v1225
      %v1312 = vpop.f32.mrb[0].mxu0
      %v1313 = vadd.f32 0.0, %v1312
      %v1314 = vpop.f32.mrb[0].mxu0
      %v1315 = vpop.f32.mrb[0].mxu0
      %v1316 = vadd.f32 0.0, %v1315
      %v1317 = vpop.f32.mrb[0].mxu0
      %1318 = vmatprep.mubr.bf16.mxu0 0
      %1319 = vmatmul.mubr.bf16.gmra.mrb[0].mxu0 %v1228
      %v1320 = vpop.f32.mrb[0].mxu0
      %v1321 = vadd.f32 0.0, %v1320
      %v1322 = vpop.f32.mrb[0].mxu0
      %v1323 = vpop.f32.mrb[0].mxu0
      %v1324 = vadd.f32 0.0, %v1323
      %v1325 = vpop.f32.mrb[0].mxu0
      %1326 = vdwg.mxu0
      %v1327 = vadd.f32 %v1159, %v1265
      %v1328 = vadd.f32 %v1160, %v1268
      %v1329 = vadd.f32 %v1161, %v1273
      %v1330 = vadd.f32 %v1162, %v1276
      %v1331 = vadd.f32 %v1163, %v1281
      %v1332 = vadd.f32 %v1164, %v1284
      %v1333 = vadd.f32 %v1165, %v1289
      %v1334 = vadd.f32 %v1166, %v1292
      %v1335 = vadd.f32 %v1167, %v1297
      %v1336 = vadd.f32 %v1168, %v1300
      %v1337 = vadd.f32 %v1169, %v1305
      %v1338 = vadd.f32 %v1170, %v1308
      %v1339 = vadd.f32 %v1171, %v1313
      %v1340 = vadd.f32 %v1172, %v1316
      %v1341 = vadd.f32 %v1173, %v1321
      %v1342 = vadd.f32 %v1174, %v1324
      %v1343 = vld [vmem:[%s165 + $0x10] sm:$0xc]
      %v1344 = vld [vmem:[%s165 + $0x14] sm:$0xf]
      %v1345 = vld [vmem:[%s165 + $0x18] sm:$0xf]
      %v1346 = vld [vmem:[%s165 + $0x1c] sm:$0xf]
      %v1347 = vld [vmem:[%s165 + $0x20] sm:$0xf]
      %v1348 = vld [vmem:[%s165 + $0x24] sm:$0xf]
      %v1349 = vld [vmem:[%s165 + $0x28] sm:$0xf]
      %v1350 = vld [vmem:[%s165 + $0x2c] sm:$0xf]
      %v1351 = vld [vmem:[%s165 + $0x30] sm:$0xf]
      %v1352 = vld [vmem:[%s165 + $0x34] sm:$0xf]
      %v1353 = vld [vmem:[%s165 + $0x38] sm:$0xf]
      %v1354 = vld [vmem:[%s165 + $0x3c] sm:$0xf]
      %v1355 = vld [vmem:[%s165 + $0x40] sm:$0xf]
      %v1356 = vld [vmem:[%s165 + $0x44] sm:$0xf]
      %v1357 = vld [vmem:[%s165 + $0x48] sm:$0xf]
      %v1358 = vld [vmem:[%s165 + $0x4c] sm:$0xf]
      %v1359 = vld [vmem:[%s165 + $0x50] sm:$0x3]
      %s1360 = scalar_lea.vmem %s1, 48
      %v1361 = vld [vmem:[%s1360] sm:$0xf]
      %v1362 = vld [vmem:[%s1360 + $0x4] sm:$0xf]
      %v1380 = vunpack.c.l.b16 %v1343
      %v1381 = vunpack.c.l.b16 %v1344
      %v1382 = vunpack.c.l.b16 %v1345
      %v1383 = vunpack.c.l.b16 %v1346
      %v1384 = vunpack.c.l.b16 %v1347
      %v1385 = vunpack.c.l.b16 %v1348
      %v1386 = vunpack.c.l.b16 %v1349
      %v1387 = vunpack.c.l.b16 %v1350
      %v1388 = vunpack.c.l.b16 %v1351
      %v1389 = vunpack.c.l.b16 %v1352
      %v1390 = vunpack.c.l.b16 %v1353
      %v1391 = vunpack.c.l.b16 %v1354
      %v1392 = vunpack.c.l.b16 %v1355
      %v1393 = vunpack.c.l.b16 %v1356
      %v1394 = vunpack.c.l.b16 %v1357
      %v1395 = vunpack.c.l.b16 %v1358
      %v1396 = vunpack.c.l.b16 %v1359
      %v1397 = vpack.c.b16 %v1381, %v1380
      %v1398 = vpack.c.b16 %v1383, %v1382
      %v1399 = vpack.c.b16 %v1385, %v1384
      %v1400 = vpack.c.b16 %v1387, %v1386
      %v1401 = vpack.c.b16 %v1389, %v1388
      %v1402 = vpack.c.b16 %v1391, %v1390
      %v1403 = vpack.c.b16 %v1393, %v1392
      %v1404 = vpack.c.b16 %v1395, %v1394
      %v1405 = vpack.c.b16 %v1396, %v1396
      %v1406 = vrot.slane %v1397, 2
      %v1407 = vrot.slane %v1398, 2
      %v1408 = vsel %vm1182, %v1406, %v1407
      %v1409 = vrot.slane %v1399, 2
      %v1410 = vsel %vm1182, %v1407, %v1409
      %v1411 = vrot.slane %v1400, 2
      %v1412 = vsel %vm1182, %v1409, %v1411
      %v1413 = vrot.slane %v1401, 2
      %v1414 = vsel %vm1182, %v1411, %v1413
      %v1415 = vrot.slane %v1402, 2
      %v1416 = vsel %vm1182, %v1413, %v1415
      %v1417 = vrot.slane %v1403, 2
      %v1418 = vsel %vm1182, %v1415, %v1417
      %v1419 = vrot.slane %v1404, 2
      %v1420 = vsel %vm1182, %v1417, %v1419
      %v1421 = vrot.slane %v1405, 2
      %v1422 = vsel %vm1182, %v1419, %v1421
      %v1425 = vunpack.c.l.b16 %v1361
      %v1426 = vunpack.c.l.b16 %v1362
      %v1427 = vpack.c.b16 %v1426, %v1425
      %v1430 = vsel %vm312, %v1408, 0
      %v1433 = vsel %vm312, %v1410, 0
      %v1436 = vsel %vm312, %v1412, 0
      %v1439 = vsel %vm312, %v1414, 0
      %v1442 = vsel %vm312, %v1416, 0
      %v1445 = vsel %vm312, %v1418, 0
      %v1448 = vsel %vm312, %v1420, 0
      %v1451 = vsel %vm312, %v1422, 0
      %1453 = vmatprep.subr.bf16.mxu0 0
      %1454 = vmatpush1.bf16.msra.mxu0 %v1427
      %1455 = vmatprep.subr.bf16.mxu0 0
      %1456 = vmatpush1.bf16.msra.mxu0 0
      %1457 = vmatprep.subr.bf16.mxu0 0
      %1458 = vmatpush1.bf16.msra.mxu0 0
      %1459 = vmatprep.subr.bf16.mxu0 0
      %1460 = vmatpush1.bf16.msra.mxu0 0
      %1461 = vmatprep.subr.bf16.mxu0 0
      %1462 = vmatpush1.bf16.msra.mxu0 0
      %1463 = vmatprep.subr.bf16.mxu0 0
      %1464 = vmatpush1.bf16.msra.mxu0 0
      %1465 = vmatprep.subr.bf16.mxu0 0
      %1466 = vmatpush1.bf16.msra.mxu0 0
      %1467 = vmatprep.subr.bf16.mxu0 0
      %1468 = vmatpush1.bf16.msra.mxu0 0
      %1469 = vmatprep.subr.bf16.mxu0 0
      %1470 = vmatpush1.bf16.msra.mxu0 0
      %1471 = vmatprep.subr.bf16.mxu0 0
      %1472 = vmatpush1.bf16.msra.mxu0 0
      %1473 = vmatprep.subr.bf16.mxu0 0
      %1474 = vmatpush1.bf16.msra.mxu0 0
      %1475 = vmatprep.subr.bf16.mxu0 0
      %1476 = vmatpush1.bf16.msra.mxu0 0
      %1477 = vmatprep.subr.bf16.mxu0 0
      %1478 = vmatpush1.bf16.msra.mxu0 0
      %1479 = vmatprep.subr.bf16.mxu0 0
      %1480 = vmatpush1.bf16.msra.mxu0 0
      %1481 = vmatprep.subr.bf16.mxu0 0
      %1482 = vmatpush1.bf16.msra.mxu0 0
      %1483 = vmatprep.subr.bf16.mxu0 0
      %1484 = vmatpush1.bf16.msra.mxu0 0
      %1485 = vmatprep.mubr.bf16.mxu0 0
      %1486 = vmatmul.mubr.bf16.gmra.mrb[0].mxu0 %v1430
      %v1487 = vpop.f32.mrb[0].mxu0
      %v1488 = vadd.f32 0.0, %v1487
      %v1489 = vpop.f32.mrb[0].mxu0
      %v1490 = vpop.f32.mrb[0].mxu0
      %v1491 = vadd.f32 0.0, %v1490
      %v1492 = vpop.f32.mrb[0].mxu0
      %1493 = vmatprep.mubr.bf16.mxu0 0
      %1494 = vmatmul.mubr.bf16.gmra.mrb[0].mxu0 %v1433
      %v1495 = vpop.f32.mrb[0].mxu0
      %v1496 = vadd.f32 0.0, %v1495
      %v1497 = vpop.f32.mrb[0].mxu0
      %v1498 = vpop.f32.mrb[0].mxu0
      %v1499 = vadd.f32 0.0, %v1498
      %v1500 = vpop.f32.mrb[0].mxu0
      %1501 = vmatprep.mubr.bf16.mxu0 0
      %1502 = vmatmul.mubr.bf16.gmra.mrb[0].mxu0 %v1436
      %v1503 = vpop.f32.mrb[0].mxu0
      %v1504 = vadd.f32 0.0, %v1503
      %v1505 = vpop.f32.mrb[0].mxu0
      %v1506 = vpop.f32.mrb[0].mxu0
      %v1507 = vadd.f32 0.0, %v1506
      %v1508 = vpop.f32.mrb[0].mxu0
      %1509 = vmatprep.mubr.bf16.mxu0 0
      %1510 = vmatmul.mubr.bf16.gmra.mrb[0].mxu0 %v1439
      %v1511 = vpop.f32.mrb[0].mxu0
      %v1512 = vadd.f32 0.0, %v1511
      %v1513 = vpop.f32.mrb[0].mxu0
      %v1514 = vpop.f32.mrb[0].mxu0
      %v1515 = vadd.f32 0.0, %v1514
      %v1516 = vpop.f32.mrb[0].mxu0
      %1517 = vmatprep.mubr.bf16.mxu0 0
      %1518 = vmatmul.mubr.bf16.gmra.mrb[0].mxu0 %v1442
      %v1519 = vpop.f32.mrb[0].mxu0
      %v1520 = vadd.f32 0.0, %v1519
      %v1521 = vpop.f32.mrb[0].mxu0
      %v1522 = vpop.f32.mrb[0].mxu0
      %v1523 = vadd.f32 0.0, %v1522
      %v1524 = vpop.f32.mrb[0].mxu0
      %1525 = vmatprep.mubr.bf16.mxu0 0
      %1526 = vmatmul.mubr.bf16.gmra.mrb[0].mxu0 %v1445
      %v1527 = vpop.f32.mrb[0].mxu0
      %v1528 = vadd.f32 0.0, %v1527
      %v1529 = vpop.f32.mrb[0].mxu0
      %v1530 = vpop.f32.mrb[0].mxu0
      %v1531 = vadd.f32 0.0, %v1530
      %v1532 = vpop.f32.mrb[0].mxu0
      %1533 = vmatprep.mubr.bf16.mxu0 0
      %1534 = vmatmul.mubr.bf16.gmra.mrb[0].mxu0 %v1448
      %v1535 = vpop.f32.mrb[0].mxu0
      %v1536 = vadd.f32 0.0, %v1535
      %v1537 = vpop.f32.mrb[0].mxu0
      %v1538 = vpop.f32.mrb[0].mxu0
      %v1539 = vadd.f32 0.0, %v1538
      %v1540 = vpop.f32.mrb[0].mxu0
      %1541 = vmatprep.mubr.bf16.mxu0 0
      %1542 = vmatmul.mubr.bf16.gmra.mrb[0].mxu0 %v1451
      %v1543 = vpop.f32.mrb[0].mxu0
      %v1544 = vadd.f32 0.0, %v1543
      %v1545 = vpop.f32.mrb[0].mxu0
      %v1546 = vpop.f32.mrb[0].mxu0
      %v1547 = vadd.f32 0.0, %v1546
      %v1548 = vpop.f32.mrb[0].mxu0
      %1549 = vdwg.mxu0
      %v1550 = vadd.f32 %v1327, %v1488
      %v1551 = vadd.f32 %v1328, %v1491
      %v1552 = vadd.f32 %v1329, %v1496
      %v1553 = vadd.f32 %v1330, %v1499
      %v1554 = vadd.f32 %v1331, %v1504
      %v1555 = vadd.f32 %v1332, %v1507
      %v1556 = vadd.f32 %v1333, %v1512
      %v1557 = vadd.f32 %v1334, %v1515
      %v1558 = vadd.f32 %v1335, %v1520
      %v1559 = vadd.f32 %v1336, %v1523
      %v1560 = vadd.f32 %v1337, %v1528
      %v1561 = vadd.f32 %v1338, %v1531
      %v1562 = vadd.f32 %v1339, %v1536
      %v1563 = vadd.f32 %v1340, %v1539
      %v1564 = vadd.f32 %v1341, %v1544
      %v1565 = vadd.f32 %v1342, %v1547
      %v1566 = vld [vmem:[%s165 + $0x50] sm:$0x7]
      %s1567 = scalar_lea.vmem %s1, 56
      %v1568 = vld [vmem:[%s1567] sm:$0xf]
      %v1569 = vld [vmem:[%s1567 + $0x4] sm:$0xf]
      %v1571 = vunpack.c.l.b16 %v1566
      %v1572 = vpack.c.b16 %v1571, %v1571
      %vm1573 = vsmask.f32 5376
      %v1575 = vshrl.u32 %v1397, 16
      %v1577 = vrot.slane %v1575, 2
      %v1578 = vshll.u32 %v1397, 16
      %v1580 = vrot.slane %v1578, 3
      %v1581 = vor.u32 %v1577, %v1580
      %v1583 = vshrl.u32 %v1398, 16
      %v1585 = vrot.slane %v1583, 2
      %v1586 = vshll.u32 %v1398, 16
      %v1588 = vrot.slane %v1586, 3
      %v1589 = vor.u32 %v1585, %v1588
      %v1590 = vsel %vm1573, %v1581, %v1589
      %v1592 = vshrl.u32 %v1399, 16
      %v1594 = vrot.slane %v1592, 2
      %v1595 = vshll.u32 %v1399, 16
      %v1597 = vrot.slane %v1595, 3
      %v1598 = vor.u32 %v1594, %v1597
      %v1599 = vsel %vm1573, %v1589, %v1598
      %v1601 = vshrl.u32 %v1400, 16
      %v1603 = vrot.slane %v1601, 2
      %v1604 = vshll.u32 %v1400, 16
      %v1606 = vrot.slane %v1604, 3
      %v1607 = vor.u32 %v1603, %v1606
      %v1608 = vsel %vm1573, %v1598, %v1607
      %v1610 = vshrl.u32 %v1401, 16
      %v1612 = vrot.slane %v1610, 2
      %v1613 = vshll.u32 %v1401, 16
      %v1615 = vrot.slane %v1613, 3
      %v1616 = vor.u32 %v1612, %v1615
      %v1617 = vsel %vm1573, %v1607, %v1616
      %v1619 = vshrl.u32 %v1402, 16
      %v1621 = vrot.slane %v1619, 2
      %v1622 = vshll.u32 %v1402, 16
      %v1624 = vrot.slane %v1622, 3
      %v1625 = vor.u32 %v1621, %v1624
      %v1626 = vsel %vm1573, %v1616, %v1625
      %v1628 = vshrl.u32 %v1403, 16
      %v1630 = vrot.slane %v1628, 2
      %v1631 = vshll.u32 %v1403, 16
      %v1633 = vrot.slane %v1631, 3
      %v1634 = vor.u32 %v1630, %v1633
      %v1635 = vsel %vm1573, %v1625, %v1634
      %v1637 = vshrl.u32 %v1404, 16
      %v1639 = vrot.slane %v1637, 2
      %v1640 = vshll.u32 %v1404, 16
      %v1642 = vrot.slane %v1640, 3
      %v1643 = vor.u32 %v1639, %v1642
      %v1644 = vsel %vm1573, %v1634, %v1643
      %v1646 = vshrl.u32 %v1572, 16
      %v1648 = vrot.slane %v1646, 2
      %v1649 = vshll.u32 %v1572, 16
      %v1651 = vrot.slane %v1649, 3
      %v1652 = vor.u32 %v1648, %v1651
      %v1653 = vsel %vm1573, %v1643, %v1652
      %v1656 = vunpack.c.l.b16 %v1568
      %v1657 = vunpack.c.l.b16 %v1569
      %v1658 = vpack.c.b16 %v1657, %v1656
      %v1661 = vsel %vm312, %v1590, 0
      %v1664 = vsel %vm312, %v1599, 0
      %v1667 = vsel %vm312, %v1608, 0
      %v1670 = vsel %vm312, %v1617, 0
      %v1673 = vsel %vm312, %v1626, 0
      %v1676 = vsel %vm312, %v1635, 0
      %v1679 = vsel %vm312, %v1644, 0
      %v1682 = vsel %vm312, %v1653, 0
      %1684 = vmatprep.subr.bf16.mxu0 0
      %1685 = vmatpush1.bf16.msra.mxu0 %v1658
      %1686 = vmatprep.subr.bf16.mxu0 0
      %1687 = vmatpush1.bf16.msra.mxu0 0
      %1688 = vmatprep.subr.bf16.mxu0 0
      %1689 = vmatpush1.bf16.msra.mxu0 0
      %1690 = vmatprep.subr.bf16.mxu0 0
      %1691 = vmatpush1.bf16.msra.mxu0 0
      %1692 = vmatprep.subr.bf16.mxu0 0
      %1693 = vmatpush1.bf16.msra.mxu0 0
      %1694 = vmatprep.subr.bf16.mxu0 0
      %1695 = vmatpush1.bf16.msra.mxu0 0
      %1696 = vmatprep.subr.bf16.mxu0 0
      %1697 = vmatpush1.bf16.msra.mxu0 0
      %1698 = vmatprep.subr.bf16.mxu0 0
      %1699 = vmatpush1.bf16.msra.mxu0 0
      %1700 = vmatprep.subr.bf16.mxu0 0
      %1701 = vmatpush1.bf16.msra.mxu0 0
      %1702 = vmatprep.subr.bf16.mxu0 0
      %1703 = vmatpush1.bf16.msra.mxu0 0
      %1704 = vmatprep.subr.bf16.mxu0 0
      %1705 = vmatpush1.bf16.msra.mxu0 0
      %1706 = vmatprep.subr.bf16.mxu0 0
      %1707 = vmatpush1.bf16.msra.mxu0 0
      %1708 = vmatprep.subr.bf16.mxu0 0
      %1709 = vmatpush1.bf16.msra.mxu0 0
      %1710 = vmatprep.subr.bf16.mxu0 0
      %1711 = vmatpush1.bf16.msra.mxu0 0
      %1712 = vmatprep.subr.bf16.mxu0 0
      %1713 = vmatpush1.bf16.msra.mxu0 0
      %1714 = vmatprep.subr.bf16.mxu0 0
      %1715 = vmatpush1.bf16.msra.mxu0 0
      %1716 = vmatprep.mubr.bf16.mxu0 0
      %1717 = vmatmul.mubr.bf16.gmra.mrb[0].mxu0 %v1661
      %v1718 = vpop.f32.mrb[0].mxu0
      %v1719 = vadd.f32 0.0, %v1718
      %v1720 = vpop.f32.mrb[0].mxu0
      %v1721 = vpop.f32.mrb[0].mxu0
      %v1722 = vadd.f32 0.0, %v1721
      %v1723 = vpop.f32.mrb[0].mxu0
      %1724 = vmatprep.mubr.bf16.mxu0 0
      %1725 = vmatmul.mubr.bf16.gmra.mrb[0].mxu0 %v1664
      %v1726 = vpop.f32.mrb[0].mxu0
      %v1727 = vadd.f32 0.0, %v1726
      %v1728 = vpop.f32.mrb[0].mxu0
      %v1729 = vpop.f32.mrb[0].mxu0
      %v1730 = vadd.f32 0.0, %v1729
      %v1731 = vpop.f32.mrb[0].mxu0
      %1732 = vmatprep.mubr.bf16.mxu0 0
      %1733 = vmatmul.mubr.bf16.gmra.mrb[0].mxu0 %v1667
      %v1734 = vpop.f32.mrb[0].mxu0
      %v1735 = vadd.f32 0.0, %v1734
      %v1736 = vpop.f32.mrb[0].mxu0
      %v1737 = vpop.f32.mrb[0].mxu0
      %v1738 = vadd.f32 0.0, %v1737
      %v1739 = vpop.f32.mrb[0].mxu0
      %1740 = vmatprep.mubr.bf16.mxu0 0
      %1741 = vmatmul.mubr.bf16.gmra.mrb[0].mxu0 %v1670
      %v1742 = vpop.f32.mrb[0].mxu0
      %v1743 = vadd.f32 0.0, %v1742
      %v1744 = vpop.f32.mrb[0].mxu0
      %v1745 = vpop.f32.mrb[0].mxu0
      %v1746 = vadd.f32 0.0, %v1745
      %v1747 = vpop.f32.mrb[0].mxu0
      %1748 = vmatprep.mubr.bf16.mxu0 0
      %1749 = vmatmul.mubr.bf16.gmra.mrb[0].mxu0 %v1673
      %v1750 = vpop.f32.mrb[0].mxu0
      %v1751 = vadd.f32 0.0, %v1750
      %v1752 = vpop.f32.mrb[0].mxu0
      %v1753 = vpop.f32.mrb[0].mxu0
      %v1754 = vadd.f32 0.0, %v1753
      %v1755 = vpop.f32.mrb[0].mxu0
      %1756 = vmatprep.mubr.bf16.mxu0 0
      %1757 = vmatmul.mubr.bf16.gmra.mrb[0].mxu0 %v1676
      %v1758 = vpop.f32.mrb[0].mxu0
      %v1759 = vadd.f32 0.0, %v1758
      %v1760 = vpop.f32.mrb[0].mxu0
      %v1761 = vpop.f32.mrb[0].mxu0
      %v1762 = vadd.f32 0.0, %v1761
      %v1763 = vpop.f32.mrb[0].mxu0
      %1764 = vmatprep.mubr.bf16.mxu0 0
      %1765 = vmatmul.mubr.bf16.gmra.mrb[0].mxu0 %v1679
      %v1766 = vpop.f32.mrb[0].mxu0
      %v1767 = vadd.f32 0.0, %v1766
      %v1768 = vpop.f32.mrb[0].mxu0
      %v1769 = vpop.f32.mrb[0].mxu0
      %v1770 = vadd.f32 0.0, %v1769
      %v1771 = vpop.f32.mrb[0].mxu0
      %1772 = vmatprep.mubr.bf16.mxu0 0
      %1773 = vmatmul.mubr.bf16.gmra.mrb[0].mxu0 %v1682
      %v1774 = vpop.f32.mrb[0].mxu0
      %v1775 = vadd.f32 0.0, %v1774
      %v1776 = vpop.f32.mrb[0].mxu0
      %v1777 = vpop.f32.mrb[0].mxu0
      %v1778 = vadd.f32 0.0, %v1777
      %v1779 = vpop.f32.mrb[0].mxu0
      %1780 = vdwg.mxu0
      %v1781 = vadd.f32 %v1550, %v1719
      %v1782 = vadd.f32 %v1551, %v1722
      %v1783 = vadd.f32 %v1552, %v1727
      %v1784 = vadd.f32 %v1553, %v1730
      %v1785 = vadd.f32 %v1554, %v1735
      %v1786 = vadd.f32 %v1555, %v1738
      %v1787 = vadd.f32 %v1556, %v1743
      %v1788 = vadd.f32 %v1557, %v1746
      %v1789 = vadd.f32 %v1558, %v1751
      %v1790 = vadd.f32 %v1559, %v1754
      %v1791 = vadd.f32 %v1560, %v1759
      %v1792 = vadd.f32 %v1561, %v1762
      %v1793 = vadd.f32 %v1562, %v1767
      %v1794 = vadd.f32 %v1563, %v1770
      %v1795 = vadd.f32 %v1564, %v1775
      %v1796 = vadd.f32 %v1565, %v1778
      %v1797 = vld [vmem:[%s165 + $0x10] sm:$0x8]
      %s1798 = scalar_lea.vmem %s1, 64
      %v1799 = vld [vmem:[%s1798] sm:$0xf]
      %v1800 = vld [vmem:[%s1798 + $0x4] sm:$0xf]
      %v1802 = vunpack.c.l.b16 %v1797
      %v1803 = vpack.c.b16 %v1381, %v1802
      %vm1804 = vcmask 1044480
      %v1805 = vrot.slane %v1803, 3
      %v1806 = vrot.slane %v1398, 3
      %v1807 = vsel %vm1804, %v1805, %v1806
      %v1808 = vrot.slane %v1399, 3
      %v1809 = vsel %vm1804, %v1806, %v1808
      %v1810 = vrot.slane %v1400, 3
      %v1811 = vsel %vm1804, %v1808, %v1810
      %v1812 = vrot.slane %v1401, 3
      %v1813 = vsel %vm1804, %v1810, %v1812
      %v1814 = vrot.slane %v1402, 3
      %v1815 = vsel %vm1804, %v1812, %v1814
      %v1816 = vrot.slane %v1403, 3
      %v1817 = vsel %vm1804, %v1814, %v1816
      %v1818 = vrot.slane %v1404, 3
      %v1819 = vsel %vm1804, %v1816, %v1818
      %v1820 = vrot.slane %v1572, 3
      %v1821 = vsel %vm1804, %v1818, %v1820
      %v1824 = vunpack.c.l.b16 %v1799
      %v1825 = vunpack.c.l.b16 %v1800
      %v1826 = vpack.c.b16 %v1825, %v1824
      %v1829 = vsel %vm312, %v1807, 0
      %v1832 = vsel %vm312, %v1809, 0
      %v1835 = vsel %vm312, %v1811, 0
      %v1838 = vsel %vm312, %v1813, 0
      %v1841 = vsel %vm312, %v1815, 0
      %v1844 = vsel %vm312, %v1817, 0
      %v1847 = vsel %vm312, %v1819, 0
      %v1850 = vsel %vm312, %v1821, 0
      %1852 = vmatprep.subr.bf16.mxu0 0
      %1853 = vmatpush1.bf16.msra.mxu0 %v1826
      %1854 = vmatprep.subr.bf16.mxu0 0
      %1855 = vmatpush1.bf16.msra.mxu0 0
      %1856 = vmatprep.subr.bf16.mxu0 0
      %1857 = vmatpush1.bf16.msra.mxu0 0
      %1858 = vmatprep.subr.bf16.mxu0 0
      %1859 = vmatpush1.bf16.msra.mxu0 0
      %1860 = vmatprep.subr.bf16.mxu0 0
      %1861 = vmatpush1.bf16.msra.mxu0 0
      %1862 = vmatprep.subr.bf16.mxu0 0
      %1863 = vmatpush1.bf16.msra.mxu0 0
      %1864 = vmatprep.subr.bf16.mxu0 0
      %1865 = vmatpush1.bf16.msra.mxu0 0
      %1866 = vmatprep.subr.bf16.mxu0 0
      %1867 = vmatpush1.bf16.msra.mxu0 0
      %1868 = vmatprep.subr.bf16.mxu0 0
      %1869 = vmatpush1.bf16.msra.mxu0 0
      %1870 = vmatprep.subr.bf16.mxu0 0
      %1871 = vmatpush1.bf16.msra.mxu0 0
      %1872 = vmatprep.subr.bf16.mxu0 0
      %1873 = vmatpush1.bf16.msra.mxu0 0
      %1874 = vmatprep.subr.bf16.mxu0 0
      %1875 = vmatpush1.bf16.msra.mxu0 0
      %1876 = vmatprep.subr.bf16.mxu0 0
      %1877 = vmatpush1.bf16.msra.mxu0 0
      %1878 = vmatprep.subr.bf16.mxu0 0
      %1879 = vmatpush1.bf16.msra.mxu0 0
      %1880 = vmatprep.subr.bf16.mxu0 0
      %1881 = vmatpush1.bf16.msra.mxu0 0
      %1882 = vmatprep.subr.bf16.mxu0 0
      %1883 = vmatpush1.bf16.msra.mxu0 0
      %1884 = vmatprep.mubr.bf16.mxu0 0
      %1885 = vmatmul.mubr.bf16.gmra.mrb[0].mxu0 %v1829
      %v1886 = vpop.f32.mrb[0].mxu0
      %v1887 = vadd.f32 0.0, %v1886
      %v1888 = vpop.f32.mrb[0].mxu0
      %v1889 = vpop.f32.mrb[0].mxu0
      %v1890 = vadd.f32 0.0, %v1889
      %v1891 = vpop.f32.mrb[0].mxu0
      %1892 = vmatprep.mubr.bf16.mxu0 0
      %1893 = vmatmul.mubr.bf16.gmra.mrb[0].mxu0 %v1832
      %v1894 = vpop.f32.mrb[0].mxu0
      %v1895 = vadd.f32 0.0, %v1894
      %v1896 = vpop.f32.mrb[0].mxu0
      %v1897 = vpop.f32.mrb[0].mxu0
      %v1898 = vadd.f32 0.0, %v1897
      %v1899 = vpop.f32.mrb[0].mxu0
      %1900 = vmatprep.mubr.bf16.mxu0 0
      %1901 = vmatmul.mubr.bf16.gmra.mrb[0].mxu0 %v1835
      %v1902 = vpop.f32.mrb[0].mxu0
      %v1903 = vadd.f32 0.0, %v1902
      %v1904 = vpop.f32.mrb[0].mxu0
      %v1905 = vpop.f32.mrb[0].mxu0
      %v1906 = vadd.f32 0.0, %v1905
      %v1907 = vpop.f32.mrb[0].mxu0
      %1908 = vmatprep.mubr.bf16.mxu0 0
      %1909 = vmatmul.mubr.bf16.gmra.mrb[0].mxu0 %v1838
      %v1910 = vpop.f32.mrb[0].mxu0
      %v1911 = vadd.f32 0.0, %v1910
      %v1912 = vpop.f32.mrb[0].mxu0
      %v1913 = vpop.f32.mrb[0].mxu0
      %v1914 = vadd.f32 0.0, %v1913
      %v1915 = vpop.f32.mrb[0].mxu0
      %1916 = vmatprep.mubr.bf16.mxu0 0
      %1917 = vmatmul.mubr.bf16.gmra.mrb[0].mxu0 %v1841
      %v1918 = vpop.f32.mrb[0].mxu0
      %v1919 = vadd.f32 0.0, %v1918
      %v1920 = vpop.f32.mrb[0].mxu0
      %v1921 = vpop.f32.mrb[0].mxu0
      %v1922 = vadd.f32 0.0, %v1921
      %v1923 = vpop.f32.mrb[0].mxu0
      %1924 = vmatprep.mubr.bf16.mxu0 0
      %1925 = vmatmul.mubr.bf16.gmra.mrb[0].mxu0 %v1844
      %v1926 = vpop.f32.mrb[0].mxu0
      %v1927 = vadd.f32 0.0, %v1926
      %v1928 = vpop.f32.mrb[0].mxu0
      %v1929 = vpop.f32.mrb[0].mxu0
      %v1930 = vadd.f32 0.0, %v1929
      %v1931 = vpop.f32.mrb[0].mxu0
      %1932 = vmatprep.mubr.bf16.mxu0 0
      %1933 = vmatmul.mubr.bf16.gmra.mrb[0].mxu0 %v1847
      %v1934 = vpop.f32.mrb[0].mxu0
      %v1935 = vadd.f32 0.0, %v1934
      %v1936 = vpop.f32.mrb[0].mxu0
      %v1937 = vpop.f32.mrb[0].mxu0
      %v1938 = vadd.f32 0.0, %v1937
      %v1939 = vpop.f32.mrb[0].mxu0
      %1940 = vmatprep.mubr.bf16.mxu0 0
      %1941 = vmatmul.mubr.bf16.gmra.mrb[0].mxu0 %v1850
      %v1942 = vpop.f32.mrb[0].mxu0
      %v1943 = vadd.f32 0.0, %v1942
      %v1944 = vpop.f32.mrb[0].mxu0
      %v1945 = vpop.f32.mrb[0].mxu0
      %v1946 = vadd.f32 0.0, %v1945
      %v1947 = vpop.f32.mrb[0].mxu0
      %1948 = vdwg.mxu0
      %v1949 = vadd.f32 %v1781, %v1887
      %v1950 = vadd.f32 %v1782, %v1890
      %v1951 = vadd.f32 %v1783, %v1895
      %v1952 = vadd.f32 %v1784, %v1898
      %v1953 = vadd.f32 %v1785, %v1903
      %v1954 = vadd.f32 %v1786, %v1906
      %v1955 = vadd.f32 %v1787, %v1911
      %v1956 = vadd.f32 %v1788, %v1914
      %v1957 = vadd.f32 %v1789, %v1919
      %v1958 = vadd.f32 %v1790, %v1922
      %v1959 = vadd.f32 %v1791, %v1927
      %v1960 = vadd.f32 %v1792, %v1930
      %v1961 = vadd.f32 %v1793, %v1935
      %v1962 = vadd.f32 %v1794, %v1938
      %v1963 = vadd.f32 %v1795, %v1943
      %v1964 = vadd.f32 %v1796, %v1946
      %v1965 = vld [vmem:[%s2] sm:$0x1]
      %v1967 = vlaneseq
      %v1968 = vshrl.u32 %v1967, 7
      %v1969 = vsub.s32 0, %v1968
      %v1970 = vrot.slane %v1965, %v1969
      %v1972 = vadd.f32 %v1949, %v1970
      %v1973 = vadd.f32 %v1950, %v1970
      %v1974 = vadd.f32 %v1951, %v1970
      %v1975 = vadd.f32 %v1952, %v1970
      %v1976 = vadd.f32 %v1953, %v1970
      %v1977 = vadd.f32 %v1954, %v1970
      %v1978 = vadd.f32 %v1955, %v1970
      %v1979 = vadd.f32 %v1956, %v1970
      %v1980 = vadd.f32 %v1957, %v1970
      %v1981 = vadd.f32 %v1958, %v1970
      %v1982 = vadd.f32 %v1959, %v1970
      %v1983 = vadd.f32 %v1960, %v1970
      %v1984 = vadd.f32 %v1961, %v1970
      %v1985 = vadd.f32 %v1962, %v1970
      %v1986 = vadd.f32 %v1963, %v1970
      %v1987 = vadd.f32 %v1964, %v1970
      %v1988 = vmax.f32 %v1972, 0.0
      %v1989 = vmax.f32 %v1973, 0.0
      %v1990 = vmax.f32 %v1974, 0.0
      %v1991 = vmax.f32 %v1975, 0.0
      %v1992 = vmax.f32 %v1976, 0.0
      %v1993 = vmax.f32 %v1977, 0.0
      %v1994 = vmax.f32 %v1978, 0.0
      %v1995 = vmax.f32 %v1979, 0.0
      %v1996 = vmax.f32 %v1980, 0.0
      %v1997 = vmax.f32 %v1981, 0.0
      %v1998 = vmax.f32 %v1982, 0.0
      %v1999 = vmax.f32 %v1983, 0.0
      %v2000 = vmax.f32 %v1984, 0.0
      %v2001 = vmax.f32 %v1985, 0.0
      %v2002 = vmax.f32 %v1986, 0.0
      %v2003 = vmax.f32 %v1987, 0.0
      %vm2004 = vcmask 523264
      %2005 = vst.msk [vmem:[%s170] sm:$0xff] %vm2004, %v1988
      %2006 = vst.msk [vmem:[%s170 + $0x8] sm:$0xff] %vm2004, %v1989
      %2007 = vst.msk [vmem:[%s170 + $0x10] sm:$0xff] %vm2004, %v1990
      %2008 = vst.msk [vmem:[%s170 + $0x18] sm:$0xff] %vm2004, %v1991
      %2009 = vst.msk [vmem:[%s170 + $0x20] sm:$0xff] %vm2004, %v1992
      %2010 = vst.msk [vmem:[%s170 + $0x28] sm:$0xff] %vm2004, %v1993
      %2011 = vst.msk [vmem:[%s170 + $0x30] sm:$0xff] %vm2004, %v1994
      %2012 = vst.msk [vmem:[%s170 + $0x38] sm:$0xff] %vm2004, %v1995
      %2013 = vst.msk [vmem:[%s170 + $0x40] sm:$0xff] %vm2004, %v1996
      %2014 = vst.msk [vmem:[%s170 + $0x48] sm:$0xff] %vm2004, %v1997
      %2015 = vst.msk [vmem:[%s170 + $0x50] sm:$0xff] %vm2004, %v1998
      %2016 = vst.msk [vmem:[%s170 + $0x58] sm:$0xff] %vm2004, %v1999
      %2017 = vst.msk [vmem:[%s170 + $0x60] sm:$0xff] %vm2004, %v2000
      %2018 = vst.msk [vmem:[%s170 + $0x68] sm:$0xff] %vm2004, %v2001
      %2019 = vst.msk [vmem:[%s170 + $0x70] sm:$0xff] %vm2004, %v2002
      %2020 = vst.msk [vmem:[%s170 + $0x78] sm:$0xff] %vm2004, %v2003
      %p2021 = scmp.lt.s32.totalorder %s14, 5
      %s2022 = scalar_select %p2021, %s14, 5
      %s2023 = smul.addr %s2022, 16
      %s2024 = smul.addr %s2023, 8
      %s2025 = scalar_lea.vmem %s3, %s2024
      // Predicated region
      $region33: #{encoder_forward.3} parent=31 // pred_check
        %p2026 = pneg %p100
      $region34: #{encoder_forward.3} parent=31 // pred_check_branch
        %2028 = sbr.rel (%p2026) target = $region36
      $region35: #{encoder_forward.3} parent=31 // pred_region
        _
      $region36: #{encoder_forward.3} parent=31 // pred_fallthru
        _
    $region32: #{encoder_forward.3} parent=5 // pred_fallthru
      _
    %p2029 = scmp.le.s32.totalorder 2, %s9
    // Predicated region
    $region37: #{encoder_forward.3} parent=5 // pred_check
      %p2030 = pneg %p2029
    $region38: #{encoder_forward.3} parent=5 // pred_check_branch
      %2032 = sbr.rel (%p2030) target = $region40
    $region39: #{encoder_forward.3} parent=5 // pred_region
      %s2033 = ssub.s32 %s9, 2
      // Predicated region
      $region41: #{encoder_forward.3} parent=39 // pred_check
        %p2034 = pneg %p106
      $region42: #{encoder_forward.3} parent=39 // pred_check_branch
        %2036 = sbr.rel (%p2034) target = $region44
      $region43: #{encoder_forward.3} parent=39 // pred_region
        %p2037 = scmp.lt.s32.totalorder %s15, 5
        %s2038 = scalar_select %p2037, %s15, 5
        %s2039 = smul.addr %s2038, 16
        %s2040 = smul.addr %s2039, 8
        %s2041 = scalar_lea.vmem %s3, %s2040
      $region44: #{encoder_forward.3} parent=39 // pred_fallthru
        _
    $region40: #{encoder_forward.3} parent=5 // pred_fallthru
      _
  $region6: #{encoder_forward.3} parent=0 // loop_footer
    %s13 = sadd.s32 1, %s9
  $region7: #{encoder_forward.3} parent=0 // loop_footer_branch
    %8 = sbr.rel target = $region3
  $region8: #{encoder_forward.3} parent=0 // loop_exit
    _

// kernel: encoder_forward.4
$region0: #{encoder_forward.4}
  #allocation0 [shape = 'u32[]', space=smem, size = 0x4, offset = 0x4, fixed_abs, tag = 'smem constant byte address 0x4 - core index']
  #allocation1 [shape = 'u32[144,128]{1,0:T(1,128)}', space=vmem, size = 0x12000, scoped, tag = 'internal scratch']
  %s0 = inlined_call_operand.vmem [shape: bf16[6,166,64], index: 0, kind: input, shape index: {}]
  %s1 = inlined_call_operand.vmem [shape: bf16[9,64,64], index: 1, kind: input, shape index: {}]
  %s2 = inlined_call_operand.vmem [shape: f32[1,64], index: 2, kind: input, shape index: {}]
  %s3 = inlined_call_operand.vmem [shape: f32[6,128,64], index: 3, kind: output, shape index: {}]
  %s4 = sld [smem:[#allocation0]]
  $region45: #{encoder_forward.4} parent=0
    _
  %s6 = ssub.s32 1, %s4
  %s7 = scalar_select 0, %s6, %s4
  loop: start=0, step=1, limit=8
  $region2: #{encoder_forward.4} parent=0 // loop_pre_header
    _
  $region3: #{encoder_forward.4} parent=0 // loop_header
    %s9 = sphi 0, %s13
    %p10 = scmp.ge.s32.totalorder %s9, 8
    %s19 = sphi 0, %s21
    %s22 = sphi 0, %s19
    %s23 = sphi 0, %s22
    %s39 = sphi 0, %s23
    %s43 = sphi 0, %s43
    %s45 = sphi 0, %s43
    %s46 = sphi 0, %s45
    %s60 = sphi 0, %s46
    %s64 = sphi 0, %s64
    %s66 = sphi 0, %s64
    %s67 = sphi 0, %s66
    %s81 = sphi 0, %s67
    %s87 = sphi 0, %s89
    %s90 = sphi 0, %s87
    %s91 = sphi 0, %s90
    %s107 = sphi 0, %s91
  $region4: #{encoder_forward.4} parent=0 // loop_header_branch
    %12 = sbr.rel (%p10) target = $region8
  $region5: #{encoder_forward.4} parent=0 // loop_body
    %s14 = ssub.s32 %s9, 1
    %s15 = ssub.s32 %s9, 2
    %s16 = sadd.s32 %s9, 1
    %s17 = ssub.s32 %s9, %s16
    %p18 = scmp.eq.s32.totalorder %s17, 0
    %s20 = sadd.s32 %s19, 1
    %s21 = scalar_select %p18, %s19, %s20
    %p24 = pneg %p18
    %p25 = scmp.eq.s32.totalorder %s9, 5
    %p26 = por %p24, %p25
    %p27 = scmp.ne.s32.totalorder %s19, %s22
    %p28 = scmp.eq.s32.totalorder %s9, 0
    %p29 = por %p27, %p28
    %p30 = scmp.ne.s32.totalorder %s19, %s22
    %p31 = scmp.eq.s32.totalorder %s14, 5
    %p32 = por %p30, %p31
    %p33 = scmp.ne.s32.totalorder %s22, %s23
    %p34 = scmp.eq.s32.totalorder %s14, 0
    %p35 = por %p33, %p34
    %p36 = scmp.ne.s32.totalorder %s22, %s23
    %p37 = scmp.eq.s32.totalorder %s15, 5
    %p38 = por %p36, %p37
    %p40 = scmp.ne.s32.totalorder %s23, %s39
    %p41 = scmp.eq.s32.totalorder %s15, 0
    %p42 = por %p40, %p41
    %s44 = sadd.s32 %s43, 1
    %p47 = scmp.eq.s32.totalorder %s9, 5
    %p48 = scmp.ne.s32.totalorder %s43, %s45
    %p49 = scmp.eq.s32.totalorder %s9, 0
    %p50 = por %p48, %p49
    %p51 = scmp.ne.s32.totalorder %s43, %s45
    %p52 = scmp.eq.s32.totalorder %s14, 5
    %p53 = por %p51, %p52
    %p54 = scmp.ne.s32.totalorder %s45, %s46
    %p55 = scmp.eq.s32.totalorder %s14, 0
    %p56 = por %p54, %p55
    %p57 = scmp.ne.s32.totalorder %s45, %s46
    %p58 = scmp.eq.s32.totalorder %s15, 5
    %p59 = por %p57, %p58
    %p61 = scmp.ne.s32.totalorder %s46, %s60
    %p62 = scmp.eq.s32.totalorder %s15, 0
    %p63 = por %p61, %p62
    %s65 = sadd.s32 %s64, 1
    %p68 = scmp.eq.s32.totalorder %s9, 5
    %p69 = scmp.ne.s32.totalorder %s64, %s66
    %p70 = scmp.eq.s32.totalorder %s9, 0
    %p71 = por %p69, %p70
    %p72 = scmp.ne.s32.totalorder %s64, %s66
    %p73 = scmp.eq.s32.totalorder %s14, 5
    %p74 = por %p72, %p73
    %p75 = scmp.ne.s32.totalorder %s66, %s67
    %p76 = scmp.eq.s32.totalorder %s14, 0
    %p77 = por %p75, %p76
    %p78 = scmp.ne.s32.totalorder %s66, %s67
    %p79 = scmp.eq.s32.totalorder %s15, 5
    %p80 = por %p78, %p79
    %p82 = scmp.ne.s32.totalorder %s67, %s81
    %p83 = scmp.eq.s32.totalorder %s15, 0
    %p84 = por %p82, %p83
    %s85 = ssub.s32 %s9, %s16
    %p86 = scmp.eq.s32.totalorder %s85, 0
    %s88 = sadd.s32 %s87, 1
    %s89 = scalar_select %p86, %s87, %s88
    %p92 = pneg %p86
    %p93 = scmp.eq.s32.totalorder %s9, 5
    %p94 = por %p92, %p93
    %p95 = scmp.ne.s32.totalorder %s87, %s90
    %p96 = scmp.eq.s32.totalorder %s9, 0
    %p97 = por %p95, %p96
    %p98 = scmp.ne.s32.totalorder %s87, %s90
    %p99 = scmp.eq.s32.totalorder %s14, 5
    %p100 = por %p98, %p99
    %p101 = scmp.ne.s32.totalorder %s90, %s91
    %p102 = scmp.eq.s32.totalorder %s14, 0
    %p103 = por %p101, %p102
    %p104 = scmp.ne.s32.totalorder %s90, %s91
    %p105 = scmp.eq.s32.totalorder %s15, 5
    %p106 = por %p104, %p105
    %p108 = scmp.ne.s32.totalorder %s91, %s107
    %p109 = scmp.eq.s32.totalorder %s15, 0
    %p110 = por %p108, %p109
    %p111 = scmp.le.s32.totalorder 1, %s9
    %p112 = scmp.lt.s32.totalorder %s9, 7
    %p113 = pnand %p111, %p112
    %p114 = pneg %p113
    // Predicated region
    $region9: #{encoder_forward.4} parent=5 // pred_check
      _
    $region10: #{encoder_forward.4} parent=5 // pred_check_branch
      %116 = sbr.rel (%p113) target = $region12
    $region11: #{encoder_forward.4} parent=5 // pred_region
      %s117 = ssub.s32 %s9, 1
      // Predicated region
      $region13: #{encoder_forward.4} parent=11 // pred_check
        %p118 = pneg %p56
      $region14: #{encoder_forward.4} parent=11 // pred_check_branch
        %120 = sbr.rel (%p118) target = $region16
      $region15: #{encoder_forward.4} parent=11 // pred_region
        _
      $region16: #{encoder_forward.4} parent=11 // pred_fallthru
        _
      // Predicated region
      $region17: #{encoder_forward.4} parent=11 // pred_check
        %p121 = pneg %p77
      $region18: #{encoder_forward.4} parent=11 // pred_check_branch
        %123 = sbr.rel (%p121) target = $region20
      $region19: #{encoder_forward.4} parent=11 // pred_region
        _
      $region20: #{encoder_forward.4} parent=11 // pred_fallthru
        _
    $region12: #{encoder_forward.4} parent=5 // pred_fallthru
      _
    %p124 = scmp.lt.s32.totalorder %s9, 6
    // Predicated region
    $region21: #{encoder_forward.4} parent=5 // pred_check
      %p125 = pneg %p124
    $region22: #{encoder_forward.4} parent=5 // pred_check_branch
      %127 = sbr.rel (%p125) target = $region24
    $region23: #{encoder_forward.4} parent=5 // pred_region
      // Predicated region
      $region25: #{encoder_forward.4} parent=23 // pred_check
        %p128 = pneg %p29
      $region26: #{encoder_forward.4} parent=23 // pred_check_branch
        %130 = sbr.rel (%p128) target = $region28
      $region27: #{encoder_forward.4} parent=23 // pred_region
        %p131 = scmp.lt.s32.totalorder %s9, 5
        %s132 = scalar_select %p131, %s9, 5
        %s133 = smul.addr %s132, 21
        %s134 = smul.addr %s133, 4
        %s135 = scalar_lea.vmem %s0, %s134
      $region28: #{encoder_forward.4} parent=23 // pred_fallthru
        _
    $region24: #{encoder_forward.4} parent=5 // pred_fallthru
      _
    %p136 = scmp.le.s32.totalorder 1, %s9
    %p137 = scmp.lt.s32.totalorder %s9, 7
    %p138 = pnand %p136, %p137
    %p139 = pneg %p138
    // Predicated region
    $region29: #{encoder_forward.4} parent=5 // pred_check
      _
    $region30: #{encoder_forward.4} parent=5 // pred_check_branch
      %141 = sbr.rel (%p138) target = $region32
    $region31: #{encoder_forward.4} parent=5 // pred_region
      %s142 = ssub.s32 %s9, 1
      %p143 = scmp.lt.s32.totalorder %s14, 5
      %s144 = scalar_select %p143, %s14, 5
      %s145 = smul.addr %s144, 21
      %s146 = smul.addr %s145, 4
      %s147 = scalar_lea.vmem %s0, %s146
      %p148 = pneg %p35
      %p149 = pneg %p32
      %p150 = pneg %p56
      %p151 = pneg %p53
      %p152 = pneg %p77
      %p153 = pneg %p74
      %p154 = pneg %p103
      %p155 = pneg %p100
      %p156 = scmp.lt.s32.totalorder %s14, 5
      %s157 = scalar_select %p156, %s14, 5
      %s158 = smul.addr %s157, 16
      %s159 = smul.addr %s158, 8
      %s160 = scalar_lea.vmem %s3, %s159
      %p161 = scmp.lt.s32.totalorder %s14, 5
      %s162 = scalar_select %p161, %s14, 5
      %s163 = smul.addr %s162, 21
      %s164 = smul.addr %s163, 4
      %s165 = scalar_lea.vmem %s0, %s164
      %p166 = scmp.lt.s32.totalorder %s14, 5
      %s167 = scalar_select %p166, %s14, 5
      %s168 = smul.addr %s167, 16
      %s169 = smul.addr %s168, 8
      %s170 = scalar_lea.vmem %s3, %s169
      %v172 = vld [vmem:[%s165] sm:$0xf]
      %v173 = vld [vmem:[%s165 + $0x4] sm:$0xf]
      %v174 = vld [vmem:[%s165 + $0x8] sm:$0xf]
      %v175 = vld [vmem:[%s165 + $0xc] sm:$0xf]
      %v176 = vld [vmem:[%s165 + $0x10] sm:$0xf]
      %v177 = vld [vmem:[%s165 + $0x14] sm:$0xf]
      %v178 = vld [vmem:[%s165 + $0x18] sm:$0xf]
      %v179 = vld [vmem:[%s165 + $0x1c] sm:$0xf]
      %v180 = vld [vmem:[%s165 + $0x20] sm:$0xf]
      %v181 = vld [vmem:[%s165 + $0x24] sm:$0xf]
      %v182 = vld [vmem:[%s165 + $0x28] sm:$0xf]
      %v183 = vld [vmem:[%s165 + $0x2c] sm:$0xf]
      %v184 = vld [vmem:[%s165 + $0x30] sm:$0xf]
      %v185 = vld [vmem:[%s165 + $0x34] sm:$0xf]
      %v186 = vld [vmem:[%s165 + $0x38] sm:$0xf]
      %v187 = vld [vmem:[%s165 + $0x3c] sm:$0xf]
      %v188 = vld [vmem:[%s1] sm:$0xf]
      %v189 = vld [vmem:[%s1 + $0x4] sm:$0xf]
      %v190 = vld [vmem:[%s1 + $0x8] sm:$0xf]
      %v191 = vld [vmem:[%s1 + $0xc] sm:$0xf]
      %v192 = vld [vmem:[%s1 + $0x10] sm:$0xf]
      %v193 = vld [vmem:[%s1 + $0x14] sm:$0xf]
      %v194 = vld [vmem:[%s1 + $0x18] sm:$0xf]
      %v195 = vld [vmem:[%s1 + $0x1c] sm:$0xf]
      %v196 = vld [vmem:[%s165 + $0x40] sm:$0x1]
      %s197 = scalar_lea.vmem %s1, 32
      %v198 = vld [vmem:[%s197] sm:$0xf]
      %v199 = vld [vmem:[%s197 + $0x4] sm:$0xf]
      %v200 = vld [vmem:[%s197 + $0x8] sm:$0xf]
      %v201 = vld [vmem:[%s197 + $0xc] sm:$0xf]
      %v202 = vld [vmem:[%s197 + $0x10] sm:$0xf]
      %v203 = vld [vmem:[%s197 + $0x14] sm:$0xf]
      %v204 = vld [vmem:[%s197 + $0x18] sm:$0xf]
      %v205 = vld [vmem:[%s197 + $0x1c] sm:$0xf]
      %v223 = vunpack.c.l.b16 %v172
      %v224 = vunpack.c.l.b16 %v173
      %v225 = vunpack.c.l.b16 %v174
      %v226 = vunpack.c.l.b16 %v175
      %v227 = vunpack.c.l.b16 %v176
      %v228 = vunpack.c.l.b16 %v177
      %v229 = vunpack.c.l.b16 %v178
      %v230 = vunpack.c.l.b16 %v179
      %v231 = vunpack.c.l.b16 %v180
      %v232 = vunpack.c.l.b16 %v181
      %v233 = vunpack.c.l.b16 %v182
      %v234 = vunpack.c.l.b16 %v183
      %v235 = vunpack.c.l.b16 %v184
      %v236 = vunpack.c.l.b16 %v185
      %v237 = vunpack.c.l.b16 %v186
      %v238 = vunpack.c.l.b16 %v187
      %v239 = vunpack.c.l.b16 %v196
      %v240 = vpack.c.b16 %v224, %v223
      %v241 = vpack.c.b16 %v226, %v225
      %v242 = vpack.c.b16 %v228, %v227
      %v243 = vpack.c.b16 %v230, %v229
      %v244 = vpack.c.b16 %v232, %v231
      %v245 = vpack.c.b16 %v234, %v233
      %v246 = vpack.c.b16 %v236, %v235
      %v247 = vpack.c.b16 %v238, %v237
      %v248 = vpack.c.b16 %v239, %v239
      %vm249 = vsmask.f32 7424
      %v251 = vshrl.u32 %v240, 16
      %v253 = vshll.u32 %v240, 16
      %v255 = vrot.slane %v253, 1
      %v256 = vor.u32 %v251, %v255
      %v258 = vshll.u32 %v241, 16
      %v260 = vrot.slane %v258, 1
      %v261 = vsel %vm249, %v256, %v260
      %v262 = vshrl.u32 %v241, 16
      %v264 = vor.u32 %v262, %v260
      %v266 = vshll.u32 %v242, 16
      %v268 = vrot.slane %v266, 1
      %v269 = vsel %vm249, %v264, %v268
      %v270 = vshrl.u32 %v242, 16
      %v272 = vor.u32 %v270, %v268
      %v274 = vshll.u32 %v243, 16
      %v276 = vrot.slane %v274, 1
      %v277 = vsel %vm249, %v272, %v276
      %v278 = vshrl.u32 %v243, 16
      %v280 = vor.u32 %v278, %v276
      %v282 = vshll.u32 %v244, 16
      %v284 = vrot.slane %v282, 1
      %v285 = vsel %vm249, %v280, %v284
      %v286 = vshrl.u32 %v244, 16
      %v288 = vor.u32 %v286, %v284
      %v290 = vshll.u32 %v245, 16
      %v292 = vrot.slane %v290, 1
      %v293 = vsel %vm249, %v288, %v292
      %v294 = vshrl.u32 %v245, 16
      %v296 = vor.u32 %v294, %v292
      %v298 = vshll.u32 %v246, 16
      %v300 = vrot.slane %v298, 1
      %v301 = vsel %vm249, %v296, %v300
      %v302 = vshrl.u32 %v246, 16
      %v304 = vor.u32 %v302, %v300
      %v306 = vshll.u32 %v247, 16
      %v308 = vrot.slane %v306, 1
      %v309 = vsel %vm249, %v304, %v308
      %v310 = vshrl.u32 %v247, 16
      %v312 = vor.u32 %v310, %v308
      %v314 = vshll.u32 %v248, 16
      %v316 = vrot.slane %v314, 1
      %v317 = vsel %vm249, %v312, %v316
      %v326 = vunpack.c.l.b16 %v198
      %v327 = vunpack.c.l.b16 %v199
      %v328 = vunpack.c.l.b16 %v200
      %v329 = vunpack.c.l.b16 %v201
      %v330 = vunpack.c.l.b16 %v202
      %v331 = vunpack.c.l.b16 %v203
      %v332 = vunpack.c.l.b16 %v204
      %v333 = vunpack.c.l.b16 %v205
      %v334 = vpack.c.b16 %v327, %v326
      %v335 = vpack.c.b16 %v329, %v328
      %v336 = vpack.c.b16 %v331, %v330
      %v337 = vpack.c.b16 %v333, %v332
      %vm342 = vcmask 523264
      %v344 = vsel %vm342, %v261, 0
      %v347 = vsel %vm342, %v269, 0
      %v350 = vsel %vm342, %v277, 0
      %v353 = vsel %vm342, %v285, 0
      %v356 = vsel %vm342, %v293, 0
      %v359 = vsel %vm342, %v301, 0
      %v362 = vsel %vm342, %v309, 0
      %v365 = vsel %vm342, %v317, 0
      %367 = vmatprep.subr.bf16.mxu0 0
      %368 = vmatpush1.bf16.msra.mxu0 %v334
      %369 = vmatprep.subr.bf16.mxu0 0
      %370 = vmatpush1.bf16.msra.mxu0 %v335
      %371 = vmatprep.subr.bf16.mxu0 0
      %372 = vmatpush1.bf16.msra.mxu0 %v336
      %373 = vmatprep.subr.bf16.mxu0 0
      %374 = vmatpush1.bf16.msra.mxu0 %v337
      %375 = vmatprep.subr.bf16.mxu0 0
      %376 = vmatpush1.bf16.msra.mxu0 0
      %377 = vmatprep.subr.bf16.mxu0 0
      %378 = vmatpush1.bf16.msra.mxu0 0
      %379 = vmatprep.subr.bf16.mxu0 0
      %380 = vmatpush1.bf16.msra.mxu0 0
      %381 = vmatprep.subr.bf16.mxu0 0
      %382 = vmatpush1.bf16.msra.mxu0 0
      %383 = vmatprep.subr.bf16.mxu0 0
      %384 = vmatpush1.bf16.msra.mxu0 0
      %385 = vmatprep.subr.bf16.mxu0 0
      %386 = vmatpush1.bf16.msra.mxu0 0
      %387 = vmatprep.subr.bf16.mxu0 0
      %388 = vmatpush1.bf16.msra.mxu0 0
      %389 = vmatprep.subr.bf16.mxu0 0
      %390 = vmatpush1.bf16.msra.mxu0 0
      %391 = vmatprep.subr.bf16.mxu0 0
      %392 = vmatpush1.bf16.msra.mxu0 0
      %393 = vmatprep.subr.bf16.mxu0 0
      %394 = vmatpush1.bf16.msra.mxu0 0
      %395 = vmatprep.subr.bf16.mxu0 0
      %396 = vmatpush1.bf16.msra.mxu0 0
      %397 = vmatprep.subr.bf16.mxu0 0
      %398 = vmatpush1.bf16.msra.mxu0 0
      %399 = vmatprep.mubr.bf16.mxu0 0
      %400 = vmatmul.mubr.bf16.gmra.mrb[0].mxu0 %v344
      %v401 = vpop.f32.mrb[0].mxu0
      %v402 = vadd.f32 0.0, %v401
      %v403 = vpop.f32.mrb[0].mxu0
      %v404 = vpop.f32.mrb[0].mxu0
      %v405 = vadd.f32 0.0, %v404
      %v406 = vpop.f32.mrb[0].mxu0
      %407 = vmatprep.mubr.bf16.mxu0 0
      %408 = vmatmul.mubr.bf16.gmra.mrb[0].mxu0 %v347
      %v409 = vpop.f32.mrb[0].mxu0
      %v410 = vadd.f32 0.0, %v409
      %v411 = vpop.f32.mrb[0].mxu0
      %v412 = vpop.f32.mrb[0].mxu0
      %v413 = vadd.f32 0.0, %v412
      %v414 = vpop.f32.mrb[0].mxu0
      %415 = vmatprep.mubr.bf16.mxu0 0
      %416 = vmatmul.mubr.bf16.gmra.mrb[0].mxu0 %v350
      %v417 = vpop.f32.mrb[0].mxu0
      %v418 = vadd.f32 0.0, %v417
      %v419 = vpop.f32.mrb[0].mxu0
      %v420 = vpop.f32.mrb[0].mxu0
      %v421 = vadd.f32 0.0, %v420
      %v422 = vpop.f32.mrb[0].mxu0
      %423 = vmatprep.mubr.bf16.mxu0 0
      %424 = vmatmul.mubr.bf16.gmra.mrb[0].mxu0 %v353
      %v425 = vpop.f32.mrb[0].mxu0
      %v426 = vadd.f32 0.0, %v425
      %v427 = vpop.f32.mrb[0].mxu0
      %v428 = vpop.f32.mrb[0].mxu0
      %v429 = vadd.f32 0.0, %v428
      %v430 = vpop.f32.mrb[0].mxu0
      %431 = vmatprep.mubr.bf16.mxu0 0
      %432 = vmatmul.mubr.bf16.gmra.mrb[0].mxu0 %v356
      %v433 = vpop.f32.mrb[0].mxu0
      %v434 = vadd.f32 0.0, %v433
      %v435 = vpop.f32.mrb[0].mxu0
      %v436 = vpop.f32.mrb[0].mxu0
      %v437 = vadd.f32 0.0, %v436
      %v438 = vpop.f32.mrb[0].mxu0
      %439 = vmatprep.mubr.bf16.mxu0 0
      %440 = vmatmul.mubr.bf16.gmra.mrb[0].mxu0 %v359
      %v441 = vpop.f32.mrb[0].mxu0
      %v442 = vadd.f32 0.0, %v441
      %v443 = vpop.f32.mrb[0].mxu0
      %v444 = vpop.f32.mrb[0].mxu0
      %v445 = vadd.f32 0.0, %v444
      %v446 = vpop.f32.mrb[0].mxu0
      %447 = vmatprep.mubr.bf16.mxu0 0
      %448 = vmatmul.mubr.bf16.gmra.mrb[0].mxu0 %v362
      %v449 = vpop.f32.mrb[0].mxu0
      %v450 = vadd.f32 0.0, %v449
      %v451 = vpop.f32.mrb[0].mxu0
      %v452 = vpop.f32.mrb[0].mxu0
      %v453 = vadd.f32 0.0, %v452
      %v454 = vpop.f32.mrb[0].mxu0
      %455 = vmatprep.mubr.bf16.mxu0 0
      %456 = vmatmul.mubr.bf16.gmra.mrb[0].mxu0 %v365
      %v457 = vpop.f32.mrb[0].mxu0
      %v458 = vadd.f32 0.0, %v457
      %v459 = vpop.f32.mrb[0].mxu0
      %v460 = vpop.f32.mrb[0].mxu0
      %v461 = vadd.f32 0.0, %v460
      %v462 = vpop.f32.mrb[0].mxu0
      %463 = vdwg.mxu0
      %v472 = vunpack.c.l.b16 %v188
      %v473 = vunpack.c.l.b16 %v189
      %v474 = vunpack.c.l.b16 %v190
      %v475 = vunpack.c.l.b16 %v191
      %v476 = vunpack.c.l.b16 %v192
      %v477 = vunpack.c.l.b16 %v193
      %v478 = vunpack.c.l.b16 %v194
      %v479 = vunpack.c.l.b16 %v195
      %v480 = vpack.c.b16 %v473, %v472
      %v481 = vpack.c.b16 %v475, %v474
      %v482 = vpack.c.b16 %v477, %v476
      %v483 = vpack.c.b16 %v479, %v478
      %v488 = vsel %vm342, %v240, 0
      %v490 = vsel %vm342, %v241, 0
      %v492 = vsel %vm342, %v242, 0
      %v494 = vsel %vm342, %v243, 0
      %v496 = vsel %vm342, %v244, 0
      %v498 = vsel %vm342, %v245, 0
      %v500 = vsel %vm342, %v246, 0
      %v502 = vsel %vm342, %v247, 0
      %504 = vmatprep.subr.bf16.mxu0 0
      %505 = vmatpush1.bf16.msra.mxu0 %v480
      %506 = vmatprep.subr.bf16.mxu0 0
      %507 = vmatpush1.bf16.msra.mxu0 %v481
      %508 = vmatprep.subr.bf16.mxu0 0
      %509 = vmatpush1.bf16.msra.mxu0 %v482
      %510 = vmatprep.subr.bf16.mxu0 0
      %511 = vmatpush1.bf16.msra.mxu0 %v483
      %512 = vmatprep.subr.bf16.mxu0 0
      %513 = vmatpush1.bf16.msra.mxu0 0
      %514 = vmatprep.subr.bf16.mxu0 0
      %515 = vmatpush1.bf16.msra.mxu0 0
      %516 = vmatprep.subr.bf16.mxu0 0
      %517 = vmatpush1.bf16.msra.mxu0 0
      %518 = vmatprep.subr.bf16.mxu0 0
      %519 = vmatpush1.bf16.msra.mxu0 0
      %520 = vmatprep.subr.bf16.mxu0 0
      %521 = vmatpush1.bf16.msra.mxu0 0
      %522 = vmatprep.subr.bf16.mxu0 0
      %523 = vmatpush1.bf16.msra.mxu0 0
      %524 = vmatprep.subr.bf16.mxu0 0
      %525 = vmatpush1.bf16.msra.mxu0 0
      %526 = vmatprep.subr.bf16.mxu0 0
      %527 = vmatpush1.bf16.msra.mxu0 0
      %528 = vmatprep.subr.bf16.mxu0 0
      %529 = vmatpush1.bf16.msra.mxu0 0
      %530 = vmatprep.subr.bf16.mxu0 0
      %531 = vmatpush1.bf16.msra.mxu0 0
      %532 = vmatprep.subr.bf16.mxu0 0
      %533 = vmatpush1.bf16.msra.mxu0 0
      %534 = vmatprep.subr.bf16.mxu0 0
      %535 = vmatpush1.bf16.msra.mxu0 0
      %536 = vmatprep.mubr.bf16.mxu0 0
      %537 = vmatmul.mubr.bf16.gmra.mrb[0].mxu0 %v488
      %v538 = vpop.f32.mrb[0].mxu0
      %v539 = vadd.f32 %v402, %v538
      %v540 = vpop.f32.mrb[0].mxu0
      %v541 = vpop.f32.mrb[0].mxu0
      %v542 = vadd.f32 %v405, %v541
      %v543 = vpop.f32.mrb[0].mxu0
      %544 = vmatprep.mubr.bf16.mxu0 0
      %545 = vmatmul.mubr.bf16.gmra.mrb[0].mxu0 %v490
      %v546 = vpop.f32.mrb[0].mxu0
      %v547 = vadd.f32 %v410, %v546
      %v548 = vpop.f32.mrb[0].mxu0
      %v549 = vpop.f32.mrb[0].mxu0
      %v550 = vadd.f32 %v413, %v549
      %v551 = vpop.f32.mrb[0].mxu0
      %552 = vmatprep.mubr.bf16.mxu0 0
      %553 = vmatmul.mubr.bf16.gmra.mrb[0].mxu0 %v492
      %v554 = vpop.f32.mrb[0].mxu0
      %v555 = vadd.f32 %v418, %v554
      %v556 = vpop.f32.mrb[0].mxu0
      %v557 = vpop.f32.mrb[0].mxu0
      %v558 = vadd.f32 %v421, %v557
      %v559 = vpop.f32.mrb[0].mxu0
      %560 = vmatprep.mubr.bf16.mxu0 0
      %561 = vmatmul.mubr.bf16.gmra.mrb[0].mxu0 %v494
      %v562 = vpop.f32.mrb[0].mxu0
      %v563 = vadd.f32 %v426, %v562
      %v564 = vpop.f32.mrb[0].mxu0
      %v565 = vpop.f32.mrb[0].mxu0
      %v566 = vadd.f32 %v429, %v565
      %v567 = vpop.f32.mrb[0].mxu0
      %568 = vmatprep.mubr.bf16.mxu0 0
      %569 = vmatmul.mubr.bf16.gmra.mrb[0].mxu0 %v496
      %v570 = vpop.f32.mrb[0].mxu0
      %v571 = vadd.f32 %v434, %v570
      %v572 = vpop.f32.mrb[0].mxu0
      %v573 = vpop.f32.mrb[0].mxu0
      %v574 = vadd.f32 %v437, %v573
      %v575 = vpop.f32.mrb[0].mxu0
      %576 = vmatprep.mubr.bf16.mxu0 0
      %577 = vmatmul.mubr.bf16.gmra.mrb[0].mxu0 %v498
      %v578 = vpop.f32.mrb[0].mxu0
      %v579 = vadd.f32 %v442, %v578
      %v580 = vpop.f32.mrb[0].mxu0
      %v581 = vpop.f32.mrb[0].mxu0
      %v582 = vadd.f32 %v445, %v581
      %v583 = vpop.f32.mrb[0].mxu0
      %584 = vmatprep.mubr.bf16.mxu0 0
      %585 = vmatmul.mubr.bf16.gmra.mrb[0].mxu0 %v500
      %v586 = vpop.f32.mrb[0].mxu0
      %v587 = vadd.f32 %v450, %v586
      %v588 = vpop.f32.mrb[0].mxu0
      %v589 = vpop.f32.mrb[0].mxu0
      %v590 = vadd.f32 %v453, %v589
      %v591 = vpop.f32.mrb[0].mxu0
      %592 = vmatprep.mubr.bf16.mxu0 0
      %593 = vmatmul.mubr.bf16.gmra.mrb[0].mxu0 %v502
      %v594 = vpop.f32.mrb[0].mxu0
      %v595 = vadd.f32 %v458, %v594
      %v596 = vpop.f32.mrb[0].mxu0
      %v597 = vpop.f32.mrb[0].mxu0
      %v598 = vadd.f32 %v461, %v597
      %v599 = vpop.f32.mrb[0].mxu0
      %600 = vdwg.mxu0
      %v601 = vld [vmem:[%s165] sm:$0xe]
      %s602 = scalar_lea.vmem %s1, 64
      %v603 = vld [vmem:[%s602] sm:$0xf]
      %v604 = vld [vmem:[%s602 + $0x4] sm:$0xf]
      %v605 = vld [vmem:[%s602 + $0x8] sm:$0xf]
      %v606 = vld [vmem:[%s602 + $0xc] sm:$0xf]
      %v607 = vld [vmem:[%s602 + $0x10] sm:$0xf]
      %v608 = vld [vmem:[%s602 + $0x14] sm:$0xf]
      %v609 = vld [vmem:[%s602 + $0x18] sm:$0xf]
      %v610 = vld [vmem:[%s602 + $0x1c] sm:$0xf]
      %v612 = vunpack.c.l.b16 %v601
      %v613 = vpack.c.b16 %v224, %v612
      %vm614 = vcmask 1046528
      %v615 = vrot.slane %v613, 1
      %v616 = vrot.slane %v241, 1
      %v617 = vsel %vm614, %v615, %v616
      %v618 = vrot.slane %v242, 1
      %v619 = vsel %vm614, %v616, %v618
      %v620 = vrot.slane %v243, 1
      %v621 = vsel %vm614, %v618, %v620
      %v622 = vrot.slane %v244, 1
      %v623 = vsel %vm614, %v620, %v622
      %v624 = vrot.slane %v245, 1
      %v625 = vsel %vm614, %v622, %v624
      %v626 = vrot.slane %v246, 1
      %v627 = vsel %vm614, %v624, %v626
      %v628 = vrot.slane %v247, 1
      %v629 = vsel %vm614, %v626, %v628
      %v630 = vrot.slane %v248, 1
      %v631 = vsel %vm614, %v628, %v630
      %v640 = vunpack.c.l.b16 %v603
      %v641 = vunpack.c.l.b16 %v604
      %v642 = vunpack.c.l.b16 %v605
      %v643 = vunpack.c.l.b16 %v606
      %v644 = vunpack.c.l.b16 %v607
      %v645 = vunpack.c.l.b16 %v608
      %v646 = vunpack.c.l.b16 %v609
      %v647 = vunpack.c.l.b16 %v610
      %v648 = vpack.c.b16 %v641, %v640
      %v649 = vpack.c.b16 %v643, %v642
      %v650 = vpack.c.b16 %v645, %v644
      %v651 = vpack.c.b16 %v647, %v646
      %v657 = vsel %vm342, %v617, 0
      %v660 = vsel %vm342, %v619, 0
      %v663 = vsel %vm342, %v621, 0
      %v666 = vsel %vm342, %v623, 0
      %v669 = vsel %vm342, %v625, 0
      %v672 = vsel %vm342, %v627, 0
      %v675 = vsel %vm342, %v629, 0
      %v678 = vsel %vm342, %v631, 0
      %680 = vmatprep.subr.bf16.mxu0 0
      %681 = vmatpush1.bf16.msra.mxu0 %v648
      %682 = vmatprep.subr.bf16.mxu0 0
      %683 = vmatpush1.bf16.msra.mxu0 %v649
      %684 = vmatprep.subr.bf16.mxu0 0
      %685 = vmatpush1.bf16.msra.mxu0 %v650
      %686 = vmatprep.subr.bf16.mxu0 0
      %687 = vmatpush1.bf16.msra.mxu0 %v651
      %688 = vmatprep.subr.bf16.mxu0 0
      %689 = vmatpush1.bf16.msra.mxu0 0
      %690 = vmatprep.subr.bf16.mxu0 0
      %691 = vmatpush1.bf16.msra.mxu0 0
      %692 = vmatprep.subr.bf16.mxu0 0
      %693 = vmatpush1.bf16.msra.mxu0 0
      %694 = vmatprep.subr.bf16.mxu0 0
      %695 = vmatpush1.bf16.msra.mxu0 0
      %696 = vmatprep.subr.bf16.mxu0 0
      %697 = vmatpush1.bf16.msra.mxu0 0
      %698 = vmatprep.subr.bf16.mxu0 0
      %699 = vmatpush1.bf16.msra.mxu0 0
      %700 = vmatprep.subr.bf16.mxu0 0
      %701 = vmatpush1.bf16.msra.mxu0 0
      %702 = vmatprep.subr.bf16.mxu0 0
      %703 = vmatpush1.bf16.msra.mxu0 0
      %704 = vmatprep.subr.bf16.mxu0 0
      %705 = vmatpush1.bf16.msra.mxu0 0
      %706 = vmatprep.subr.bf16.mxu0 0
      %707 = vmatpush1.bf16.msra.mxu0 0
      %708 = vmatprep.subr.bf16.mxu0 0
      %709 = vmatpush1.bf16.msra.mxu0 0
      %710 = vmatprep.subr.bf16.mxu0 0
      %711 = vmatpush1.bf16.msra.mxu0 0
      %712 = vmatprep.mubr.bf16.mxu0 0
      %713 = vmatmul.mubr.bf16.gmra.mrb[0].mxu0 %v657
      %v714 = vpop.f32.mrb[0].mxu0
      %v715 = vadd.f32 0.0, %v714
      %v716 = vpop.f32.mrb[0].mxu0
      %v717 = vpop.f32.mrb[0].mxu0
      %v718 = vadd.f32 0.0, %v717
      %v719 = vpop.f32.mrb[0].mxu0
      %720 = vmatprep.mubr.bf16.mxu0 0
      %721 = vmatmul.mubr.bf16.gmra.mrb[0].mxu0 %v660
      %v722 = vpop.f32.mrb[0].mxu0
      %v723 = vadd.f32 0.0, %v722
      %v724 = vpop.f32.mrb[0].mxu0
      %v725 = vpop.f32.mrb[0].mxu0
      %v726 = vadd.f32 0.0, %v725
      %v727 = vpop.f32.mrb[0].mxu0
      %728 = vmatprep.mubr.bf16.mxu0 0
      %729 = vmatmul.mubr.bf16.gmra.mrb[0].mxu0 %v663
      %v730 = vpop.f32.mrb[0].mxu0
      %v731 = vadd.f32 0.0, %v730
      %v732 = vpop.f32.mrb[0].mxu0
      %v733 = vpop.f32.mrb[0].mxu0
      %v734 = vadd.f32 0.0, %v733
      %v735 = vpop.f32.mrb[0].mxu0
      %736 = vmatprep.mubr.bf16.mxu0 0
      %737 = vmatmul.mubr.bf16.gmra.mrb[0].mxu0 %v666
      %v738 = vpop.f32.mrb[0].mxu0
      %v739 = vadd.f32 0.0, %v738
      %v740 = vpop.f32.mrb[0].mxu0
      %v741 = vpop.f32.mrb[0].mxu0
      %v742 = vadd.f32 0.0, %v741
      %v743 = vpop.f32.mrb[0].mxu0
      %744 = vmatprep.mubr.bf16.mxu0 0
      %745 = vmatmul.mubr.bf16.gmra.mrb[0].mxu0 %v669
      %v746 = vpop.f32.mrb[0].mxu0
      %v747 = vadd.f32 0.0, %v746
      %v748 = vpop.f32.mrb[0].mxu0
      %v749 = vpop.f32.mrb[0].mxu0
      %v750 = vadd.f32 0.0, %v749
      %v751 = vpop.f32.mrb[0].mxu0
      %752 = vmatprep.mubr.bf16.mxu0 0
      %753 = vmatmul.mubr.bf16.gmra.mrb[0].mxu0 %v672
      %v754 = vpop.f32.mrb[0].mxu0
      %v755 = vadd.f32 0.0, %v754
      %v756 = vpop.f32.mrb[0].mxu0
      %v757 = vpop.f32.mrb[0].mxu0
      %v758 = vadd.f32 0.0, %v757
      %v759 = vpop.f32.mrb[0].mxu0
      %760 = vmatprep.mubr.bf16.mxu0 0
      %761 = vmatmul.mubr.bf16.gmra.mrb[0].mxu0 %v675
      %v762 = vpop.f32.mrb[0].mxu0
      %v763 = vadd.f32 0.0, %v762
      %v764 = vpop.f32.mrb[0].mxu0
      %v765 = vpop.f32.mrb[0].mxu0
      %v766 = vadd.f32 0.0, %v765
      %v767 = vpop.f32.mrb[0].mxu0
      %768 = vmatprep.mubr.bf16.mxu0 0
      %769 = vmatmul.mubr.bf16.gmra.mrb[0].mxu0 %v678
      %v770 = vpop.f32.mrb[0].mxu0
      %v771 = vadd.f32 0.0, %v770
      %v772 = vpop.f32.mrb[0].mxu0
      %v773 = vpop.f32.mrb[0].mxu0
      %v774 = vadd.f32 0.0, %v773
      %v775 = vpop.f32.mrb[0].mxu0
      %776 = vdwg.mxu0
      %v777 = vadd.f32 %v539, %v715
      %v778 = vadd.f32 %v542, %v718
      %v779 = vadd.f32 %v547, %v723
      %v780 = vadd.f32 %v550, %v726
      %v781 = vadd.f32 %v555, %v731
      %v782 = vadd.f32 %v558, %v734
      %v783 = vadd.f32 %v563, %v739
      %v784 = vadd.f32 %v566, %v742
      %v785 = vadd.f32 %v571, %v747
      %v786 = vadd.f32 %v574, %v750
      %v787 = vadd.f32 %v579, %v755
      %v788 = vadd.f32 %v582, %v758
      %v789 = vadd.f32 %v587, %v763
      %v790 = vadd.f32 %v590, %v766
      %v791 = vadd.f32 %v595, %v771
      %v792 = vadd.f32 %v598, %v774
      %v793 = vld [vmem:[%s165 + $0x8] sm:$0xe]
      %v794 = vld [vmem:[%s165 + $0xc] sm:$0xf]
      %v795 = vld [vmem:[%s165 + $0x10] sm:$0xf]
      %v796 = vld [vmem:[%s165 + $0x14] sm:$0xf]
      %v797 = vld [vmem:[%s165 + $0x18] sm:$0xf]
      %v798 = vld [vmem:[%s165 + $0x1c] sm:$0xf]
      %v799 = vld [vmem:[%s165 + $0x20] sm:$0xf]
      %v800 = vld [vmem:[%s165 + $0x24] sm:$0xf]
      %v801 = vld [vmem:[%s165 + $0x28] sm:$0xf]
      %v802 = vld [vmem:[%s165 + $0x2c] sm:$0xf]
      %v803 = vld [vmem:[%s165 + $0x30] sm:$0xf]
      %v804 = vld [vmem:[%s165 + $0x34] sm:$0xf]
      %v805 = vld [vmem:[%s165 + $0x38] sm:$0xf]
      %v806 = vld [vmem:[%s165 + $0x3c] sm:$0xf]
      %v807 = vld [vmem:[%s165 + $0x40] sm:$0xf]
      %v808 = vld [vmem:[%s165 + $0x44] sm:$0xf]
      %v809 = vld [vmem:[%s165 + $0x48] sm:$0x1]
      %s810 = scalar_lea.vmem %s1, 96
      %v811 = vld [vmem:[%s810] sm:$0xf]
      %v812 = vld [vmem:[%s810 + $0x4] sm:$0xf]
      %v813 = vld [vmem:[%s810 + $0x8] sm:$0xf]
      %v814 = vld [vmem:[%s810 + $0xc] sm:$0xf]
      %v815 = vld [vmem:[%s810 + $0x10] sm:$0xf]
      %v816 = vld [vmem:[%s810 + $0x14] sm:$0xf]
      %v817 = vld [vmem:[%s810 + $0x18] sm:$0xf]
      %v818 = vld [vmem:[%s810 + $0x1c] sm:$0xf]
      %v836 = vunpack.c.l.b16 %v793
      %v837 = vunpack.c.l.b16 %v794
      %v838 = vunpack.c.l.b16 %v795
      %v839 = vunpack.c.l.b16 %v796
      %v840 = vunpack.c.l.b16 %v797
      %v841 = vunpack.c.l.b16 %v798
      %v842 = vunpack.c.l.b16 %v799
      %v843 = vunpack.c.l.b16 %v800
      %v844 = vunpack.c.l.b16 %v801
      %v845 = vunpack.c.l.b16 %v802
      %v846 = vunpack.c.l.b16 %v803
      %v847 = vunpack.c.l.b16 %v804
      %v848 = vunpack.c.l.b16 %v805
      %v849 = vunpack.c.l.b16 %v806
      %v850 = vunpack.c.l.b16 %v807
      %v851 = vunpack.c.l.b16 %v808
      %v852 = vunpack.c.l.b16 %v809
      %v853 = vpack.c.b16 %v837, %v836
      %v854 = vpack.c.b16 %v839, %v838
      %v855 = vpack.c.b16 %v841, %v840
      %v856 = vpack.c.b16 %v843, %v842
      %v857 = vpack.c.b16 %v845, %v844
      %v858 = vpack.c.b16 %v847, %v846
      %v859 = vpack.c.b16 %v849, %v848
      %v860 = vpack.c.b16 %v851, %v850
      %v861 = vpack.c.b16 %v852, %v852
      %v862 = vrot.slane %v853, 1
      %v863 = vrot.slane %v854, 1
      %v864 = vsel %vm614, %v862, %v863
      %v865 = vrot.slane %v855, 1
      %v866 = vsel %vm614, %v863, %v865
      %v867 = vrot.slane %v856, 1
      %v868 = vsel %vm614, %v865, %v867
      %v869 = vrot.slane %v857, 1
      %v870 = vsel %vm614, %v867, %v869
      %v871 = vrot.slane %v858, 1
      %v872 = vsel %vm614, %v869, %v871
      %v873 = vrot.slane %v859, 1
      %v874 = vsel %vm614, %v871, %v873
      %v875 = vrot.slane %v860, 1
      %v876 = vsel %vm614, %v873, %v875
      %v877 = vrot.slane %v861, 1
      %v878 = vsel %vm614, %v875, %v877
      %v887 = vunpack.c.l.b16 %v811
      %v888 = vunpack.c.l.b16 %v812
      %v889 = vunpack.c.l.b16 %v813
      %v890 = vunpack.c.l.b16 %v814
      %v891 = vunpack.c.l.b16 %v815
      %v892 = vunpack.c.l.b16 %v816
      %v893 = vunpack.c.l.b16 %v817
      %v894 = vunpack.c.l.b16 %v818
      %v895 = vpack.c.b16 %v888, %v887
      %v896 = vpack.c.b16 %v890, %v889
      %v897 = vpack.c.b16 %v892, %v891
      %v898 = vpack.c.b16 %v894, %v893
      %v904 = vsel %vm342, %v864, 0
      %v907 = vsel %vm342, %v866, 0
      %v910 = vsel %vm342, %v868, 0
      %v913 = vsel %vm342, %v870, 0
      %v916 = vsel %vm342, %v872, 0
      %v919 = vsel %vm342, %v874, 0
      %v922 = vsel %vm342, %v876, 0
      %v925 = vsel %vm342, %v878, 0
      %927 = vmatprep.subr.bf16.mxu0 0
      %928 = vmatpush1.bf16.msra.mxu0 %v895
      %929 = vmatprep.subr.bf16.mxu0 0
      %930 = vmatpush1.bf16.msra.mxu0 %v896
      %931 = vmatprep.subr.bf16.mxu0 0
      %932 = vmatpush1.bf16.msra.mxu0 %v897
      %933 = vmatprep.subr.bf16.mxu0 0
      %934 = vmatpush1.bf16.msra.mxu0 %v898
      %935 = vmatprep.subr.bf16.mxu0 0
      %936 = vmatpush1.bf16.msra.mxu0 0
      %937 = vmatprep.subr.bf16.mxu0 0
      %938 = vmatpush1.bf16.msra.mxu0 0
      %939 = vmatprep.subr.bf16.mxu0 0
      %940 = vmatpush1.bf16.msra.mxu0 0
      %941 = vmatprep.subr.bf16.mxu0 0
      %942 = vmatpush1.bf16.msra.mxu0 0
      %943 = vmatprep.subr.bf16.mxu0 0
      %944 = vmatpush1.bf16.msra.mxu0 0
      %945 = vmatprep.subr.bf16.mxu0 0
      %946 = vmatpush1.bf16.msra.mxu0 0
      %947 = vmatprep.subr.bf16.mxu0 0
      %948 = vmatpush1.bf16.msra.mxu0 0
      %949 = vmatprep.subr.bf16.mxu0 0
      %950 = vmatpush1.bf16.msra.mxu0 0
      %951 = vmatprep.subr.bf16.mxu0 0
      %952 = vmatpush1.bf16.msra.mxu0 0
      %953 = vmatprep.subr.bf16.mxu0 0
      %954 = vmatpush1.bf16.msra.mxu0 0
      %955 = vmatprep.subr.bf16.mxu0 0
      %956 = vmatpush1.bf16.msra.mxu0 0
      %957 = vmatprep.subr.bf16.mxu0 0
      %958 = vmatpush1.bf16.msra.mxu0 0
      %959 = vmatprep.mubr.bf16.mxu0 0
      %960 = vmatmul.mubr.bf16.gmra.mrb[0].mxu0 %v904
      %v961 = vpop.f32.mrb[0].mxu0
      %v962 = vadd.f32 0.0, %v961
      %v963 = vpop.f32.mrb[0].mxu0
      %v964 = vpop.f32.mrb[0].mxu0
      %v965 = vadd.f32 0.0, %v964
      %v966 = vpop.f32.mrb[0].mxu0
      %967 = vmatprep.mubr.bf16.mxu0 0
      %968 = vmatmul.mubr.bf16.gmra.mrb[0].mxu0 %v907
      %v969 = vpop.f32.mrb[0].mxu0
      %v970 = vadd.f32 0.0, %v969
      %v971 = vpop.f32.mrb[0].mxu0
      %v972 = vpop.f32.mrb[0].mxu0
      %v973 = vadd.f32 0.0, %v972
      %v974 = vpop.f32.mrb[0].mxu0
      %975 = vmatprep.mubr.bf16.mxu0 0
      %976 = vmatmul.mubr.bf16.gmra.mrb[0].mxu0 %v910
      %v977 = vpop.f32.mrb[0].mxu0
      %v978 = vadd.f32 0.0, %v977
      %v979 = vpop.f32.mrb[0].mxu0
      %v980 = vpop.f32.mrb[0].mxu0
      %v981 = vadd.f32 0.0, %v980
      %v982 = vpop.f32.mrb[0].mxu0
      %983 = vmatprep.mubr.bf16.mxu0 0
      %984 = vmatmul.mubr.bf16.gmra.mrb[0].mxu0 %v913
      %v985 = vpop.f32.mrb[0].mxu0
      %v986 = vadd.f32 0.0, %v985
      %v987 = vpop.f32.mrb[0].mxu0
      %v988 = vpop.f32.mrb[0].mxu0
      %v989 = vadd.f32 0.0, %v988
      %v990 = vpop.f32.mrb[0].mxu0
      %991 = vmatprep.mubr.bf16.mxu0 0
      %992 = vmatmul.mubr.bf16.gmra.mrb[0].mxu0 %v916
      %v993 = vpop.f32.mrb[0].mxu0
      %v994 = vadd.f32 0.0, %v993
      %v995 = vpop.f32.mrb[0].mxu0
      %v996 = vpop.f32.mrb[0].mxu0
      %v997 = vadd.f32 0.0, %v996
      %v998 = vpop.f32.mrb[0].mxu0
      %999 = vmatprep.mubr.bf16.mxu0 0
      %1000 = vmatmul.mubr.bf16.gmra.mrb[0].mxu0 %v919
      %v1001 = vpop.f32.mrb[0].mxu0
      %v1002 = vadd.f32 0.0, %v1001
      %v1003 = vpop.f32.mrb[0].mxu0
      %v1004 = vpop.f32.mrb[0].mxu0
      %v1005 = vadd.f32 0.0, %v1004
      %v1006 = vpop.f32.mrb[0].mxu0
      %1007 = vmatprep.mubr.bf16.mxu0 0
      %1008 = vmatmul.mubr.bf16.gmra.mrb[0].mxu0 %v922
      %v1009 = vpop.f32.mrb[0].mxu0
      %v1010 = vadd.f32 0.0, %v1009
      %v1011 = vpop.f32.mrb[0].mxu0
      %v1012 = vpop.f32.mrb[0].mxu0
      %v1013 = vadd.f32 0.0, %v1012
      %v1014 = vpop.f32.mrb[0].mxu0
      %1015 = vmatprep.mubr.bf16.mxu0 0
      %1016 = vmatmul.mubr.bf16.gmra.mrb[0].mxu0 %v925
      %v1017 = vpop.f32.mrb[0].mxu0
      %v1018 = vadd.f32 0.0, %v1017
      %v1019 = vpop.f32.mrb[0].mxu0
      %v1020 = vpop.f32.mrb[0].mxu0
      %v1021 = vadd.f32 0.0, %v1020
      %v1022 = vpop.f32.mrb[0].mxu0
      %1023 = vdwg.mxu0
      %v1024 = vadd.f32 %v777, %v962
      %v1025 = vadd.f32 %v778, %v965
      %v1026 = vadd.f32 %v779, %v970
      %v1027 = vadd.f32 %v780, %v973
      %v1028 = vadd.f32 %v781, %v978
      %v1029 = vadd.f32 %v782, %v981
      %v1030 = vadd.f32 %v783, %v986
      %v1031 = vadd.f32 %v784, %v989
      %v1032 = vadd.f32 %v785, %v994
      %v1033 = vadd.f32 %v786, %v997
      %v1034 = vadd.f32 %v787, %v1002
      %v1035 = vadd.f32 %v788, %v1005
      %v1036 = vadd.f32 %v789, %v1010
      %v1037 = vadd.f32 %v790, %v1013
      %v1038 = vadd.f32 %v791, %v1018
      %v1039 = vadd.f32 %v792, %v1021
      %v1040 = vld [vmem:[%s165 + $0x48] sm:$0x3]
      %s1041 = scalar_lea.vmem %s1, 128
      %v1042 = vld [vmem:[%s1041] sm:$0xf]
      %v1043 = vld [vmem:[%s1041 + $0x4] sm:$0xf]
      %v1044 = vld [vmem:[%s1041 + $0x8] sm:$0xf]
      %v1045 = vld [vmem:[%s1041 + $0xc] sm:$0xf]
      %v1046 = vld [vmem:[%s1041 + $0x10] sm:$0xf]
      %v1047 = vld [vmem:[%s1041 + $0x14] sm:$0xf]
      %v1048 = vld [vmem:[%s1041 + $0x18] sm:$0xf]
      %v1049 = vld [vmem:[%s1041 + $0x1c] sm:$0xf]
      %v1051 = vunpack.c.l.b16 %v1040
      %v1052 = vpack.c.b16 %v1051, %v1051
      %vm1053 = vsmask.f32 6400
      %v1055 = vshrl.u32 %v853, 16
      %v1057 = vrot.slane %v1055, 1
      %v1058 = vshll.u32 %v853, 16
      %v1060 = vrot.slane %v1058, 2
      %v1061 = vor.u32 %v1057, %v1060
      %v1063 = vshrl.u32 %v854, 16
      %v1065 = vrot.slane %v1063, 1
      %v1066 = vshll.u32 %v854, 16
      %v1068 = vrot.slane %v1066, 2
      %v1069 = vor.u32 %v1065, %v1068
      %v1070 = vsel %vm1053, %v1061, %v1069
      %v1072 = vshrl.u32 %v855, 16
      %v1074 = vrot.slane %v1072, 1
      %v1075 = vshll.u32 %v855, 16
      %v1077 = vrot.slane %v1075, 2
      %v1078 = vor.u32 %v1074, %v1077
      %v1079 = vsel %vm1053, %v1069, %v1078
      %v1081 = vshrl.u32 %v856, 16
      %v1083 = vrot.slane %v1081, 1
      %v1084 = vshll.u32 %v856, 16
      %v1086 = vrot.slane %v1084, 2
      %v1087 = vor.u32 %v1083, %v1086
      %v1088 = vsel %vm1053, %v1078, %v1087
      %v1090 = vshrl.u32 %v857, 16
      %v1092 = vrot.slane %v1090, 1
      %v1093 = vshll.u32 %v857, 16
      %v1095 = vrot.slane %v1093, 2
      %v1096 = vor.u32 %v1092, %v1095
      %v1097 = vsel %vm1053, %v1087, %v1096
      %v1099 = vshrl.u32 %v858, 16
      %v1101 = vrot.slane %v1099, 1
      %v1102 = vshll.u32 %v858, 16
      %v1104 = vrot.slane %v1102, 2
      %v1105 = vor.u32 %v1101, %v1104
      %v1106 = vsel %vm1053, %v1096, %v1105
      %v1108 = vshrl.u32 %v859, 16
      %v1110 = vrot.slane %v1108, 1
      %v1111 = vshll.u32 %v859, 16
      %v1113 = vrot.slane %v1111, 2
      %v1114 = vor.u32 %v1110, %v1113
      %v1115 = vsel %vm1053, %v1105, %v1114
      %v1117 = vshrl.u32 %v860, 16
      %v1119 = vrot.slane %v1117, 1
      %v1120 = vshll.u32 %v860, 16
      %v1122 = vrot.slane %v1120, 2
      %v1123 = vor.u32 %v1119, %v1122
      %v1124 = vsel %vm1053, %v1114, %v1123
      %v1126 = vshrl.u32 %v1052, 16
      %v1128 = vrot.slane %v1126, 1
      %v1129 = vshll.u32 %v1052, 16
      %v1131 = vrot.slane %v1129, 2
      %v1132 = vor.u32 %v1128, %v1131
      %v1133 = vsel %vm1053, %v1123, %v1132
      %v1142 = vunpack.c.l.b16 %v1042
      %v1143 = vunpack.c.l.b16 %v1043
      %v1144 = vunpack.c.l.b16 %v1044
      %v1145 = vunpack.c.l.b16 %v1045
      %v1146 = vunpack.c.l.b16 %v1046
      %v1147 = vunpack.c.l.b16 %v1047
      %v1148 = vunpack.c.l.b16 %v1048
      %v1149 = vunpack.c.l.b16 %v1049
      %v1150 = vpack.c.b16 %v1143, %v1142
      %v1151 = vpack.c.b16 %v1145, %v1144
      %v1152 = vpack.c.b16 %v1147, %v1146
      %v1153 = vpack.c.b16 %v1149, %v1148
      %v1159 = vsel %vm342, %v1070, 0
      %v1162 = vsel %vm342, %v1079, 0
      %v1165 = vsel %vm342, %v1088, 0
      %v1168 = vsel %vm342, %v1097, 0
      %v1171 = vsel %vm342, %v1106, 0
      %v1174 = vsel %vm342, %v1115, 0
      %v1177 = vsel %vm342, %v1124, 0
      %v1180 = vsel %vm342, %v1133, 0
      %1182 = vmatprep.subr.bf16.mxu0 0
      %1183 = vmatpush1.bf16.msra.mxu0 %v1150
      %1184 = vmatprep.subr.bf16.mxu0 0
      %1185 = vmatpush1.bf16.msra.mxu0 %v1151
      %1186 = vmatprep.subr.bf16.mxu0 0
      %1187 = vmatpush1.bf16.msra.mxu0 %v1152
      %1188 = vmatprep.subr.bf16.mxu0 0
      %1189 = vmatpush1.bf16.msra.mxu0 %v1153
      %1190 = vmatprep.subr.bf16.mxu0 0
      %1191 = vmatpush1.bf16.msra.mxu0 0
      %1192 = vmatprep.subr.bf16.mxu0 0
      %1193 = vmatpush1.bf16.msra.mxu0 0
      %1194 = vmatprep.subr.bf16.mxu0 0
      %1195 = vmatpush1.bf16.msra.mxu0 0
      %1196 = vmatprep.subr.bf16.mxu0 0
      %1197 = vmatpush1.bf16.msra.mxu0 0
      %1198 = vmatprep.subr.bf16.mxu0 0
      %1199 = vmatpush1.bf16.msra.mxu0 0
      %1200 = vmatprep.subr.bf16.mxu0 0
      %1201 = vmatpush1.bf16.msra.mxu0 0
      %1202 = vmatprep.subr.bf16.mxu0 0
      %1203 = vmatpush1.bf16.msra.mxu0 0
      %1204 = vmatprep.subr.bf16.mxu0 0
      %1205 = vmatpush1.bf16.msra.mxu0 0
      %1206 = vmatprep.subr.bf16.mxu0 0
      %1207 = vmatpush1.bf16.msra.mxu0 0
      %1208 = vmatprep.subr.bf16.mxu0 0
      %1209 = vmatpush1.bf16.msra.mxu0 0
      %1210 = vmatprep.subr.bf16.mxu0 0
      %1211 = vmatpush1.bf16.msra.mxu0 0
      %1212 = vmatprep.subr.bf16.mxu0 0
      %1213 = vmatpush1.bf16.msra.mxu0 0
      %1214 = vmatprep.mubr.bf16.mxu0 0
      %1215 = vmatmul.mubr.bf16.gmra.mrb[0].mxu0 %v1159
      %v1216 = vpop.f32.mrb[0].mxu0
      %v1217 = vadd.f32 0.0, %v1216
      %v1218 = vpop.f32.mrb[0].mxu0
      %v1219 = vpop.f32.mrb[0].mxu0
      %v1220 = vadd.f32 0.0, %v1219
      %v1221 = vpop.f32.mrb[0].mxu0
      %1222 = vmatprep.mubr.bf16.mxu0 0
      %1223 = vmatmul.mubr.bf16.gmra.mrb[0].mxu0 %v1162
      %v1224 = vpop.f32.mrb[0].mxu0
      %v1225 = vadd.f32 0.0, %v1224
      %v1226 = vpop.f32.mrb[0].mxu0
      %v1227 = vpop.f32.mrb[0].mxu0
      %v1228 = vadd.f32 0.0, %v1227
      %v1229 = vpop.f32.mrb[0].mxu0
      %1230 = vmatprep.mubr.bf16.mxu0 0
      %1231 = vmatmul.mubr.bf16.gmra.mrb[0].mxu0 %v1165
      %v1232 = vpop.f32.mrb[0].mxu0
      %v1233 = vadd.f32 0.0, %v1232
      %v1234 = vpop.f32.mrb[0].mxu0
      %v1235 = vpop.f32.mrb[0].mxu0
      %v1236 = vadd.f32 0.0, %v1235
      %v1237 = vpop.f32.mrb[0].mxu0
      %1238 = vmatprep.mubr.bf16.mxu0 0
      %1239 = vmatmul.mubr.bf16.gmra.mrb[0].mxu0 %v1168
      %v1240 = vpop.f32.mrb[0].mxu0
      %v1241 = vadd.f32 0.0, %v1240
      %v1242 = vpop.f32.mrb[0].mxu0
      %v1243 = vpop.f32.mrb[0].mxu0
      %v1244 = vadd.f32 0.0, %v1243
      %v1245 = vpop.f32.mrb[0].mxu0
      %1246 = vmatprep.mubr.bf16.mxu0 0
      %1247 = vmatmul.mubr.bf16.gmra.mrb[0].mxu0 %v1171
      %v1248 = vpop.f32.mrb[0].mxu0
      %v1249 = vadd.f32 0.0, %v1248
      %v1250 = vpop.f32.mrb[0].mxu0
      %v1251 = vpop.f32.mrb[0].mxu0
      %v1252 = vadd.f32 0.0, %v1251
      %v1253 = vpop.f32.mrb[0].mxu0
      %1254 = vmatprep.mubr.bf16.mxu0 0
      %1255 = vmatmul.mubr.bf16.gmra.mrb[0].mxu0 %v1174
      %v1256 = vpop.f32.mrb[0].mxu0
      %v1257 = vadd.f32 0.0, %v1256
      %v1258 = vpop.f32.mrb[0].mxu0
      %v1259 = vpop.f32.mrb[0].mxu0
      %v1260 = vadd.f32 0.0, %v1259
      %v1261 = vpop.f32.mrb[0].mxu0
      %1262 = vmatprep.mubr.bf16.mxu0 0
      %1263 = vmatmul.mubr.bf16.gmra.mrb[0].mxu0 %v1177
      %v1264 = vpop.f32.mrb[0].mxu0
      %v1265 = vadd.f32 0.0, %v1264
      %v1266 = vpop.f32.mrb[0].mxu0
      %v1267 = vpop.f32.mrb[0].mxu0
      %v1268 = vadd.f32 0.0, %v1267
      %v1269 = vpop.f32.mrb[0].mxu0
      %1270 = vmatprep.mubr.bf16.mxu0 0
      %1271 = vmatmul.mubr.bf16.gmra.mrb[0].mxu0 %v1180
      %v1272 = vpop.f32.mrb[0].mxu0
      %v1273 = vadd.f32 0.0, %v1272
      %v1274 = vpop.f32.mrb[0].mxu0
      %v1275 = vpop.f32.mrb[0].mxu0
      %v1276 = vadd.f32 0.0, %v1275
      %v1277 = vpop.f32.mrb[0].mxu0
      %1278 = vdwg.mxu0
      %v1279 = vadd.f32 %v1024, %v1217
      %v1280 = vadd.f32 %v1025, %v1220
      %v1281 = vadd.f32 %v1026, %v1225
      %v1282 = vadd.f32 %v1027, %v1228
      %v1283 = vadd.f32 %v1028, %v1233
      %v1284 = vadd.f32 %v1029, %v1236
      %v1285 = vadd.f32 %v1030, %v1241
      %v1286 = vadd.f32 %v1031, %v1244
      %v1287 = vadd.f32 %v1032, %v1249
      %v1288 = vadd.f32 %v1033, %v1252
      %v1289 = vadd.f32 %v1034, %v1257
      %v1290 = vadd.f32 %v1035, %v1260
      %v1291 = vadd.f32 %v1036, %v1265
      %v1292 = vadd.f32 %v1037, %v1268
      %v1293 = vadd.f32 %v1038, %v1273
      %v1294 = vadd.f32 %v1039, %v1276
      %v1295 = vld [vmem:[%s165 + $0x8] sm:$0xc]
      %s1296 = scalar_lea.vmem %s1, 160
      %v1297 = vld [vmem:[%s1296] sm:$0xf]
      %v1298 = vld [vmem:[%s1296 + $0x4] sm:$0xf]
      %v1299 = vld [vmem:[%s1296 + $0x8] sm:$0xf]
      %v1300 = vld [vmem:[%s1296 + $0xc] sm:$0xf]
      %v1301 = vld [vmem:[%s1296 + $0x10] sm:$0xf]
      %v1302 = vld [vmem:[%s1296 + $0x14] sm:$0xf]
      %v1303 = vld [vmem:[%s1296 + $0x18] sm:$0xf]
      %v1304 = vld [vmem:[%s1296 + $0x1c] sm:$0xf]
      %v1306 = vunpack.c.l.b16 %v1295
      %v1307 = vpack.c.b16 %v837, %v1306
      %vm1308 = vcmask 1045504
      %v1309 = vrot.slane %v1307, 2
      %v1310 = vrot.slane %v854, 2
      %v1311 = vsel %vm1308, %v1309, %v1310
      %v1312 = vrot.slane %v855, 2
      %v1313 = vsel %vm1308, %v1310, %v1312
      %v1314 = vrot.slane %v856, 2
      %v1315 = vsel %vm1308, %v1312, %v1314
      %v1316 = vrot.slane %v857, 2
      %v1317 = vsel %vm1308, %v1314, %v1316
      %v1318 = vrot.slane %v858, 2
      %v1319 = vsel %vm1308, %v1316, %v1318
      %v1320 = vrot.slane %v859, 2
      %v1321 = vsel %vm1308, %v1318, %v1320
      %v1322 = vrot.slane %v860, 2
      %v1323 = vsel %vm1308, %v1320, %v1322
      %v1324 = vrot.slane %v1052, 2
      %v1325 = vsel %vm1308, %v1322, %v1324
      %v1334 = vunpack.c.l.b16 %v1297
      %v1335 = vunpack.c.l.b16 %v1298
      %v1336 = vunpack.c.l.b16 %v1299
      %v1337 = vunpack.c.l.b16 %v1300
      %v1338 = vunpack.c.l.b16 %v1301
      %v1339 = vunpack.c.l.b16 %v1302
      %v1340 = vunpack.c.l.b16 %v1303
      %v1341 = vunpack.c.l.b16 %v1304
      %v1342 = vpack.c.b16 %v1335, %v1334
      %v1343 = vpack.c.b16 %v1337, %v1336
      %v1344 = vpack.c.b16 %v1339, %v1338
      %v1345 = vpack.c.b16 %v1341, %v1340
      %v1351 = vsel %vm342, %v1311, 0
      %v1354 = vsel %vm342, %v1313, 0
      %v1357 = vsel %vm342, %v1315, 0
      %v1360 = vsel %vm342, %v1317, 0
      %v1363 = vsel %vm342, %v1319, 0
      %v1366 = vsel %vm342, %v1321, 0
      %v1369 = vsel %vm342, %v1323, 0
      %v1372 = vsel %vm342, %v1325, 0
      %1374 = vmatprep.subr.bf16.mxu0 0
      %1375 = vmatpush1.bf16.msra.mxu0 %v1342
      %1376 = vmatprep.subr.bf16.mxu0 0
      %1377 = vmatpush1.bf16.msra.mxu0 %v1343
      %1378 = vmatprep.subr.bf16.mxu0 0
      %1379 = vmatpush1.bf16.msra.mxu0 %v1344
      %1380 = vmatprep.subr.bf16.mxu0 0
      %1381 = vmatpush1.bf16.msra.mxu0 %v1345
      %1382 = vmatprep.subr.bf16.mxu0 0
      %1383 = vmatpush1.bf16.msra.mxu0 0
      %1384 = vmatprep.subr.bf16.mxu0 0
      %1385 = vmatpush1.bf16.msra.mxu0 0
      %1386 = vmatprep.subr.bf16.mxu0 0
      %1387 = vmatpush1.bf16.msra.mxu0 0
      %1388 = vmatprep.subr.bf16.mxu0 0
      %1389 = vmatpush1.bf16.msra.mxu0 0
      %1390 = vmatprep.subr.bf16.mxu0 0
      %1391 = vmatpush1.bf16.msra.mxu0 0
      %1392 = vmatprep.subr.bf16.mxu0 0
      %1393 = vmatpush1.bf16.msra.mxu0 0
      %1394 = vmatprep.subr.bf16.mxu0 0
      %1395 = vmatpush1.bf16.msra.mxu0 0
      %1396 = vmatprep.subr.bf16.mxu0 0
      %1397 = vmatpush1.bf16.msra.mxu0 0
      %1398 = vmatprep.subr.bf16.mxu0 0
      %1399 = vmatpush1.bf16.msra.mxu0 0
      %1400 = vmatprep.subr.bf16.mxu0 0
      %1401 = vmatpush1.bf16.msra.mxu0 0
      %1402 = vmatprep.subr.bf16.mxu0 0
      %1403 = vmatpush1.bf16.msra.mxu0 0
      %1404 = vmatprep.subr.bf16.mxu0 0
      %1405 = vmatpush1.bf16.msra.mxu0 0
      %1406 = vmatprep.mubr.bf16.mxu0 0
      %1407 = vmatmul.mubr.bf16.gmra.mrb[0].mxu0 %v1351
      %v1408 = vpop.f32.mrb[0].mxu0
      %v1409 = vadd.f32 0.0, %v1408
      %v1410 = vpop.f32.mrb[0].mxu0
      %v1411 = vpop.f32.mrb[0].mxu0
      %v1412 = vadd.f32 0.0, %v1411
      %v1413 = vpop.f32.mrb[0].mxu0
      %1414 = vmatprep.mubr.bf16.mxu0 0
      %1415 = vmatmul.mubr.bf16.gmra.mrb[0].mxu0 %v1354
      %v1416 = vpop.f32.mrb[0].mxu0
      %v1417 = vadd.f32 0.0, %v1416
      %v1418 = vpop.f32.mrb[0].mxu0
      %v1419 = vpop.f32.mrb[0].mxu0
      %v1420 = vadd.f32 0.0, %v1419
      %v1421 = vpop.f32.mrb[0].mxu0
      %1422 = vmatprep.mubr.bf16.mxu0 0
      %1423 = vmatmul.mubr.bf16.gmra.mrb[0].mxu0 %v1357
      %v1424 = vpop.f32.mrb[0].mxu0
      %v1425 = vadd.f32 0.0, %v1424
      %v1426 = vpop.f32.mrb[0].mxu0
      %v1427 = vpop.f32.mrb[0].mxu0
      %v1428 = vadd.f32 0.0, %v1427
      %v1429 = vpop.f32.mrb[0].mxu0
      %1430 = vmatprep.mubr.bf16.mxu0 0
      %1431 = vmatmul.mubr.bf16.gmra.mrb[0].mxu0 %v1360
      %v1432 = vpop.f32.mrb[0].mxu0
      %v1433 = vadd.f32 0.0, %v1432
      %v1434 = vpop.f32.mrb[0].mxu0
      %v1435 = vpop.f32.mrb[0].mxu0
      %v1436 = vadd.f32 0.0, %v1435
      %v1437 = vpop.f32.mrb[0].mxu0
      %1438 = vmatprep.mubr.bf16.mxu0 0
      %1439 = vmatmul.mubr.bf16.gmra.mrb[0].mxu0 %v1363
      %v1440 = vpop.f32.mrb[0].mxu0
      %v1441 = vadd.f32 0.0, %v1440
      %v1442 = vpop.f32.mrb[0].mxu0
      %v1443 = vpop.f32.mrb[0].mxu0
      %v1444 = vadd.f32 0.0, %v1443
      %v1445 = vpop.f32.mrb[0].mxu0
      %1446 = vmatprep.mubr.bf16.mxu0 0
      %1447 = vmatmul.mubr.bf16.gmra.mrb[0].mxu0 %v1366
      %v1448 = vpop.f32.mrb[0].mxu0
      %v1449 = vadd.f32 0.0, %v1448
      %v1450 = vpop.f32.mrb[0].mxu0
      %v1451 = vpop.f32.mrb[0].mxu0
      %v1452 = vadd.f32 0.0, %v1451
      %v1453 = vpop.f32.mrb[0].mxu0
      %1454 = vmatprep.mubr.bf16.mxu0 0
      %1455 = vmatmul.mubr.bf16.gmra.mrb[0].mxu0 %v1369
      %v1456 = vpop.f32.mrb[0].mxu0
      %v1457 = vadd.f32 0.0, %v1456
      %v1458 = vpop.f32.mrb[0].mxu0
      %v1459 = vpop.f32.mrb[0].mxu0
      %v1460 = vadd.f32 0.0, %v1459
      %v1461 = vpop.f32.mrb[0].mxu0
      %1462 = vmatprep.mubr.bf16.mxu0 0
      %1463 = vmatmul.mubr.bf16.gmra.mrb[0].mxu0 %v1372
      %v1464 = vpop.f32.mrb[0].mxu0
      %v1465 = vadd.f32 0.0, %v1464
      %v1466 = vpop.f32.mrb[0].mxu0
      %v1467 = vpop.f32.mrb[0].mxu0
      %v1468 = vadd.f32 0.0, %v1467
      %v1469 = vpop.f32.mrb[0].mxu0
      %1470 = vdwg.mxu0
      %v1471 = vadd.f32 %v1279, %v1409
      %v1472 = vadd.f32 %v1280, %v1412
      %v1473 = vadd.f32 %v1281, %v1417
      %v1474 = vadd.f32 %v1282, %v1420
      %v1475 = vadd.f32 %v1283, %v1425
      %v1476 = vadd.f32 %v1284, %v1428
      %v1477 = vadd.f32 %v1285, %v1433
      %v1478 = vadd.f32 %v1286, %v1436
      %v1479 = vadd.f32 %v1287, %v1441
      %v1480 = vadd.f32 %v1288, %v1444
      %v1481 = vadd.f32 %v1289, %v1449
      %v1482 = vadd.f32 %v1290, %v1452
      %v1483 = vadd.f32 %v1291, %v1457
      %v1484 = vadd.f32 %v1292, %v1460
      %v1485 = vadd.f32 %v1293, %v1465
      %v1486 = vadd.f32 %v1294, %v1468
      %v1487 = vld [vmem:[%s165 + $0x10] sm:$0xc]
      %v1488 = vld [vmem:[%s165 + $0x14] sm:$0xf]
      %v1489 = vld [vmem:[%s165 + $0x18] sm:$0xf]
      %v1490 = vld [vmem:[%s165 + $0x1c] sm:$0xf]
      %v1491 = vld [vmem:[%s165 + $0x20] sm:$0xf]
      %v1492 = vld [vmem:[%s165 + $0x24] sm:$0xf]
      %v1493 = vld [vmem:[%s165 + $0x28] sm:$0xf]
      %v1494 = vld [vmem:[%s165 + $0x2c] sm:$0xf]
      %v1495 = vld [vmem:[%s165 + $0x30] sm:$0xf]
      %v1496 = vld [vmem:[%s165 + $0x34] sm:$0xf]
      %v1497 = vld [vmem:[%s165 + $0x38] sm:$0xf]
      %v1498 = vld [vmem:[%s165 + $0x3c] sm:$0xf]
      %v1499 = vld [vmem:[%s165 + $0x40] sm:$0xf]
      %v1500 = vld [vmem:[%s165 + $0x44] sm:$0xf]
      %v1501 = vld [vmem:[%s165 + $0x48] sm:$0xf]
      %v1502 = vld [vmem:[%s165 + $0x4c] sm:$0xf]
      %v1503 = vld [vmem:[%s165 + $0x50] sm:$0x3]
      %s1504 = scalar_lea.vmem %s1, 192
      %v1505 = vld [vmem:[%s1504] sm:$0xf]
      %v1506 = vld [vmem:[%s1504 + $0x4] sm:$0xf]
      %v1507 = vld [vmem:[%s1504 + $0x8] sm:$0xf]
      %v1508 = vld [vmem:[%s1504 + $0xc] sm:$0xf]
      %v1509 = vld [vmem:[%s1504 + $0x10] sm:$0xf]
      %v1510 = vld [vmem:[%s1504 + $0x14] sm:$0xf]
      %v1511 = vld [vmem:[%s1504 + $0x18] sm:$0xf]
      %v1512 = vld [vmem:[%s1504 + $0x1c] sm:$0xf]
      %v1530 = vunpack.c.l.b16 %v1487
      %v1531 = vunpack.c.l.b16 %v1488
      %v1532 = vunpack.c.l.b16 %v1489
      %v1533 = vunpack.c.l.b16 %v1490
      %v1534 = vunpack.c.l.b16 %v1491
      %v1535 = vunpack.c.l.b16 %v1492
      %v1536 = vunpack.c.l.b16 %v1493
      %v1537 = vunpack.c.l.b16 %v1494
      %v1538 = vunpack.c.l.b16 %v1495
      %v1539 = vunpack.c.l.b16 %v1496
      %v1540 = vunpack.c.l.b16 %v1497
      %v1541 = vunpack.c.l.b16 %v1498
      %v1542 = vunpack.c.l.b16 %v1499
      %v1543 = vunpack.c.l.b16 %v1500
      %v1544 = vunpack.c.l.b16 %v1501
      %v1545 = vunpack.c.l.b16 %v1502
      %v1546 = vunpack.c.l.b16 %v1503
      %v1547 = vpack.c.b16 %v1531, %v1530
      %v1548 = vpack.c.b16 %v1533, %v1532
      %v1549 = vpack.c.b16 %v1535, %v1534
      %v1550 = vpack.c.b16 %v1537, %v1536
      %v1551 = vpack.c.b16 %v1539, %v1538
      %v1552 = vpack.c.b16 %v1541, %v1540
      %v1553 = vpack.c.b16 %v1543, %v1542
      %v1554 = vpack.c.b16 %v1545, %v1544
      %v1555 = vpack.c.b16 %v1546, %v1546
      %v1556 = vrot.slane %v1547, 2
      %v1557 = vrot.slane %v1548, 2
      %v1558 = vsel %vm1308, %v1556, %v1557
      %v1559 = vrot.slane %v1549, 2
      %v1560 = vsel %vm1308, %v1557, %v1559
      %v1561 = vrot.slane %v1550, 2
      %v1562 = vsel %vm1308, %v1559, %v1561
      %v1563 = vrot.slane %v1551, 2
      %v1564 = vsel %vm1308, %v1561, %v1563
      %v1565 = vrot.slane %v1552, 2
      %v1566 = vsel %vm1308, %v1563, %v1565
      %v1567 = vrot.slane %v1553, 2
      %v1568 = vsel %vm1308, %v1565, %v1567
      %v1569 = vrot.slane %v1554, 2
      %v1570 = vsel %vm1308, %v1567, %v1569
      %v1571 = vrot.slane %v1555, 2
      %v1572 = vsel %vm1308, %v1569, %v1571
      %v1581 = vunpack.c.l.b16 %v1505
      %v1582 = vunpack.c.l.b16 %v1506
      %v1583 = vunpack.c.l.b16 %v1507
      %v1584 = vunpack.c.l.b16 %v1508
      %v1585 = vunpack.c.l.b16 %v1509
      %v1586 = vunpack.c.l.b16 %v1510
      %v1587 = vunpack.c.l.b16 %v1511
      %v1588 = vunpack.c.l.b16 %v1512
      %v1589 = vpack.c.b16 %v1582, %v1581
      %v1590 = vpack.c.b16 %v1584, %v1583
      %v1591 = vpack.c.b16 %v1586, %v1585
      %v1592 = vpack.c.b16 %v1588, %v1587
      %v1598 = vsel %vm342, %v1558, 0
      %v1601 = vsel %vm342, %v1560, 0
      %v1604 = vsel %vm342, %v1562, 0
      %v1607 = vsel %vm342, %v1564, 0
      %v1610 = vsel %vm342, %v1566, 0
      %v1613 = vsel %vm342, %v1568, 0
      %v1616 = vsel %vm342, %v1570, 0
      %v1619 = vsel %vm342, %v1572, 0
      %1621 = vmatprep.subr.bf16.mxu0 0
      %1622 = vmatpush1.bf16.msra.mxu0 %v1589
      %1623 = vmatprep.subr.bf16.mxu0 0
      %1624 = vmatpush1.bf16.msra.mxu0 %v1590
      %1625 = vmatprep.subr.bf16.mxu0 0
      %1626 = vmatpush1.bf16.msra.mxu0 %v1591
      %1627 = vmatprep.subr.bf16.mxu0 0
      %1628 = vmatpush1.bf16.msra.mxu0 %v1592
      %1629 = vmatprep.subr.bf16.mxu0 0
      %1630 = vmatpush1.bf16.msra.mxu0 0
      %1631 = vmatprep.subr.bf16.mxu0 0
      %1632 = vmatpush1.bf16.msra.mxu0 0
      %1633 = vmatprep.subr.bf16.mxu0 0
      %1634 = vmatpush1.bf16.msra.mxu0 0
      %1635 = vmatprep.subr.bf16.mxu0 0
      %1636 = vmatpush1.bf16.msra.mxu0 0
      %1637 = vmatprep.subr.bf16.mxu0 0
      %1638 = vmatpush1.bf16.msra.mxu0 0
      %1639 = vmatprep.subr.bf16.mxu0 0
      %1640 = vmatpush1.bf16.msra.mxu0 0
      %1641 = vmatprep.subr.bf16.mxu0 0
      %1642 = vmatpush1.bf16.msra.mxu0 0
      %1643 = vmatprep.subr.bf16.mxu0 0
      %1644 = vmatpush1.bf16.msra.mxu0 0
      %1645 = vmatprep.subr.bf16.mxu0 0
      %1646 = vmatpush1.bf16.msra.mxu0 0
      %1647 = vmatprep.subr.bf16.mxu0 0
      %1648 = vmatpush1.bf16.msra.mxu0 0
      %1649 = vmatprep.subr.bf16.mxu0 0
      %1650 = vmatpush1.bf16.msra.mxu0 0
      %1651 = vmatprep.subr.bf16.mxu0 0
      %1652 = vmatpush1.bf16.msra.mxu0 0
      %1653 = vmatprep.mubr.bf16.mxu0 0
      %1654 = vmatmul.mubr.bf16.gmra.mrb[0].mxu0 %v1598
      %v1655 = vpop.f32.mrb[0].mxu0
      %v1656 = vadd.f32 0.0, %v1655
      %v1657 = vpop.f32.mrb[0].mxu0
      %v1658 = vpop.f32.mrb[0].mxu0
      %v1659 = vadd.f32 0.0, %v1658
      %v1660 = vpop.f32.mrb[0].mxu0
      %1661 = vmatprep.mubr.bf16.mxu0 0
      %1662 = vmatmul.mubr.bf16.gmra.mrb[0].mxu0 %v1601
      %v1663 = vpop.f32.mrb[0].mxu0
      %v1664 = vadd.f32 0.0, %v1663
      %v1665 = vpop.f32.mrb[0].mxu0
      %v1666 = vpop.f32.mrb[0].mxu0
      %v1667 = vadd.f32 0.0, %v1666
      %v1668 = vpop.f32.mrb[0].mxu0
      %1669 = vmatprep.mubr.bf16.mxu0 0
      %1670 = vmatmul.mubr.bf16.gmra.mrb[0].mxu0 %v1604
      %v1671 = vpop.f32.mrb[0].mxu0
      %v1672 = vadd.f32 0.0, %v1671
      %v1673 = vpop.f32.mrb[0].mxu0
      %v1674 = vpop.f32.mrb[0].mxu0
      %v1675 = vadd.f32 0.0, %v1674
      %v1676 = vpop.f32.mrb[0].mxu0
      %1677 = vmatprep.mubr.bf16.mxu0 0
      %1678 = vmatmul.mubr.bf16.gmra.mrb[0].mxu0 %v1607
      %v1679 = vpop.f32.mrb[0].mxu0
      %v1680 = vadd.f32 0.0, %v1679
      %v1681 = vpop.f32.mrb[0].mxu0
      %v1682 = vpop.f32.mrb[0].mxu0
      %v1683 = vadd.f32 0.0, %v1682
      %v1684 = vpop.f32.mrb[0].mxu0
      %1685 = vmatprep.mubr.bf16.mxu0 0
      %1686 = vmatmul.mubr.bf16.gmra.mrb[0].mxu0 %v1610
      %v1687 = vpop.f32.mrb[0].mxu0
      %v1688 = vadd.f32 0.0, %v1687
      %v1689 = vpop.f32.mrb[0].mxu0
      %v1690 = vpop.f32.mrb[0].mxu0
      %v1691 = vadd.f32 0.0, %v1690
      %v1692 = vpop.f32.mrb[0].mxu0
      %1693 = vmatprep.mubr.bf16.mxu0 0
      %1694 = vmatmul.mubr.bf16.gmra.mrb[0].mxu0 %v1613
      %v1695 = vpop.f32.mrb[0].mxu0
      %v1696 = vadd.f32 0.0, %v1695
      %v1697 = vpop.f32.mrb[0].mxu0
      %v1698 = vpop.f32.mrb[0].mxu0
      %v1699 = vadd.f32 0.0, %v1698
      %v1700 = vpop.f32.mrb[0].mxu0
      %1701 = vmatprep.mubr.bf16.mxu0 0
      %1702 = vmatmul.mubr.bf16.gmra.mrb[0].mxu0 %v1616
      %v1703 = vpop.f32.mrb[0].mxu0
      %v1704 = vadd.f32 0.0, %v1703
      %v1705 = vpop.f32.mrb[0].mxu0
      %v1706 = vpop.f32.mrb[0].mxu0
      %v1707 = vadd.f32 0.0, %v1706
      %v1708 = vpop.f32.mrb[0].mxu0
      %1709 = vmatprep.mubr.bf16.mxu0 0
      %1710 = vmatmul.mubr.bf16.gmra.mrb[0].mxu0 %v1619
      %v1711 = vpop.f32.mrb[0].mxu0
      %v1712 = vadd.f32 0.0, %v1711
      %v1713 = vpop.f32.mrb[0].mxu0
      %v1714 = vpop.f32.mrb[0].mxu0
      %v1715 = vadd.f32 0.0, %v1714
      %v1716 = vpop.f32.mrb[0].mxu0
      %1717 = vdwg.mxu0
      %v1718 = vadd.f32 %v1471, %v1656
      %v1719 = vadd.f32 %v1472, %v1659
      %v1720 = vadd.f32 %v1473, %v1664
      %v1721 = vadd.f32 %v1474, %v1667
      %v1722 = vadd.f32 %v1475, %v1672
      %v1723 = vadd.f32 %v1476, %v1675
      %v1724 = vadd.f32 %v1477, %v1680
      %v1725 = vadd.f32 %v1478, %v1683
      %v1726 = vadd.f32 %v1479, %v1688
      %v1727 = vadd.f32 %v1480, %v1691
      %v1728 = vadd.f32 %v1481, %v1696
      %v1729 = vadd.f32 %v1482, %v1699
      %v1730 = vadd.f32 %v1483, %v1704
      %v1731 = vadd.f32 %v1484, %v1707
      %v1732 = vadd.f32 %v1485, %v1712
      %v1733 = vadd.f32 %v1486, %v1715
      %v1734 = vld [vmem:[%s165 + $0x50] sm:$0x7]
      %s1735 = scalar_lea.vmem %s1, 224
      %v1736 = vld [vmem:[%s1735] sm:$0xf]
      %v1737 = vld [vmem:[%s1735 + $0x4] sm:$0xf]
      %v1738 = vld [vmem:[%s1735 + $0x8] sm:$0xf]
      %v1739 = vld [vmem:[%s1735 + $0xc] sm:$0xf]
      %v1740 = vld [vmem:[%s1735 + $0x10] sm:$0xf]
      %v1741 = vld [vmem:[%s1735 + $0x14] sm:$0xf]
      %v1742 = vld [vmem:[%s1735 + $0x18] sm:$0xf]
      %v1743 = vld [vmem:[%s1735 + $0x1c] sm:$0xf]
      %v1745 = vunpack.c.l.b16 %v1734
      %v1746 = vpack.c.b16 %v1745, %v1745
      %vm1747 = vsmask.f32 5376
      %v1749 = vshrl.u32 %v1547, 16
      %v1751 = vrot.slane %v1749, 2
      %v1752 = vshll.u32 %v1547, 16
      %v1754 = vrot.slane %v1752, 3
      %v1755 = vor.u32 %v1751, %v1754
      %v1757 = vshrl.u32 %v1548, 16
      %v1759 = vrot.slane %v1757, 2
      %v1760 = vshll.u32 %v1548, 16
      %v1762 = vrot.slane %v1760, 3
      %v1763 = vor.u32 %v1759, %v1762
      %v1764 = vsel %vm1747, %v1755, %v1763
      %v1766 = vshrl.u32 %v1549, 16
      %v1768 = vrot.slane %v1766, 2
      %v1769 = vshll.u32 %v1549, 16
      %v1771 = vrot.slane %v1769, 3
      %v1772 = vor.u32 %v1768, %v1771
      %v1773 = vsel %vm1747, %v1763, %v1772
      %v1775 = vshrl.u32 %v1550, 16
      %v1777 = vrot.slane %v1775, 2
      %v1778 = vshll.u32 %v1550, 16
      %v1780 = vrot.slane %v1778, 3
      %v1781 = vor.u32 %v1777, %v1780
      %v1782 = vsel %vm1747, %v1772, %v1781
      %v1784 = vshrl.u32 %v1551, 16
      %v1786 = vrot.slane %v1784, 2
      %v1787 = vshll.u32 %v1551, 16
      %v1789 = vrot.slane %v1787, 3
      %v1790 = vor.u32 %v1786, %v1789
      %v1791 = vsel %vm1747, %v1781, %v1790
      %v1793 = vshrl.u32 %v1552, 16
      %v1795 = vrot.slane %v1793, 2
      %v1796 = vshll.u32 %v1552, 16
      %v1798 = vrot.slane %v1796, 3
      %v1799 = vor.u32 %v1795, %v1798
      %v1800 = vsel %vm1747, %v1790, %v1799
      %v1802 = vshrl.u32 %v1553, 16
      %v1804 = vrot.slane %v1802, 2
      %v1805 = vshll.u32 %v1553, 16
      %v1807 = vrot.slane %v1805, 3
      %v1808 = vor.u32 %v1804, %v1807
      %v1809 = vsel %vm1747, %v1799, %v1808
      %v1811 = vshrl.u32 %v1554, 16
      %v1813 = vrot.slane %v1811, 2
      %v1814 = vshll.u32 %v1554, 16
      %v1816 = vrot.slane %v1814, 3
      %v1817 = vor.u32 %v1813, %v1816
      %v1818 = vsel %vm1747, %v1808, %v1817
      %v1820 = vshrl.u32 %v1746, 16
      %v1822 = vrot.slane %v1820, 2
      %v1823 = vshll.u32 %v1746, 16
      %v1825 = vrot.slane %v1823, 3
      %v1826 = vor.u32 %v1822, %v1825
      %v1827 = vsel %vm1747, %v1817, %v1826
      %v1836 = vunpack.c.l.b16 %v1736
      %v1837 = vunpack.c.l.b16 %v1737
      %v1838 = vunpack.c.l.b16 %v1738
      %v1839 = vunpack.c.l.b16 %v1739
      %v1840 = vunpack.c.l.b16 %v1740
      %v1841 = vunpack.c.l.b16 %v1741
      %v1842 = vunpack.c.l.b16 %v1742
      %v1843 = vunpack.c.l.b16 %v1743
      %v1844 = vpack.c.b16 %v1837, %v1836
      %v1845 = vpack.c.b16 %v1839, %v1838
      %v1846 = vpack.c.b16 %v1841, %v1840
      %v1847 = vpack.c.b16 %v1843, %v1842
      %v1853 = vsel %vm342, %v1764, 0
      %v1856 = vsel %vm342, %v1773, 0
      %v1859 = vsel %vm342, %v1782, 0
      %v1862 = vsel %vm342, %v1791, 0
      %v1865 = vsel %vm342, %v1800, 0
      %v1868 = vsel %vm342, %v1809, 0
      %v1871 = vsel %vm342, %v1818, 0
      %v1874 = vsel %vm342, %v1827, 0
      %1876 = vmatprep.subr.bf16.mxu0 0
      %1877 = vmatpush1.bf16.msra.mxu0 %v1844
      %1878 = vmatprep.subr.bf16.mxu0 0
      %1879 = vmatpush1.bf16.msra.mxu0 %v1845
      %1880 = vmatprep.subr.bf16.mxu0 0
      %1881 = vmatpush1.bf16.msra.mxu0 %v1846
      %1882 = vmatprep.subr.bf16.mxu0 0
      %1883 = vmatpush1.bf16.msra.mxu0 %v1847
      %1884 = vmatprep.subr.bf16.mxu0 0
      %1885 = vmatpush1.bf16.msra.mxu0 0
      %1886 = vmatprep.subr.bf16.mxu0 0
      %1887 = vmatpush1.bf16.msra.mxu0 0
      %1888 = vmatprep.subr.bf16.mxu0 0
      %1889 = vmatpush1.bf16.msra.mxu0 0
      %1890 = vmatprep.subr.bf16.mxu0 0
      %1891 = vmatpush1.bf16.msra.mxu0 0
      %1892 = vmatprep.subr.bf16.mxu0 0
      %1893 = vmatpush1.bf16.msra.mxu0 0
      %1894 = vmatprep.subr.bf16.mxu0 0
      %1895 = vmatpush1.bf16.msra.mxu0 0
      %1896 = vmatprep.subr.bf16.mxu0 0
      %1897 = vmatpush1.bf16.msra.mxu0 0
      %1898 = vmatprep.subr.bf16.mxu0 0
      %1899 = vmatpush1.bf16.msra.mxu0 0
      %1900 = vmatprep.subr.bf16.mxu0 0
      %1901 = vmatpush1.bf16.msra.mxu0 0
      %1902 = vmatprep.subr.bf16.mxu0 0
      %1903 = vmatpush1.bf16.msra.mxu0 0
      %1904 = vmatprep.subr.bf16.mxu0 0
      %1905 = vmatpush1.bf16.msra.mxu0 0
      %1906 = vmatprep.subr.bf16.mxu0 0
      %1907 = vmatpush1.bf16.msra.mxu0 0
      %1908 = vmatprep.mubr.bf16.mxu0 0
      %1909 = vmatmul.mubr.bf16.gmra.mrb[0].mxu0 %v1853
      %v1910 = vpop.f32.mrb[0].mxu0
      %v1911 = vadd.f32 0.0, %v1910
      %v1912 = vpop.f32.mrb[0].mxu0
      %v1913 = vpop.f32.mrb[0].mxu0
      %v1914 = vadd.f32 0.0, %v1913
      %v1915 = vpop.f32.mrb[0].mxu0
      %1916 = vmatprep.mubr.bf16.mxu0 0
      %1917 = vmatmul.mubr.bf16.gmra.mrb[0].mxu0 %v1856
      %v1918 = vpop.f32.mrb[0].mxu0
      %v1919 = vadd.f32 0.0, %v1918
      %v1920 = vpop.f32.mrb[0].mxu0
      %v1921 = vpop.f32.mrb[0].mxu0
      %v1922 = vadd.f32 0.0, %v1921
      %v1923 = vpop.f32.mrb[0].mxu0
      %1924 = vmatprep.mubr.bf16.mxu0 0
      %1925 = vmatmul.mubr.bf16.gmra.mrb[0].mxu0 %v1859
      %v1926 = vpop.f32.mrb[0].mxu0
      %v1927 = vadd.f32 0.0, %v1926
      %v1928 = vpop.f32.mrb[0].mxu0
      %v1929 = vpop.f32.mrb[0].mxu0
      %v1930 = vadd.f32 0.0, %v1929
      %v1931 = vpop.f32.mrb[0].mxu0
      %1932 = vmatprep.mubr.bf16.mxu0 0
      %1933 = vmatmul.mubr.bf16.gmra.mrb[0].mxu0 %v1862
      %v1934 = vpop.f32.mrb[0].mxu0
      %v1935 = vadd.f32 0.0, %v1934
      %v1936 = vpop.f32.mrb[0].mxu0
      %v1937 = vpop.f32.mrb[0].mxu0
      %v1938 = vadd.f32 0.0, %v1937
      %v1939 = vpop.f32.mrb[0].mxu0
      %1940 = vmatprep.mubr.bf16.mxu0 0
      %1941 = vmatmul.mubr.bf16.gmra.mrb[0].mxu0 %v1865
      %v1942 = vpop.f32.mrb[0].mxu0
      %v1943 = vadd.f32 0.0, %v1942
      %v1944 = vpop.f32.mrb[0].mxu0
      %v1945 = vpop.f32.mrb[0].mxu0
      %v1946 = vadd.f32 0.0, %v1945
      %v1947 = vpop.f32.mrb[0].mxu0
      %1948 = vmatprep.mubr.bf16.mxu0 0
      %1949 = vmatmul.mubr.bf16.gmra.mrb[0].mxu0 %v1868
      %v1950 = vpop.f32.mrb[0].mxu0
      %v1951 = vadd.f32 0.0, %v1950
      %v1952 = vpop.f32.mrb[0].mxu0
      %v1953 = vpop.f32.mrb[0].mxu0
      %v1954 = vadd.f32 0.0, %v1953
      %v1955 = vpop.f32.mrb[0].mxu0
      %1956 = vmatprep.mubr.bf16.mxu0 0
      %1957 = vmatmul.mubr.bf16.gmra.mrb[0].mxu0 %v1871
      %v1958 = vpop.f32.mrb[0].mxu0
      %v1959 = vadd.f32 0.0, %v1958
      %v1960 = vpop.f32.mrb[0].mxu0
      %v1961 = vpop.f32.mrb[0].mxu0
      %v1962 = vadd.f32 0.0, %v1961
      %v1963 = vpop.f32.mrb[0].mxu0
      %1964 = vmatprep.mubr.bf16.mxu0 0
      %1965 = vmatmul.mubr.bf16.gmra.mrb[0].mxu0 %v1874
      %v1966 = vpop.f32.mrb[0].mxu0
      %v1967 = vadd.f32 0.0, %v1966
      %v1968 = vpop.f32.mrb[0].mxu0
      %v1969 = vpop.f32.mrb[0].mxu0
      %v1970 = vadd.f32 0.0, %v1969
      %v1971 = vpop.f32.mrb[0].mxu0
      %1972 = vdwg.mxu0
      %v1973 = vadd.f32 %v1718, %v1911
      %v1974 = vadd.f32 %v1719, %v1914
      %v1975 = vadd.f32 %v1720, %v1919
      %v1976 = vadd.f32 %v1721, %v1922
      %v1977 = vadd.f32 %v1722, %v1927
      %v1978 = vadd.f32 %v1723, %v1930
      %v1979 = vadd.f32 %v1724, %v1935
      %v1980 = vadd.f32 %v1725, %v1938
      %v1981 = vadd.f32 %v1726, %v1943
      %v1982 = vadd.f32 %v1727, %v1946
      %v1983 = vadd.f32 %v1728, %v1951
      %v1984 = vadd.f32 %v1729, %v1954
      %v1985 = vadd.f32 %v1730, %v1959
      %v1986 = vadd.f32 %v1731, %v1962
      %v1987 = vadd.f32 %v1732, %v1967
      %v1988 = vadd.f32 %v1733, %v1970
      %v1989 = vld [vmem:[%s165 + $0x10] sm:$0x8]
      %s1990 = scalar_lea.vmem %s1, 256
      %v1991 = vld [vmem:[%s1990] sm:$0xf]
      %v1992 = vld [vmem:[%s1990 + $0x4] sm:$0xf]
      %v1993 = vld [vmem:[%s1990 + $0x8] sm:$0xf]
      %v1994 = vld [vmem:[%s1990 + $0xc] sm:$0xf]
      %v1995 = vld [vmem:[%s1990 + $0x10] sm:$0xf]
      %v1996 = vld [vmem:[%s1990 + $0x14] sm:$0xf]
      %v1997 = vld [vmem:[%s1990 + $0x18] sm:$0xf]
      %v1998 = vld [vmem:[%s1990 + $0x1c] sm:$0xf]
      %v2000 = vunpack.c.l.b16 %v1989
      %v2001 = vpack.c.b16 %v1531, %v2000
      %vm2002 = vcmask 1044480
      %v2003 = vrot.slane %v2001, 3
      %v2004 = vrot.slane %v1548, 3
      %v2005 = vsel %vm2002, %v2003, %v2004
      %v2006 = vrot.slane %v1549, 3
      %v2007 = vsel %vm2002, %v2004, %v2006
      %v2008 = vrot.slane %v1550, 3
      %v2009 = vsel %vm2002, %v2006, %v2008
      %v2010 = vrot.slane %v1551, 3
      %v2011 = vsel %vm2002, %v2008, %v2010
      %v2012 = vrot.slane %v1552, 3
      %v2013 = vsel %vm2002, %v2010, %v2012
      %v2014 = vrot.slane %v1553, 3
      %v2015 = vsel %vm2002, %v2012, %v2014
      %v2016 = vrot.slane %v1554, 3
      %v2017 = vsel %vm2002, %v2014, %v2016
      %v2018 = vrot.slane %v1746, 3
      %v2019 = vsel %vm2002, %v2016, %v2018
      %v2028 = vunpack.c.l.b16 %v1991
      %v2029 = vunpack.c.l.b16 %v1992
      %v2030 = vunpack.c.l.b16 %v1993
      %v2031 = vunpack.c.l.b16 %v1994
      %v2032 = vunpack.c.l.b16 %v1995
      %v2033 = vunpack.c.l.b16 %v1996
      %v2034 = vunpack.c.l.b16 %v1997
      %v2035 = vunpack.c.l.b16 %v1998
      %v2036 = vpack.c.b16 %v2029, %v2028
      %v2037 = vpack.c.b16 %v2031, %v2030
      %v2038 = vpack.c.b16 %v2033, %v2032
      %v2039 = vpack.c.b16 %v2035, %v2034
      %v2045 = vsel %vm342, %v2005, 0
      %v2048 = vsel %vm342, %v2007, 0
      %v2051 = vsel %vm342, %v2009, 0
      %v2054 = vsel %vm342, %v2011, 0
      %v2057 = vsel %vm342, %v2013, 0
      %v2060 = vsel %vm342, %v2015, 0
      %v2063 = vsel %vm342, %v2017, 0
      %v2066 = vsel %vm342, %v2019, 0
      %2068 = vmatprep.subr.bf16.mxu0 0
      %2069 = vmatpush1.bf16.msra.mxu0 %v2036
      %2070 = vmatprep.subr.bf16.mxu0 0
      %2071 = vmatpush1.bf16.msra.mxu0 %v2037
      %2072 = vmatprep.subr.bf16.mxu0 0
      %2073 = vmatpush1.bf16.msra.mxu0 %v2038
      %2074 = vmatprep.subr.bf16.mxu0 0
      %2075 = vmatpush1.bf16.msra.mxu0 %v2039
      %2076 = vmatprep.subr.bf16.mxu0 0
      %2077 = vmatpush1.bf16.msra.mxu0 0
      %2078 = vmatprep.subr.bf16.mxu0 0
      %2079 = vmatpush1.bf16.msra.mxu0 0
      %2080 = vmatprep.subr.bf16.mxu0 0
      %2081 = vmatpush1.bf16.msra.mxu0 0
      %2082 = vmatprep.subr.bf16.mxu0 0
      %2083 = vmatpush1.bf16.msra.mxu0 0
      %2084 = vmatprep.subr.bf16.mxu0 0
      %2085 = vmatpush1.bf16.msra.mxu0 0
      %2086 = vmatprep.subr.bf16.mxu0 0
      %2087 = vmatpush1.bf16.msra.mxu0 0
      %2088 = vmatprep.subr.bf16.mxu0 0
      %2089 = vmatpush1.bf16.msra.mxu0 0
      %2090 = vmatprep.subr.bf16.mxu0 0
      %2091 = vmatpush1.bf16.msra.mxu0 0
      %2092 = vmatprep.subr.bf16.mxu0 0
      %2093 = vmatpush1.bf16.msra.mxu0 0
      %2094 = vmatprep.subr.bf16.mxu0 0
      %2095 = vmatpush1.bf16.msra.mxu0 0
      %2096 = vmatprep.subr.bf16.mxu0 0
      %2097 = vmatpush1.bf16.msra.mxu0 0
      %2098 = vmatprep.subr.bf16.mxu0 0
      %2099 = vmatpush1.bf16.msra.mxu0 0
      %2100 = vmatprep.mubr.bf16.mxu0 0
      %2101 = vmatmul.mubr.bf16.gmra.mrb[0].mxu0 %v2045
      %v2102 = vpop.f32.mrb[0].mxu0
      %v2103 = vadd.f32 0.0, %v2102
      %v2104 = vpop.f32.mrb[0].mxu0
      %v2105 = vpop.f32.mrb[0].mxu0
      %v2106 = vadd.f32 0.0, %v2105
      %v2107 = vpop.f32.mrb[0].mxu0
      %2108 = vmatprep.mubr.bf16.mxu0 0
      %2109 = vmatmul.mubr.bf16.gmra.mrb[0].mxu0 %v2048
      %v2110 = vpop.f32.mrb[0].mxu0
      %v2111 = vadd.f32 0.0, %v2110
      %v2112 = vpop.f32.mrb[0].mxu0
      %v2113 = vpop.f32.mrb[0].mxu0
      %v2114 = vadd.f32 0.0, %v2113
      %v2115 = vpop.f32.mrb[0].mxu0
      %2116 = vmatprep.mubr.bf16.mxu0 0
      %2117 = vmatmul.mubr.bf16.gmra.mrb[0].mxu0 %v2051
      %v2118 = vpop.f32.mrb[0].mxu0
      %v2119 = vadd.f32 0.0, %v2118
      %v2120 = vpop.f32.mrb[0].mxu0
      %v2121 = vpop.f32.mrb[0].mxu0
      %v2122 = vadd.f32 0.0, %v2121
      %v2123 = vpop.f32.mrb[0].mxu0
      %2124 = vmatprep.mubr.bf16.mxu0 0
      %2125 = vmatmul.mubr.bf16.gmra.mrb[0].mxu0 %v2054
      %v2126 = vpop.f32.mrb[0].mxu0
      %v2127 = vadd.f32 0.0, %v2126
      %v2128 = vpop.f32.mrb[0].mxu0
      %v2129 = vpop.f32.mrb[0].mxu0
      %v2130 = vadd.f32 0.0, %v2129
      %v2131 = vpop.f32.mrb[0].mxu0
      %2132 = vmatprep.mubr.bf16.mxu0 0
      %2133 = vmatmul.mubr.bf16.gmra.mrb[0].mxu0 %v2057
      %v2134 = vpop.f32.mrb[0].mxu0
      %v2135 = vadd.f32 0.0, %v2134
      %v2136 = vpop.f32.mrb[0].mxu0
      %v2137 = vpop.f32.mrb[0].mxu0
      %v2138 = vadd.f32 0.0, %v2137
      %v2139 = vpop.f32.mrb[0].mxu0
      %2140 = vmatprep.mubr.bf16.mxu0 0
      %2141 = vmatmul.mubr.bf16.gmra.mrb[0].mxu0 %v2060
      %v2142 = vpop.f32.mrb[0].mxu0
      %v2143 = vadd.f32 0.0, %v2142
      %v2144 = vpop.f32.mrb[0].mxu0
      %v2145 = vpop.f32.mrb[0].mxu0
      %v2146 = vadd.f32 0.0, %v2145
      %v2147 = vpop.f32.mrb[0].mxu0
      %2148 = vmatprep.mubr.bf16.mxu0 0
      %2149 = vmatmul.mubr.bf16.gmra.mrb[0].mxu0 %v2063
      %v2150 = vpop.f32.mrb[0].mxu0
      %v2151 = vadd.f32 0.0, %v2150
      %v2152 = vpop.f32.mrb[0].mxu0
      %v2153 = vpop.f32.mrb[0].mxu0
      %v2154 = vadd.f32 0.0, %v2153
      %v2155 = vpop.f32.mrb[0].mxu0
      %2156 = vmatprep.mubr.bf16.mxu0 0
      %2157 = vmatmul.mubr.bf16.gmra.mrb[0].mxu0 %v2066
      %v2158 = vpop.f32.mrb[0].mxu0
      %v2159 = vadd.f32 0.0, %v2158
      %v2160 = vpop.f32.mrb[0].mxu0
      %v2161 = vpop.f32.mrb[0].mxu0
      %v2162 = vadd.f32 0.0, %v2161
      %v2163 = vpop.f32.mrb[0].mxu0
      %2164 = vdwg.mxu0
      %v2165 = vadd.f32 %v1973, %v2103
      %v2166 = vadd.f32 %v1974, %v2106
      %v2167 = vadd.f32 %v1975, %v2111
      %v2168 = vadd.f32 %v1976, %v2114
      %v2169 = vadd.f32 %v1977, %v2119
      %v2170 = vadd.f32 %v1978, %v2122
      %v2171 = vadd.f32 %v1979, %v2127
      %v2172 = vadd.f32 %v1980, %v2130
      %v2173 = vadd.f32 %v1981, %v2135
      %v2174 = vadd.f32 %v1982, %v2138
      %v2175 = vadd.f32 %v1983, %v2143
      %v2176 = vadd.f32 %v1984, %v2146
      %v2177 = vadd.f32 %v1985, %v2151
      %v2178 = vadd.f32 %v1986, %v2154
      %v2179 = vadd.f32 %v1987, %v2159
      %v2180 = vadd.f32 %v1988, %v2162
      %v2181 = vld [vmem:[%s2] sm:$0x1]
      %v2183 = vlaneseq
      %v2184 = vshrl.u32 %v2183, 7
      %v2185 = vsub.s32 0, %v2184
      %v2186 = vrot.slane %v2181, %v2185
      %v2188 = vadd.f32 %v2165, %v2186
      %v2189 = vadd.f32 %v2166, %v2186
      %v2190 = vadd.f32 %v2167, %v2186
      %v2191 = vadd.f32 %v2168, %v2186
      %v2192 = vadd.f32 %v2169, %v2186
      %v2193 = vadd.f32 %v2170, %v2186
      %v2194 = vadd.f32 %v2171, %v2186
      %v2195 = vadd.f32 %v2172, %v2186
      %v2196 = vadd.f32 %v2173, %v2186
      %v2197 = vadd.f32 %v2174, %v2186
      %v2198 = vadd.f32 %v2175, %v2186
      %v2199 = vadd.f32 %v2176, %v2186
      %v2200 = vadd.f32 %v2177, %v2186
      %v2201 = vadd.f32 %v2178, %v2186
      %v2202 = vadd.f32 %v2179, %v2186
      %v2203 = vadd.f32 %v2180, %v2186
      %v2204 = vmax.f32 %v2188, 0.0
      %v2205 = vmax.f32 %v2189, 0.0
      %v2206 = vmax.f32 %v2190, 0.0
      %v2207 = vmax.f32 %v2191, 0.0
      %v2208 = vmax.f32 %v2192, 0.0
      %v2209 = vmax.f32 %v2193, 0.0
      %v2210 = vmax.f32 %v2194, 0.0
      %v2211 = vmax.f32 %v2195, 0.0
      %v2212 = vmax.f32 %v2196, 0.0
      %v2213 = vmax.f32 %v2197, 0.0
      %v2214 = vmax.f32 %v2198, 0.0
      %v2215 = vmax.f32 %v2199, 0.0
      %v2216 = vmax.f32 %v2200, 0.0
      %v2217 = vmax.f32 %v2201, 0.0
      %v2218 = vmax.f32 %v2202, 0.0
      %v2219 = vmax.f32 %v2203, 0.0
      %2220 = vst.msk [vmem:[%s170] sm:$0xff] %vm342, %v2204
      %2221 = vst.msk [vmem:[%s170 + $0x8] sm:$0xff] %vm342, %v2205
      %2222 = vst.msk [vmem:[%s170 + $0x10] sm:$0xff] %vm342, %v2206
      %2223 = vst.msk [vmem:[%s170 + $0x18] sm:$0xff] %vm342, %v2207
      %2224 = vst.msk [vmem:[%s170 + $0x20] sm:$0xff] %vm342, %v2208
      %2225 = vst.msk [vmem:[%s170 + $0x28] sm:$0xff] %vm342, %v2209
      %2226 = vst.msk [vmem:[%s170 + $0x30] sm:$0xff] %vm342, %v2210
      %2227 = vst.msk [vmem:[%s170 + $0x38] sm:$0xff] %vm342, %v2211
      %2228 = vst.msk [vmem:[%s170 + $0x40] sm:$0xff] %vm342, %v2212
      %2229 = vst.msk [vmem:[%s170 + $0x48] sm:$0xff] %vm342, %v2213
      %2230 = vst.msk [vmem:[%s170 + $0x50] sm:$0xff] %vm342, %v2214
      %2231 = vst.msk [vmem:[%s170 + $0x58] sm:$0xff] %vm342, %v2215
      %2232 = vst.msk [vmem:[%s170 + $0x60] sm:$0xff] %vm342, %v2216
      %2233 = vst.msk [vmem:[%s170 + $0x68] sm:$0xff] %vm342, %v2217
      %2234 = vst.msk [vmem:[%s170 + $0x70] sm:$0xff] %vm342, %v2218
      %2235 = vst.msk [vmem:[%s170 + $0x78] sm:$0xff] %vm342, %v2219
      %p2236 = scmp.lt.s32.totalorder %s14, 5
      %s2237 = scalar_select %p2236, %s14, 5
      %s2238 = smul.addr %s2237, 16
      %s2239 = smul.addr %s2238, 8
      %s2240 = scalar_lea.vmem %s3, %s2239
      // Predicated region
      $region33: #{encoder_forward.4} parent=31 // pred_check
        %p2241 = pneg %p100
      $region34: #{encoder_forward.4} parent=31 // pred_check_branch
        %2243 = sbr.rel (%p2241) target = $region36
      $region35: #{encoder_forward.4} parent=31 // pred_region
        _
      $region36: #{encoder_forward.4} parent=31 // pred_fallthru
        _
    $region32: #{encoder_forward.4} parent=5 // pred_fallthru
      _
    %p2244 = scmp.le.s32.totalorder 2, %s9
    // Predicated region
    $region37: #{encoder_forward.4} parent=5 // pred_check
      %p2245 = pneg %p2244
    $region38: #{encoder_forward.4} parent=5 // pred_check_branch
      %2247 = sbr.rel (%p2245) target = $region40
    $region39: #{encoder_forward.4} parent=5 // pred_region
      %s2248 = ssub.s32 %s9, 2
      // Predicated region
      $region41: #{encoder_forward.4} parent=39 // pred_check
        %p2249 = pneg %p106
      $region42: #{encoder_forward.4} parent=39 // pred_check_branch
        %2251 = sbr.rel (%p2249) target = $region44
      $region43: #{encoder_forward.4} parent=39 // pred_region
        %p2252 = scmp.lt.s32.totalorder %s15, 5
        %s2253 = scalar_select %p2252, %s15, 5
        %s2254 = smul.addr %s2253, 16
        %s2255 = smul.addr %s2254, 8
        %s2256 = scalar_lea.vmem %s3, %s2255
      $region44: #{encoder_forward.4} parent=39 // pred_fallthru
        _
    $region40: #{encoder_forward.4} parent=5 // pred_fallthru
      _
  $region6: #{encoder_forward.4} parent=0 // loop_footer
    %s13 = sadd.s32 1, %s9
  $region7: #{encoder_forward.4} parent=0 // loop_footer_branch
    %8 = sbr.rel target = $region3
  $region8: #{encoder_forward.4} parent=0 // loop_exit
    _

// kernel: encoder_forward.5
$region0: #{encoder_forward.5}
  #allocation0 [shape = 'u32[]', space=smem, size = 0x4, offset = 0x4, fixed_abs, tag = 'smem constant byte address 0x4 - core index']
  #allocation1 [shape = 'u32[144,128]{1,0:T(1,128)}', space=vmem, size = 0x12000, scoped, tag = 'internal scratch']
  %s0 = inlined_call_operand.vmem [shape: bf16[6,166,64], index: 0, kind: input, shape index: {}]
  %s1 = inlined_call_operand.vmem [shape: bf16[9,64,32], index: 1, kind: input, shape index: {}]
  %s2 = inlined_call_operand.vmem [shape: f32[1,32], index: 2, kind: input, shape index: {}]
  %s3 = inlined_call_operand.vmem [shape: f32[6,128,32], index: 3, kind: output, shape index: {}]
  %s4 = sld [smem:[#allocation0]]
  $region45: #{encoder_forward.5} parent=0
    _
  %s6 = ssub.s32 1, %s4
  %s7 = scalar_select 0, %s6, %s4
  loop: start=0, step=1, limit=8
  $region2: #{encoder_forward.5} parent=0 // loop_pre_header
    _
  $region3: #{encoder_forward.5} parent=0 // loop_header
    %s9 = sphi 0, %s13
    %p10 = scmp.ge.s32.totalorder %s9, 8
    %s19 = sphi 0, %s21
    %s22 = sphi 0, %s19
    %s23 = sphi 0, %s22
    %s39 = sphi 0, %s23
    %s43 = sphi 0, %s43
    %s45 = sphi 0, %s43
    %s46 = sphi 0, %s45
    %s60 = sphi 0, %s46
    %s64 = sphi 0, %s64
    %s66 = sphi 0, %s64
    %s67 = sphi 0, %s66
    %s81 = sphi 0, %s67
    %s87 = sphi 0, %s89
    %s90 = sphi 0, %s87
    %s91 = sphi 0, %s90
    %s107 = sphi 0, %s91
  $region4: #{encoder_forward.5} parent=0 // loop_header_branch
    %12 = sbr.rel (%p10) target = $region8
  $region5: #{encoder_forward.5} parent=0 // loop_body
    %s14 = ssub.s32 %s9, 1
    %s15 = ssub.s32 %s9, 2
    %s16 = sadd.s32 %s9, 1
    %s17 = ssub.s32 %s9, %s16
    %p18 = scmp.eq.s32.totalorder %s17, 0
    %s20 = sadd.s32 %s19, 1
    %s21 = scalar_select %p18, %s19, %s20
    %p24 = pneg %p18
    %p25 = scmp.eq.s32.totalorder %s9, 5
    %p26 = por %p24, %p25
    %p27 = scmp.ne.s32.totalorder %s19, %s22
    %p28 = scmp.eq.s32.totalorder %s9, 0
    %p29 = por %p27, %p28
    %p30 = scmp.ne.s32.totalorder %s19, %s22
    %p31 = scmp.eq.s32.totalorder %s14, 5
    %p32 = por %p30, %p31
    %p33 = scmp.ne.s32.totalorder %s22, %s23
    %p34 = scmp.eq.s32.totalorder %s14, 0
    %p35 = por %p33, %p34
    %p36 = scmp.ne.s32.totalorder %s22, %s23
    %p37 = scmp.eq.s32.totalorder %s15, 5
    %p38 = por %p36, %p37
    %p40 = scmp.ne.s32.totalorder %s23, %s39
    %p41 = scmp.eq.s32.totalorder %s15, 0
    %p42 = por %p40, %p41
    %s44 = sadd.s32 %s43, 1
    %p47 = scmp.eq.s32.totalorder %s9, 5
    %p48 = scmp.ne.s32.totalorder %s43, %s45
    %p49 = scmp.eq.s32.totalorder %s9, 0
    %p50 = por %p48, %p49
    %p51 = scmp.ne.s32.totalorder %s43, %s45
    %p52 = scmp.eq.s32.totalorder %s14, 5
    %p53 = por %p51, %p52
    %p54 = scmp.ne.s32.totalorder %s45, %s46
    %p55 = scmp.eq.s32.totalorder %s14, 0
    %p56 = por %p54, %p55
    %p57 = scmp.ne.s32.totalorder %s45, %s46
    %p58 = scmp.eq.s32.totalorder %s15, 5
    %p59 = por %p57, %p58
    %p61 = scmp.ne.s32.totalorder %s46, %s60
    %p62 = scmp.eq.s32.totalorder %s15, 0
    %p63 = por %p61, %p62
    %s65 = sadd.s32 %s64, 1
    %p68 = scmp.eq.s32.totalorder %s9, 5
    %p69 = scmp.ne.s32.totalorder %s64, %s66
    %p70 = scmp.eq.s32.totalorder %s9, 0
    %p71 = por %p69, %p70
    %p72 = scmp.ne.s32.totalorder %s64, %s66
    %p73 = scmp.eq.s32.totalorder %s14, 5
    %p74 = por %p72, %p73
    %p75 = scmp.ne.s32.totalorder %s66, %s67
    %p76 = scmp.eq.s32.totalorder %s14, 0
    %p77 = por %p75, %p76
    %p78 = scmp.ne.s32.totalorder %s66, %s67
    %p79 = scmp.eq.s32.totalorder %s15, 5
    %p80 = por %p78, %p79
    %p82 = scmp.ne.s32.totalorder %s67, %s81
    %p83 = scmp.eq.s32.totalorder %s15, 0
    %p84 = por %p82, %p83
    %s85 = ssub.s32 %s9, %s16
    %p86 = scmp.eq.s32.totalorder %s85, 0
    %s88 = sadd.s32 %s87, 1
    %s89 = scalar_select %p86, %s87, %s88
    %p92 = pneg %p86
    %p93 = scmp.eq.s32.totalorder %s9, 5
    %p94 = por %p92, %p93
    %p95 = scmp.ne.s32.totalorder %s87, %s90
    %p96 = scmp.eq.s32.totalorder %s9, 0
    %p97 = por %p95, %p96
    %p98 = scmp.ne.s32.totalorder %s87, %s90
    %p99 = scmp.eq.s32.totalorder %s14, 5
    %p100 = por %p98, %p99
    %p101 = scmp.ne.s32.totalorder %s90, %s91
    %p102 = scmp.eq.s32.totalorder %s14, 0
    %p103 = por %p101, %p102
    %p104 = scmp.ne.s32.totalorder %s90, %s91
    %p105 = scmp.eq.s32.totalorder %s15, 5
    %p106 = por %p104, %p105
    %p108 = scmp.ne.s32.totalorder %s91, %s107
    %p109 = scmp.eq.s32.totalorder %s15, 0
    %p110 = por %p108, %p109
    %p111 = scmp.le.s32.totalorder 1, %s9
    %p112 = scmp.lt.s32.totalorder %s9, 7
    %p113 = pnand %p111, %p112
    %p114 = pneg %p113
    // Predicated region
    $region9: #{encoder_forward.5} parent=5 // pred_check
      _
    $region10: #{encoder_forward.5} parent=5 // pred_check_branch
      %116 = sbr.rel (%p113) target = $region12
    $region11: #{encoder_forward.5} parent=5 // pred_region
      %s117 = ssub.s32 %s9, 1
      // Predicated region
      $region13: #{encoder_forward.5} parent=11 // pred_check
        %p118 = pneg %p56
      $region14: #{encoder_forward.5} parent=11 // pred_check_branch
        %120 = sbr.rel (%p118) target = $region16
      $region15: #{encoder_forward.5} parent=11 // pred_region
        _
      $region16: #{encoder_forward.5} parent=11 // pred_fallthru
        _
      // Predicated region
      $region17: #{encoder_forward.5} parent=11 // pred_check
        %p121 = pneg %p77
      $region18: #{encoder_forward.5} parent=11 // pred_check_branch
        %123 = sbr.rel (%p121) target = $region20
      $region19: #{encoder_forward.5} parent=11 // pred_region
        _
      $region20: #{encoder_forward.5} parent=11 // pred_fallthru
        _
    $region12: #{encoder_forward.5} parent=5 // pred_fallthru
      _
    %p124 = scmp.lt.s32.totalorder %s9, 6
    // Predicated region
    $region21: #{encoder_forward.5} parent=5 // pred_check
      %p125 = pneg %p124
    $region22: #{encoder_forward.5} parent=5 // pred_check_branch
      %127 = sbr.rel (%p125) target = $region24
    $region23: #{encoder_forward.5} parent=5 // pred_region
      // Predicated region
      $region25: #{encoder_forward.5} parent=23 // pred_check
        %p128 = pneg %p29
      $region26: #{encoder_forward.5} parent=23 // pred_check_branch
        %130 = sbr.rel (%p128) target = $region28
      $region27: #{encoder_forward.5} parent=23 // pred_region
        %p131 = scmp.lt.s32.totalorder %s9, 5
        %s132 = scalar_select %p131, %s9, 5
        %s133 = smul.addr %s132, 21
        %s134 = smul.addr %s133, 4
        %s135 = scalar_lea.vmem %s0, %s134
      $region28: #{encoder_forward.5} parent=23 // pred_fallthru
        _
    $region24: #{encoder_forward.5} parent=5 // pred_fallthru
      _
    %p136 = scmp.le.s32.totalorder 1, %s9
    %p137 = scmp.lt.s32.totalorder %s9, 7
    %p138 = pnand %p136, %p137
    %p139 = pneg %p138
    // Predicated region
    $region29: #{encoder_forward.5} parent=5 // pred_check
      _
    $region30: #{encoder_forward.5} parent=5 // pred_check_branch
      %141 = sbr.rel (%p138) target = $region32
    $region31: #{encoder_forward.5} parent=5 // pred_region
      %s142 = ssub.s32 %s9, 1
      %p143 = scmp.lt.s32.totalorder %s14, 5
      %s144 = scalar_select %p143, %s14, 5
      %s145 = smul.addr %s144, 21
      %s146 = smul.addr %s145, 4
      %s147 = scalar_lea.vmem %s0, %s146
      %p148 = pneg %p35
      %p149 = pneg %p32
      %p150 = pneg %p56
      %p151 = pneg %p53
      %p152 = pneg %p77
      %p153 = pneg %p74
      %p154 = pneg %p103
      %p155 = pneg %p100
      %p156 = scmp.lt.s32.totalorder %s14, 5
      %s157 = scalar_select %p156, %s14, 5
      %s158 = smul.addr %s157, 16
      %s159 = smul.addr %s158, 8
      %s160 = scalar_lea.vmem %s3, %s159
      %p161 = scmp.lt.s32.totalorder %s14, 5
      %s162 = scalar_select %p161, %s14, 5
      %s163 = smul.addr %s162, 21
      %s164 = smul.addr %s163, 4
      %s165 = scalar_lea.vmem %s0, %s164
      %p166 = scmp.lt.s32.totalorder %s14, 5
      %s167 = scalar_select %p166, %s14, 5
      %s168 = smul.addr %s167, 16
      %s169 = smul.addr %s168, 8
      %s170 = scalar_lea.vmem %s3, %s169
      %v172 = vld [vmem:[%s165] sm:$0xf]
      %v173 = vld [vmem:[%s165 + $0x4] sm:$0xf]
      %v174 = vld [vmem:[%s165 + $0x8] sm:$0xf]
      %v175 = vld [vmem:[%s165 + $0xc] sm:$0xf]
      %v176 = vld [vmem:[%s165 + $0x10] sm:$0xf]
      %v177 = vld [vmem:[%s165 + $0x14] sm:$0xf]
      %v178 = vld [vmem:[%s165 + $0x18] sm:$0xf]
      %v179 = vld [vmem:[%s165 + $0x1c] sm:$0xf]
      %v180 = vld [vmem:[%s165 + $0x20] sm:$0xf]
      %v181 = vld [vmem:[%s165 + $0x24] sm:$0xf]
      %v182 = vld [vmem:[%s165 + $0x28] sm:$0xf]
      %v183 = vld [vmem:[%s165 + $0x2c] sm:$0xf]
      %v184 = vld [vmem:[%s165 + $0x30] sm:$0xf]
      %v185 = vld [vmem:[%s165 + $0x34] sm:$0xf]
      %v186 = vld [vmem:[%s165 + $0x38] sm:$0xf]
      %v187 = vld [vmem:[%s165 + $0x3c] sm:$0xf]
      %v188 = vld [vmem:[%s1] sm:$0xf]
      %v189 = vld [vmem:[%s1 + $0x4] sm:$0xf]
      %v190 = vld [vmem:[%s1 + $0x8] sm:$0xf]
      %v191 = vld [vmem:[%s1 + $0xc] sm:$0xf]
      %v192 = vld [vmem:[%s1 + $0x10] sm:$0xf]
      %v193 = vld [vmem:[%s1 + $0x14] sm:$0xf]
      %v194 = vld [vmem:[%s1 + $0x18] sm:$0xf]
      %v195 = vld [vmem:[%s1 + $0x1c] sm:$0xf]
      %v196 = vld [vmem:[%s165 + $0x40] sm:$0x1]
      %s197 = scalar_lea.vmem %s1, 32
      %v198 = vld [vmem:[%s197] sm:$0xf]
      %v199 = vld [vmem:[%s197 + $0x4] sm:$0xf]
      %v200 = vld [vmem:[%s197 + $0x8] sm:$0xf]
      %v201 = vld [vmem:[%s197 + $0xc] sm:$0xf]
      %v202 = vld [vmem:[%s197 + $0x10] sm:$0xf]
      %v203 = vld [vmem:[%s197 + $0x14] sm:$0xf]
      %v204 = vld [vmem:[%s197 + $0x18] sm:$0xf]
      %v205 = vld [vmem:[%s197 + $0x1c] sm:$0xf]
      %v223 = vunpack.c.l.b16 %v172
      %v224 = vunpack.c.l.b16 %v173
      %v225 = vunpack.c.l.b16 %v174
      %v226 = vunpack.c.l.b16 %v175
      %v227 = vunpack.c.l.b16 %v176
      %v228 = vunpack.c.l.b16 %v177
      %v229 = vunpack.c.l.b16 %v178
      %v230 = vunpack.c.l.b16 %v179
      %v231 = vunpack.c.l.b16 %v180
      %v232 = vunpack.c.l.b16 %v181
      %v233 = vunpack.c.l.b16 %v182
      %v234 = vunpack.c.l.b16 %v183
      %v235 = vunpack.c.l.b16 %v184
      %v236 = vunpack.c.l.b16 %v185
      %v237 = vunpack.c.l.b16 %v186
      %v238 = vunpack.c.l.b16 %v187
      %v239 = vunpack.c.l.b16 %v196
      %v240 = vpack.c.b16 %v224, %v223
      %v241 = vpack.c.b16 %v226, %v225
      %v242 = vpack.c.b16 %v228, %v227
      %v243 = vpack.c.b16 %v230, %v229
      %v244 = vpack.c.b16 %v232, %v231
      %v245 = vpack.c.b16 %v234, %v233
      %v246 = vpack.c.b16 %v236, %v235
      %v247 = vpack.c.b16 %v238, %v237
      %v248 = vpack.c.b16 %v239, %v239
      %vm249 = vsmask.f32 7424
      %v251 = vshrl.u32 %v240, 16
      %v253 = vshll.u32 %v240, 16
      %v255 = vrot.slane %v253, 1
      %v256 = vor.u32 %v251, %v255
      %v258 = vshll.u32 %v241, 16
      %v260 = vrot.slane %v258, 1
      %v261 = vsel %vm249, %v256, %v260
      %v262 = vshrl.u32 %v241, 16
      %v264 = vor.u32 %v262, %v260
      %v266 = vshll.u32 %v242, 16
      %v268 = vrot.slane %v266, 1
      %v269 = vsel %vm249, %v264, %v268
      %v270 = vshrl.u32 %v242, 16
      %v272 = vor.u32 %v270, %v268
      %v274 = vshll.u32 %v243, 16
      %v276 = vrot.slane %v274, 1
      %v277 = vsel %vm249, %v272, %v276
      %v278 = vshrl.u32 %v243, 16
      %v280 = vor.u32 %v278, %v276
      %v282 = vshll.u32 %v244, 16
      %v284 = vrot.slane %v282, 1
      %v285 = vsel %vm249, %v280, %v284
      %v286 = vshrl.u32 %v244, 16
      %v288 = vor.u32 %v286, %v284
      %v290 = vshll.u32 %v245, 16
      %v292 = vrot.slane %v290, 1
      %v293 = vsel %vm249, %v288, %v292
      %v294 = vshrl.u32 %v245, 16
      %v296 = vor.u32 %v294, %v292
      %v298 = vshll.u32 %v246, 16
      %v300 = vrot.slane %v298, 1
      %v301 = vsel %vm249, %v296, %v300
      %v302 = vshrl.u32 %v246, 16
      %v304 = vor.u32 %v302, %v300
      %v306 = vshll.u32 %v247, 16
      %v308 = vrot.slane %v306, 1
      %v309 = vsel %vm249, %v304, %v308
      %v310 = vshrl.u32 %v247, 16
      %v312 = vor.u32 %v310, %v308
      %v314 = vshll.u32 %v248, 16
      %v316 = vrot.slane %v314, 1
      %v317 = vsel %vm249, %v312, %v316
      %v326 = vunpack.c.l.b16 %v198
      %v327 = vunpack.c.l.b16 %v199
      %v328 = vunpack.c.l.b16 %v200
      %v329 = vunpack.c.l.b16 %v201
      %v330 = vunpack.c.l.b16 %v202
      %v331 = vunpack.c.l.b16 %v203
      %v332 = vunpack.c.l.b16 %v204
      %v333 = vunpack.c.l.b16 %v205
      %v334 = vpack.c.b16 %v327, %v326
      %v335 = vpack.c.b16 %v329, %v328
      %v336 = vpack.c.b16 %v331, %v330
      %v337 = vpack.c.b16 %v333, %v332
      %vm342 = vcmask 523264
      %v344 = vsel %vm342, %v261, 0
      %v347 = vsel %vm342, %v269, 0
      %v350 = vsel %vm342, %v277, 0
      %v353 = vsel %vm342, %v285, 0
      %v356 = vsel %vm342, %v293, 0
      %v359 = vsel %vm342, %v301, 0
      %v362 = vsel %vm342, %v309, 0
      %v365 = vsel %vm342, %v317, 0
      %367 = vmatprep.subr.bf16.mxu0 0
      %368 = vmatpush1.bf16.msra.mxu0 %v334
      %369 = vmatprep.subr.bf16.mxu0 0
      %370 = vmatpush1.bf16.msra.mxu0 %v335
      %371 = vmatprep.subr.bf16.mxu0 0
      %372 = vmatpush1.bf16.msra.mxu0 %v336
      %373 = vmatprep.subr.bf16.mxu0 0
      %374 = vmatpush1.bf16.msra.mxu0 %v337
      %375 = vmatprep.subr.bf16.mxu0 0
      %376 = vmatpush1.bf16.msra.mxu0 0
      %377 = vmatprep.subr.bf16.mxu0 0
      %378 = vmatpush1.bf16.msra.mxu0 0
      %379 = vmatprep.subr.bf16.mxu0 0
      %380 = vmatpush1.bf16.msra.mxu0 0
      %381 = vmatprep.subr.bf16.mxu0 0
      %382 = vmatpush1.bf16.msra.mxu0 0
      %383 = vmatprep.subr.bf16.mxu0 0
      %384 = vmatpush1.bf16.msra.mxu0 0
      %385 = vmatprep.subr.bf16.mxu0 0
      %386 = vmatpush1.bf16.msra.mxu0 0
      %387 = vmatprep.subr.bf16.mxu0 0
      %388 = vmatpush1.bf16.msra.mxu0 0
      %389 = vmatprep.subr.bf16.mxu0 0
      %390 = vmatpush1.bf16.msra.mxu0 0
      %391 = vmatprep.subr.bf16.mxu0 0
      %392 = vmatpush1.bf16.msra.mxu0 0
      %393 = vmatprep.subr.bf16.mxu0 0
      %394 = vmatpush1.bf16.msra.mxu0 0
      %395 = vmatprep.subr.bf16.mxu0 0
      %396 = vmatpush1.bf16.msra.mxu0 0
      %397 = vmatprep.subr.bf16.mxu0 0
      %398 = vmatpush1.bf16.msra.mxu0 0
      %399 = vmatprep.mubr.bf16.mxu0 0
      %400 = vmatmul.mubr.bf16.gmra.mrb[0].mxu0 %v344
      %v401 = vpop.f32.mrb[0].mxu0
      %v402 = vadd.f32 0.0, %v401
      %v403 = vpop.f32.mrb[0].mxu0
      %v404 = vpop.f32.mrb[0].mxu0
      %v405 = vadd.f32 0.0, %v404
      %v406 = vpop.f32.mrb[0].mxu0
      %407 = vmatprep.mubr.bf16.mxu0 0
      %408 = vmatmul.mubr.bf16.gmra.mrb[0].mxu0 %v347
      %v409 = vpop.f32.mrb[0].mxu0
      %v410 = vadd.f32 0.0, %v409
      %v411 = vpop.f32.mrb[0].mxu0
      %v412 = vpop.f32.mrb[0].mxu0
      %v413 = vadd.f32 0.0, %v412
      %v414 = vpop.f32.mrb[0].mxu0
      %415 = vmatprep.mubr.bf16.mxu0 0
      %416 = vmatmul.mubr.bf16.gmra.mrb[0].mxu0 %v350
      %v417 = vpop.f32.mrb[0].mxu0
      %v418 = vadd.f32 0.0, %v417
      %v419 = vpop.f32.mrb[0].mxu0
      %v420 = vpop.f32.mrb[0].mxu0
      %v421 = vadd.f32 0.0, %v420
      %v422 = vpop.f32.mrb[0].mxu0
      %423 = vmatprep.mubr.bf16.mxu0 0
      %424 = vmatmul.mubr.bf16.gmra.mrb[0].mxu0 %v353
      %v425 = vpop.f32.mrb[0].mxu0
      %v426 = vadd.f32 0.0, %v425
      %v427 = vpop.f32.mrb[0].mxu0
      %v428 = vpop.f32.mrb[0].mxu0
      %v429 = vadd.f32 0.0, %v428
      %v430 = vpop.f32.mrb[0].mxu0
      %431 = vmatprep.mubr.bf16.mxu0 0
      %432 = vmatmul.mubr.bf16.gmra.mrb[0].mxu0 %v356
      %v433 = vpop.f32.mrb[0].mxu0
      %v434 = vadd.f32 0.0, %v433
      %v435 = vpop.f32.mrb[0].mxu0
      %v436 = vpop.f32.mrb[0].mxu0
      %v437 = vadd.f32 0.0, %v436
      %v438 = vpop.f32.mrb[0].mxu0
      %439 = vmatprep.mubr.bf16.mxu0 0
      %440 = vmatmul.mubr.bf16.gmra.mrb[0].mxu0 %v359
      %v441 = vpop.f32.mrb[0].mxu0
      %v442 = vadd.f32 0.0, %v441
      %v443 = vpop.f32.mrb[0].mxu0
      %v444 = vpop.f32.mrb[0].mxu0
      %v445 = vadd.f32 0.0, %v444
      %v446 = vpop.f32.mrb[0].mxu0
      %447 = vmatprep.mubr.bf16.mxu0 0
      %448 = vmatmul.mubr.bf16.gmra.mrb[0].mxu0 %v362
      %v449 = vpop.f32.mrb[0].mxu0
      %v450 = vadd.f32 0.0, %v449
      %v451 = vpop.f32.mrb[0].mxu0
      %v452 = vpop.f32.mrb[0].mxu0
      %v453 = vadd.f32 0.0, %v452
      %v454 = vpop.f32.mrb[0].mxu0
      %455 = vmatprep.mubr.bf16.mxu0 0
      %456 = vmatmul.mubr.bf16.gmra.mrb[0].mxu0 %v365
      %v457 = vpop.f32.mrb[0].mxu0
      %v458 = vadd.f32 0.0, %v457
      %v459 = vpop.f32.mrb[0].mxu0
      %v460 = vpop.f32.mrb[0].mxu0
      %v461 = vadd.f32 0.0, %v460
      %v462 = vpop.f32.mrb[0].mxu0
      %463 = vdwg.mxu0
      %v472 = vunpack.c.l.b16 %v188
      %v473 = vunpack.c.l.b16 %v189
      %v474 = vunpack.c.l.b16 %v190
      %v475 = vunpack.c.l.b16 %v191
      %v476 = vunpack.c.l.b16 %v192
      %v477 = vunpack.c.l.b16 %v193
      %v478 = vunpack.c.l.b16 %v194
      %v479 = vunpack.c.l.b16 %v195
      %v480 = vpack.c.b16 %v473, %v472
      %v481 = vpack.c.b16 %v475, %v474
      %v482 = vpack.c.b16 %v477, %v476
      %v483 = vpack.c.b16 %v479, %v478
      %v488 = vsel %vm342, %v240, 0
      %v490 = vsel %vm342, %v241, 0
      %v492 = vsel %vm342, %v242, 0
      %v494 = vsel %vm342, %v243, 0
      %v496 = vsel %vm342, %v244, 0
      %v498 = vsel %vm342, %v245, 0
      %v500 = vsel %vm342, %v246, 0
      %v502 = vsel %vm342, %v247, 0
      %504 = vmatprep.subr.bf16.mxu0 0
      %505 = vmatpush1.bf16.msra.mxu0 %v480
      %506 = vmatprep.subr.bf16.mxu0 0
      %507 = vmatpush1.bf16.msra.mxu0 %v481
      %508 = vmatprep.subr.bf16.mxu0 0
      %509 = vmatpush1.bf16.msra.mxu0 %v482
      %510 = vmatprep.subr.bf16.mxu0 0
      %511 = vmatpush1.bf16.msra.mxu0 %v483
      %512 = vmatprep.subr.bf16.mxu0 0
      %513 = vmatpush1.bf16.msra.mxu0 0
      %514 = vmatprep.subr.bf16.mxu0 0
      %515 = vmatpush1.bf16.msra.mxu0 0
      %516 = vmatprep.subr.bf16.mxu0 0
      %517 = vmatpush1.bf16.msra.mxu0 0
      %518 = vmatprep.subr.bf16.mxu0 0
      %519 = vmatpush1.bf16.msra.mxu0 0
      %520 = vmatprep.subr.bf16.mxu0 0
      %521 = vmatpush1.bf16.msra.mxu0 0
      %522 = vmatprep.subr.bf16.mxu0 0
      %523 = vmatpush1.bf16.msra.mxu0 0
      %524 = vmatprep.subr.bf16.mxu0 0
      %525 = vmatpush1.bf16.msra.mxu0 0
      %526 = vmatprep.subr.bf16.mxu0 0
      %527 = vmatpush1.bf16.msra.mxu0 0
      %528 = vmatprep.subr.bf16.mxu0 0
      %529 = vmatpush1.bf16.msra.mxu0 0
      %530 = vmatprep.subr.bf16.mxu0 0
      %531 = vmatpush1.bf16.msra.mxu0 0
      %532 = vmatprep.subr.bf16.mxu0 0
      %533 = vmatpush1.bf16.msra.mxu0 0
      %534 = vmatprep.subr.bf16.mxu0 0
      %535 = vmatpush1.bf16.msra.mxu0 0
      %536 = vmatprep.mubr.bf16.mxu0 0
      %537 = vmatmul.mubr.bf16.gmra.mrb[0].mxu0 %v488
      %v538 = vpop.f32.mrb[0].mxu0
      %v539 = vadd.f32 %v402, %v538
      %v540 = vpop.f32.mrb[0].mxu0
      %v541 = vpop.f32.mrb[0].mxu0
      %v542 = vadd.f32 %v405, %v541
      %v543 = vpop.f32.mrb[0].mxu0
      %544 = vmatprep.mubr.bf16.mxu0 0
      %545 = vmatmul.mubr.bf16.gmra.mrb[0].mxu0 %v490
      %v546 = vpop.f32.mrb[0].mxu0
      %v547 = vadd.f32 %v410, %v546
      %v548 = vpop.f32.mrb[0].mxu0
      %v549 = vpop.f32.mrb[0].mxu0
      %v550 = vadd.f32 %v413, %v549
      %v551 = vpop.f32.mrb[0].mxu0
      %552 = vmatprep.mubr.bf16.mxu0 0
      %553 = vmatmul.mubr.bf16.gmra.mrb[0].mxu0 %v492
      %v554 = vpop.f32.mrb[0].mxu0
      %v555 = vadd.f32 %v418, %v554
      %v556 = vpop.f32.mrb[0].mxu0
      %v557 = vpop.f32.mrb[0].mxu0
      %v558 = vadd.f32 %v421, %v557
      %v559 = vpop.f32.mrb[0].mxu0
      %560 = vmatprep.mubr.bf16.mxu0 0
      %561 = vmatmul.mubr.bf16.gmra.mrb[0].mxu0 %v494
      %v562 = vpop.f32.mrb[0].mxu0
      %v563 = vadd.f32 %v426, %v562
      %v564 = vpop.f32.mrb[0].mxu0
      %v565 = vpop.f32.mrb[0].mxu0
      %v566 = vadd.f32 %v429, %v565
      %v567 = vpop.f32.mrb[0].mxu0
      %568 = vmatprep.mubr.bf16.mxu0 0
      %569 = vmatmul.mubr.bf16.gmra.mrb[0].mxu0 %v496
      %v570 = vpop.f32.mrb[0].mxu0
      %v571 = vadd.f32 %v434, %v570
      %v572 = vpop.f32.mrb[0].mxu0
      %v573 = vpop.f32.mrb[0].mxu0
      %v574 = vadd.f32 %v437, %v573
      %v575 = vpop.f32.mrb[0].mxu0
      %576 = vmatprep.mubr.bf16.mxu0 0
      %577 = vmatmul.mubr.bf16.gmra.mrb[0].mxu0 %v498
      %v578 = vpop.f32.mrb[0].mxu0
      %v579 = vadd.f32 %v442, %v578
      %v580 = vpop.f32.mrb[0].mxu0
      %v581 = vpop.f32.mrb[0].mxu0
      %v582 = vadd.f32 %v445, %v581
      %v583 = vpop.f32.mrb[0].mxu0
      %584 = vmatprep.mubr.bf16.mxu0 0
      %585 = vmatmul.mubr.bf16.gmra.mrb[0].mxu0 %v500
      %v586 = vpop.f32.mrb[0].mxu0
      %v587 = vadd.f32 %v450, %v586
      %v588 = vpop.f32.mrb[0].mxu0
      %v589 = vpop.f32.mrb[0].mxu0
      %v590 = vadd.f32 %v453, %v589
      %v591 = vpop.f32.mrb[0].mxu0
      %592 = vmatprep.mubr.bf16.mxu0 0
      %593 = vmatmul.mubr.bf16.gmra.mrb[0].mxu0 %v502
      %v594 = vpop.f32.mrb[0].mxu0
      %v595 = vadd.f32 %v458, %v594
      %v596 = vpop.f32.mrb[0].mxu0
      %v597 = vpop.f32.mrb[0].mxu0
      %v598 = vadd.f32 %v461, %v597
      %v599 = vpop.f32.mrb[0].mxu0
      %600 = vdwg.mxu0
      %v601 = vld [vmem:[%s165] sm:$0xe]
      %s602 = scalar_lea.vmem %s1, 64
      %v603 = vld [vmem:[%s602] sm:$0xf]
      %v604 = vld [vmem:[%s602 + $0x4] sm:$0xf]
      %v605 = vld [vmem:[%s602 + $0x8] sm:$0xf]
      %v606 = vld [vmem:[%s602 + $0xc] sm:$0xf]
      %v607 = vld [vmem:[%s602 + $0x10] sm:$0xf]
      %v608 = vld [vmem:[%s602 + $0x14] sm:$0xf]
      %v609 = vld [vmem:[%s602 + $0x18] sm:$0xf]
      %v610 = vld [vmem:[%s602 + $0x1c] sm:$0xf]
      %v612 = vunpack.c.l.b16 %v601
      %v613 = vpack.c.b16 %v224, %v612
      %vm614 = vcmask 1046528
      %v615 = vrot.slane %v613, 1
      %v616 = vrot.slane %v241, 1
      %v617 = vsel %vm614, %v615, %v616
      %v618 = vrot.slane %v242, 1
      %v619 = vsel %vm614, %v616, %v618
      %v620 = vrot.slane %v243, 1
      %v621 = vsel %vm614, %v618, %v620
      %v622 = vrot.slane %v244, 1
      %v623 = vsel %vm614, %v620, %v622
      %v624 = vrot.slane %v245, 1
      %v625 = vsel %vm614, %v622, %v624
      %v626 = vrot.slane %v246, 1
      %v627 = vsel %vm614, %v624, %v626
      %v628 = vrot.slane %v247, 1
      %v629 = vsel %vm614, %v626, %v628
      %v630 = vrot.slane %v248, 1
      %v631 = vsel %vm614, %v628, %v630
      %v640 = vunpack.c.l.b16 %v603
      %v641 = vunpack.c.l.b16 %v604
      %v642 = vunpack.c.l.b16 %v605
      %v643 = vunpack.c.l.b16 %v606
      %v644 = vunpack.c.l.b16 %v607
      %v645 = vunpack.c.l.b16 %v608
      %v646 = vunpack.c.l.b16 %v609
      %v647 = vunpack.c.l.b16 %v610
      %v648 = vpack.c.b16 %v641, %v640
      %v649 = vpack.c.b16 %v643, %v642
      %v650 = vpack.c.b16 %v645, %v644
      %v651 = vpack.c.b16 %v647, %v646
      %v657 = vsel %vm342, %v617, 0
      %v660 = vsel %vm342, %v619, 0
      %v663 = vsel %vm342, %v621, 0
      %v666 = vsel %vm342, %v623, 0
      %v669 = vsel %vm342, %v625, 0
      %v672 = vsel %vm342, %v627, 0
      %v675 = vsel %vm342, %v629, 0
      %v678 = vsel %vm342, %v631, 0
      %680 = vmatprep.subr.bf16.mxu0 0
      %681 = vmatpush1.bf16.msra.mxu0 %v648
      %682 = vmatprep.subr.bf16.mxu0 0
      %683 = vmatpush1.bf16.msra.mxu0 %v649
      %684 = vmatprep.subr.bf16.mxu0 0
      %685 = vmatpush1.bf16.msra.mxu0 %v650
      %686 = vmatprep.subr.bf16.mxu0 0
      %687 = vmatpush1.bf16.msra.mxu0 %v651
      %688 = vmatprep.subr.bf16.mxu0 0
      %689 = vmatpush1.bf16.msra.mxu0 0
      %690 = vmatprep.subr.bf16.mxu0 0
      %691 = vmatpush1.bf16.msra.mxu0 0
      %692 = vmatprep.subr.bf16.mxu0 0
      %693 = vmatpush1.bf16.msra.mxu0 0
      %694 = vmatprep.subr.bf16.mxu0 0
      %695 = vmatpush1.bf16.msra.mxu0 0
      %696 = vmatprep.subr.bf16.mxu0 0
      %697 = vmatpush1.bf16.msra.mxu0 0
      %698 = vmatprep.subr.bf16.mxu0 0
      %699 = vmatpush1.bf16.msra.mxu0 0
      %700 = vmatprep.subr.bf16.mxu0 0
      %701 = vmatpush1.bf16.msra.mxu0 0
      %702 = vmatprep.subr.bf16.mxu0 0
      %703 = vmatpush1.bf16.msra.mxu0 0
      %704 = vmatprep.subr.bf16.mxu0 0
      %705 = vmatpush1.bf16.msra.mxu0 0
      %706 = vmatprep.subr.bf16.mxu0 0
      %707 = vmatpush1.bf16.msra.mxu0 0
      %708 = vmatprep.subr.bf16.mxu0 0
      %709 = vmatpush1.bf16.msra.mxu0 0
      %710 = vmatprep.subr.bf16.mxu0 0
      %711 = vmatpush1.bf16.msra.mxu0 0
      %712 = vmatprep.mubr.bf16.mxu0 0
      %713 = vmatmul.mubr.bf16.gmra.mrb[0].mxu0 %v657
      %v714 = vpop.f32.mrb[0].mxu0
      %v715 = vadd.f32 0.0, %v714
      %v716 = vpop.f32.mrb[0].mxu0
      %v717 = vpop.f32.mrb[0].mxu0
      %v718 = vadd.f32 0.0, %v717
      %v719 = vpop.f32.mrb[0].mxu0
      %720 = vmatprep.mubr.bf16.mxu0 0
      %721 = vmatmul.mubr.bf16.gmra.mrb[0].mxu0 %v660
      %v722 = vpop.f32.mrb[0].mxu0
      %v723 = vadd.f32 0.0, %v722
      %v724 = vpop.f32.mrb[0].mxu0
      %v725 = vpop.f32.mrb[0].mxu0
      %v726 = vadd.f32 0.0, %v725
      %v727 = vpop.f32.mrb[0].mxu0
      %728 = vmatprep.mubr.bf16.mxu0 0
      %729 = vmatmul.mubr.bf16.gmra.mrb[0].mxu0 %v663
      %v730 = vpop.f32.mrb[0].mxu0
      %v731 = vadd.f32 0.0, %v730
      %v732 = vpop.f32.mrb[0].mxu0
      %v733 = vpop.f32.mrb[0].mxu0
      %v734 = vadd.f32 0.0, %v733
      %v735 = vpop.f32.mrb[0].mxu0
      %736 = vmatprep.mubr.bf16.mxu0 0
      %737 = vmatmul.mubr.bf16.gmra.mrb[0].mxu0 %v666
      %v738 = vpop.f32.mrb[0].mxu0
      %v739 = vadd.f32 0.0, %v738
      %v740 = vpop.f32.mrb[0].mxu0
      %v741 = vpop.f32.mrb[0].mxu0
      %v742 = vadd.f32 0.0, %v741
      %v743 = vpop.f32.mrb[0].mxu0
      %744 = vmatprep.mubr.bf16.mxu0 0
      %745 = vmatmul.mubr.bf16.gmra.mrb[0].mxu0 %v669
      %v746 = vpop.f32.mrb[0].mxu0
      %v747 = vadd.f32 0.0, %v746
      %v748 = vpop.f32.mrb[0].mxu0
      %v749 = vpop.f32.mrb[0].mxu0
      %v750 = vadd.f32 0.0, %v749
      %v751 = vpop.f32.mrb[0].mxu0
      %752 = vmatprep.mubr.bf16.mxu0 0
      %753 = vmatmul.mubr.bf16.gmra.mrb[0].mxu0 %v672
      %v754 = vpop.f32.mrb[0].mxu0
      %v755 = vadd.f32 0.0, %v754
      %v756 = vpop.f32.mrb[0].mxu0
      %v757 = vpop.f32.mrb[0].mxu0
      %v758 = vadd.f32 0.0, %v757
      %v759 = vpop.f32.mrb[0].mxu0
      %760 = vmatprep.mubr.bf16.mxu0 0
      %761 = vmatmul.mubr.bf16.gmra.mrb[0].mxu0 %v675
      %v762 = vpop.f32.mrb[0].mxu0
      %v763 = vadd.f32 0.0, %v762
      %v764 = vpop.f32.mrb[0].mxu0
      %v765 = vpop.f32.mrb[0].mxu0
      %v766 = vadd.f32 0.0, %v765
      %v767 = vpop.f32.mrb[0].mxu0
      %768 = vmatprep.mubr.bf16.mxu0 0
      %769 = vmatmul.mubr.bf16.gmra.mrb[0].mxu0 %v678
      %v770 = vpop.f32.mrb[0].mxu0
      %v771 = vadd.f32 0.0, %v770
      %v772 = vpop.f32.mrb[0].mxu0
      %v773 = vpop.f32.mrb[0].mxu0
      %v774 = vadd.f32 0.0, %v773
      %v775 = vpop.f32.mrb[0].mxu0
      %776 = vdwg.mxu0
      %v777 = vadd.f32 %v539, %v715
      %v778 = vadd.f32 %v542, %v718
      %v779 = vadd.f32 %v547, %v723
      %v780 = vadd.f32 %v550, %v726
      %v781 = vadd.f32 %v555, %v731
      %v782 = vadd.f32 %v558, %v734
      %v783 = vadd.f32 %v563, %v739
      %v784 = vadd.f32 %v566, %v742
      %v785 = vadd.f32 %v571, %v747
      %v786 = vadd.f32 %v574, %v750
      %v787 = vadd.f32 %v579, %v755
      %v788 = vadd.f32 %v582, %v758
      %v789 = vadd.f32 %v587, %v763
      %v790 = vadd.f32 %v590, %v766
      %v791 = vadd.f32 %v595, %v771
      %v792 = vadd.f32 %v598, %v774
      %v793 = vld [vmem:[%s165 + $0x8] sm:$0xe]
      %v794 = vld [vmem:[%s165 + $0xc] sm:$0xf]
      %v795 = vld [vmem:[%s165 + $0x10] sm:$0xf]
      %v796 = vld [vmem:[%s165 + $0x14] sm:$0xf]
      %v797 = vld [vmem:[%s165 + $0x18] sm:$0xf]
      %v798 = vld [vmem:[%s165 + $0x1c] sm:$0xf]
      %v799 = vld [vmem:[%s165 + $0x20] sm:$0xf]
      %v800 = vld [vmem:[%s165 + $0x24] sm:$0xf]
      %v801 = vld [vmem:[%s165 + $0x28] sm:$0xf]
      %v802 = vld [vmem:[%s165 + $0x2c] sm:$0xf]
      %v803 = vld [vmem:[%s165 + $0x30] sm:$0xf]
      %v804 = vld [vmem:[%s165 + $0x34] sm:$0xf]
      %v805 = vld [vmem:[%s165 + $0x38] sm:$0xf]
      %v806 = vld [vmem:[%s165 + $0x3c] sm:$0xf]
      %v807 = vld [vmem:[%s165 + $0x40] sm:$0xf]
      %v808 = vld [vmem:[%s165 + $0x44] sm:$0xf]
      %v809 = vld [vmem:[%s165 + $0x48] sm:$0x1]
      %s810 = scalar_lea.vmem %s1, 96
      %v811 = vld [vmem:[%s810] sm:$0xf]
      %v812 = vld [vmem:[%s810 + $0x4] sm:$0xf]
      %v813 = vld [vmem:[%s810 + $0x8] sm:$0xf]
      %v814 = vld [vmem:[%s810 + $0xc] sm:$0xf]
      %v815 = vld [vmem:[%s810 + $0x10] sm:$0xf]
      %v816 = vld [vmem:[%s810 + $0x14] sm:$0xf]
      %v817 = vld [vmem:[%s810 + $0x18] sm:$0xf]
      %v818 = vld [vmem:[%s810 + $0x1c] sm:$0xf]
      %v836 = vunpack.c.l.b16 %v793
      %v837 = vunpack.c.l.b16 %v794
      %v838 = vunpack.c.l.b16 %v795
      %v839 = vunpack.c.l.b16 %v796
      %v840 = vunpack.c.l.b16 %v797
      %v841 = vunpack.c.l.b16 %v798
      %v842 = vunpack.c.l.b16 %v799
      %v843 = vunpack.c.l.b16 %v800
      %v844 = vunpack.c.l.b16 %v801
      %v845 = vunpack.c.l.b16 %v802
      %v846 = vunpack.c.l.b16 %v803
      %v847 = vunpack.c.l.b16 %v804
      %v848 = vunpack.c.l.b16 %v805
      %v849 = vunpack.c.l.b16 %v806
      %v850 = vunpack.c.l.b16 %v807
      %v851 = vunpack.c.l.b16 %v808
      %v852 = vunpack.c.l.b16 %v809
      %v853 = vpack.c.b16 %v837, %v836
      %v854 = vpack.c.b16 %v839, %v838
      %v855 = vpack.c.b16 %v841, %v840
      %v856 = vpack.c.b16 %v843, %v842
      %v857 = vpack.c.b16 %v845, %v844
      %v858 = vpack.c.b16 %v847, %v846
      %v859 = vpack.c.b16 %v849, %v848
      %v860 = vpack.c.b16 %v851, %v850
      %v861 = vpack.c.b16 %v852, %v852
      %v862 = vrot.slane %v853, 1
      %v863 = vrot.slane %v854, 1
      %v864 = vsel %vm614, %v862, %v863
      %v865 = vrot.slane %v855, 1
      %v866 = vsel %vm614, %v863, %v865
      %v867 = vrot.slane %v856, 1
      %v868 = vsel %vm614, %v865, %v867
      %v869 = vrot.slane %v857, 1
      %v870 = vsel %vm614, %v867, %v869
      %v871 = vrot.slane %v858, 1
      %v872 = vsel %vm614, %v869, %v871
      %v873 = vrot.slane %v859, 1
      %v874 = vsel %vm614, %v871, %v873
      %v875 = vrot.slane %v860, 1
      %v876 = vsel %vm614, %v873, %v875
      %v877 = vrot.slane %v861, 1
      %v878 = vsel %vm614, %v875, %v877
      %v887 = vunpack.c.l.b16 %v811
      %v888 = vunpack.c.l.b16 %v812
      %v889 = vunpack.c.l.b16 %v813
      %v890 = vunpack.c.l.b16 %v814
      %v891 = vunpack.c.l.b16 %v815
      %v892 = vunpack.c.l.b16 %v816
      %v893 = vunpack.c.l.b16 %v817
      %v894 = vunpack.c.l.b16 %v818
      %v895 = vpack.c.b16 %v888, %v887
      %v896 = vpack.c.b16 %v890, %v889
      %v897 = vpack.c.b16 %v892, %v891
      %v898 = vpack.c.b16 %v894, %v893
      %v904 = vsel %vm342, %v864, 0
      %v907 = vsel %vm342, %v866, 0
      %v910 = vsel %vm342, %v868, 0
      %v913 = vsel %vm342, %v870, 0
      %v916 = vsel %vm342, %v872, 0
      %v919 = vsel %vm342, %v874, 0
      %v922 = vsel %vm342, %v876, 0
      %v925 = vsel %vm342, %v878, 0
      %927 = vmatprep.subr.bf16.mxu0 0
      %928 = vmatpush1.bf16.msra.mxu0 %v895
      %929 = vmatprep.subr.bf16.mxu0 0
      %930 = vmatpush1.bf16.msra.mxu0 %v896
      %931 = vmatprep.subr.bf16.mxu0 0
      %932 = vmatpush1.bf16.msra.mxu0 %v897
      %933 = vmatprep.subr.bf16.mxu0 0
      %934 = vmatpush1.bf16.msra.mxu0 %v898
      %935 = vmatprep.subr.bf16.mxu0 0
      %936 = vmatpush1.bf16.msra.mxu0 0
      %937 = vmatprep.subr.bf16.mxu0 0
      %938 = vmatpush1.bf16.msra.mxu0 0
      %939 = vmatprep.subr.bf16.mxu0 0
      %940 = vmatpush1.bf16.msra.mxu0 0
      %941 = vmatprep.subr.bf16.mxu0 0
      %942 = vmatpush1.bf16.msra.mxu0 0
      %943 = vmatprep.subr.bf16.mxu0 0
      %944 = vmatpush1.bf16.msra.mxu0 0
      %945 = vmatprep.subr.bf16.mxu0 0
      %946 = vmatpush1.bf16.msra.mxu0 0
      %947 = vmatprep.subr.bf16.mxu0 0
      %948 = vmatpush1.bf16.msra.mxu0 0
      %949 = vmatprep.subr.bf16.mxu0 0
      %950 = vmatpush1.bf16.msra.mxu0 0
      %951 = vmatprep.subr.bf16.mxu0 0
      %952 = vmatpush1.bf16.msra.mxu0 0
      %953 = vmatprep.subr.bf16.mxu0 0
      %954 = vmatpush1.bf16.msra.mxu0 0
      %955 = vmatprep.subr.bf16.mxu0 0
      %956 = vmatpush1.bf16.msra.mxu0 0
      %957 = vmatprep.subr.bf16.mxu0 0
      %958 = vmatpush1.bf16.msra.mxu0 0
      %959 = vmatprep.mubr.bf16.mxu0 0
      %960 = vmatmul.mubr.bf16.gmra.mrb[0].mxu0 %v904
      %v961 = vpop.f32.mrb[0].mxu0
      %v962 = vadd.f32 0.0, %v961
      %v963 = vpop.f32.mrb[0].mxu0
      %v964 = vpop.f32.mrb[0].mxu0
      %v965 = vadd.f32 0.0, %v964
      %v966 = vpop.f32.mrb[0].mxu0
      %967 = vmatprep.mubr.bf16.mxu0 0
      %968 = vmatmul.mubr.bf16.gmra.mrb[0].mxu0 %v907
      %v969 = vpop.f32.mrb[0].mxu0
      %v970 = vadd.f32 0.0, %v969
      %v971 = vpop.f32.mrb[0].mxu0
      %v972 = vpop.f32.mrb[0].mxu0
      %v973 = vadd.f32 0.0, %v972
      %v974 = vpop.f32.mrb[0].mxu0
      %975 = vmatprep.mubr.bf16.mxu0 0
      %976 = vmatmul.mubr.bf16.gmra.mrb[0].mxu0 %v910
      %v977 = vpop.f32.mrb[0].mxu0
      %v978 = vadd.f32 0.0, %v977
      %v979 = vpop.f32.mrb[0].mxu0
      %v980 = vpop.f32.mrb[0].mxu0
      %v981 = vadd.f32 0.0, %v980
      %v982 = vpop.f32.mrb[0].mxu0
      %983 = vmatprep.mubr.bf16.mxu0 0
      %984 = vmatmul.mubr.bf16.gmra.mrb[0].mxu0 %v913
      %v985 = vpop.f32.mrb[0].mxu0
      %v986 = vadd.f32 0.0, %v985
      %v987 = vpop.f32.mrb[0].mxu0
      %v988 = vpop.f32.mrb[0].mxu0
      %v989 = vadd.f32 0.0, %v988
      %v990 = vpop.f32.mrb[0].mxu0
      %991 = vmatprep.mubr.bf16.mxu0 0
      %992 = vmatmul.mubr.bf16.gmra.mrb[0].mxu0 %v916
      %v993 = vpop.f32.mrb[0].mxu0
      %v994 = vadd.f32 0.0, %v993
      %v995 = vpop.f32.mrb[0].mxu0
      %v996 = vpop.f32.mrb[0].mxu0
      %v997 = vadd.f32 0.0, %v996
      %v998 = vpop.f32.mrb[0].mxu0
      %999 = vmatprep.mubr.bf16.mxu0 0
      %1000 = vmatmul.mubr.bf16.gmra.mrb[0].mxu0 %v919
      %v1001 = vpop.f32.mrb[0].mxu0
      %v1002 = vadd.f32 0.0, %v1001
      %v1003 = vpop.f32.mrb[0].mxu0
      %v1004 = vpop.f32.mrb[0].mxu0
      %v1005 = vadd.f32 0.0, %v1004
      %v1006 = vpop.f32.mrb[0].mxu0
      %1007 = vmatprep.mubr.bf16.mxu0 0
      %1008 = vmatmul.mubr.bf16.gmra.mrb[0].mxu0 %v922
      %v1009 = vpop.f32.mrb[0].mxu0
      %v1010 = vadd.f32 0.0, %v1009
      %v1011 = vpop.f32.mrb[0].mxu0
      %v1012 = vpop.f32.mrb[0].mxu0
      %v1013 = vadd.f32 0.0, %v1012
      %v1014 = vpop.f32.mrb[0].mxu0
      %1015 = vmatprep.mubr.bf16.mxu0 0
      %1016 = vmatmul.mubr.bf16.gmra.mrb[0].mxu0 %v925
      %v1017 = vpop.f32.mrb[0].mxu0
      %v1018 = vadd.f32 0.0, %v1017
      %v1019 = vpop.f32.mrb[0].mxu0
      %v1020 = vpop.f32.mrb[0].mxu0
      %v1021 = vadd.f32 0.0, %v1020
      %v1022 = vpop.f32.mrb[0].mxu0
      %1023 = vdwg.mxu0
      %v1024 = vadd.f32 %v777, %v962
      %v1025 = vadd.f32 %v778, %v965
      %v1026 = vadd.f32 %v779, %v970
      %v1027 = vadd.f32 %v780, %v973
      %v1028 = vadd.f32 %v781, %v978
      %v1029 = vadd.f32 %v782, %v981
      %v1030 = vadd.f32 %v783, %v986
      %v1031 = vadd.f32 %v784, %v989
      %v1032 = vadd.f32 %v785, %v994
      %v1033 = vadd.f32 %v786, %v997
      %v1034 = vadd.f32 %v787, %v1002
      %v1035 = vadd.f32 %v788, %v1005
      %v1036 = vadd.f32 %v789, %v1010
      %v1037 = vadd.f32 %v790, %v1013
      %v1038 = vadd.f32 %v791, %v1018
      %v1039 = vadd.f32 %v792, %v1021
      %v1040 = vld [vmem:[%s165 + $0x48] sm:$0x3]
      %s1041 = scalar_lea.vmem %s1, 128
      %v1042 = vld [vmem:[%s1041] sm:$0xf]
      %v1043 = vld [vmem:[%s1041 + $0x4] sm:$0xf]
      %v1044 = vld [vmem:[%s1041 + $0x8] sm:$0xf]
      %v1045 = vld [vmem:[%s1041 + $0xc] sm:$0xf]
      %v1046 = vld [vmem:[%s1041 + $0x10] sm:$0xf]
      %v1047 = vld [vmem:[%s1041 + $0x14] sm:$0xf]
      %v1048 = vld [vmem:[%s1041 + $0x18] sm:$0xf]
      %v1049 = vld [vmem:[%s1041 + $0x1c] sm:$0xf]
      %v1051 = vunpack.c.l.b16 %v1040
      %v1052 = vpack.c.b16 %v1051, %v1051
      %vm1053 = vsmask.f32 6400
      %v1055 = vshrl.u32 %v853, 16
      %v1057 = vrot.slane %v1055, 1
      %v1058 = vshll.u32 %v853, 16
      %v1060 = vrot.slane %v1058, 2
      %v1061 = vor.u32 %v1057, %v1060
      %v1063 = vshrl.u32 %v854, 16
      %v1065 = vrot.slane %v1063, 1
      %v1066 = vshll.u32 %v854, 16
      %v1068 = vrot.slane %v1066, 2
      %v1069 = vor.u32 %v1065, %v1068
      %v1070 = vsel %vm1053, %v1061, %v1069
      %v1072 = vshrl.u32 %v855, 16
      %v1074 = vrot.slane %v1072, 1
      %v1075 = vshll.u32 %v855, 16
      %v1077 = vrot.slane %v1075, 2
      %v1078 = vor.u32 %v1074, %v1077
      %v1079 = vsel %vm1053, %v1069, %v1078
      %v1081 = vshrl.u32 %v856, 16
      %v1083 = vrot.slane %v1081, 1
      %v1084 = vshll.u32 %v856, 16
      %v1086 = vrot.slane %v1084, 2
      %v1087 = vor.u32 %v1083, %v1086
      %v1088 = vsel %vm1053, %v1078, %v1087
      %v1090 = vshrl.u32 %v857, 16
      %v1092 = vrot.slane %v1090, 1
      %v1093 = vshll.u32 %v857, 16
      %v1095 = vrot.slane %v1093, 2
      %v1096 = vor.u32 %v1092, %v1095
      %v1097 = vsel %vm1053, %v1087, %v1096
      %v1099 = vshrl.u32 %v858, 16
      %v1101 = vrot.slane %v1099, 1
      %v1102 = vshll.u32 %v858, 16
      %v1104 = vrot.slane %v1102, 2
      %v1105 = vor.u32 %v1101, %v1104
      %v1106 = vsel %vm1053, %v1096, %v1105
      %v1108 = vshrl.u32 %v859, 16
      %v1110 = vrot.slane %v1108, 1
      %v1111 = vshll.u32 %v859, 16
      %v1113 = vrot.slane %v1111, 2
      %v1114 = vor.u32 %v1110, %v1113
      %v1115 = vsel %vm1053, %v1105, %v1114
      %v1117 = vshrl.u32 %v860, 16
      %v1119 = vrot.slane %v1117, 1
      %v1120 = vshll.u32 %v860, 16
      %v1122 = vrot.slane %v1120, 2
      %v1123 = vor.u32 %v1119, %v1122
      %v1124 = vsel %vm1053, %v1114, %v1123
      %v1126 = vshrl.u32 %v1052, 16
      %v1128 = vrot.slane %v1126, 1
      %v1129 = vshll.u32 %v1052, 16
      %v1131 = vrot.slane %v1129, 2
      %v1132 = vor.u32 %v1128, %v1131
      %v1133 = vsel %vm1053, %v1123, %v1132
      %v1142 = vunpack.c.l.b16 %v1042
      %v1143 = vunpack.c.l.b16 %v1043
      %v1144 = vunpack.c.l.b16 %v1044
      %v1145 = vunpack.c.l.b16 %v1045
      %v1146 = vunpack.c.l.b16 %v1046
      %v1147 = vunpack.c.l.b16 %v1047
      %v1148 = vunpack.c.l.b16 %v1048
      %v1149 = vunpack.c.l.b16 %v1049
      %v1150 = vpack.c.b16 %v1143, %v1142
      %v1151 = vpack.c.b16 %v1145, %v1144
      %v1152 = vpack.c.b16 %v1147, %v1146
      %v1153 = vpack.c.b16 %v1149, %v1148
      %v1159 = vsel %vm342, %v1070, 0
      %v1162 = vsel %vm342, %v1079, 0
      %v1165 = vsel %vm342, %v1088, 0
      %v1168 = vsel %vm342, %v1097, 0
      %v1171 = vsel %vm342, %v1106, 0
      %v1174 = vsel %vm342, %v1115, 0
      %v1177 = vsel %vm342, %v1124, 0
      %v1180 = vsel %vm342, %v1133, 0
      %1182 = vmatprep.subr.bf16.mxu0 0
      %1183 = vmatpush1.bf16.msra.mxu0 %v1150
      %1184 = vmatprep.subr.bf16.mxu0 0
      %1185 = vmatpush1.bf16.msra.mxu0 %v1151
      %1186 = vmatprep.subr.bf16.mxu0 0
      %1187 = vmatpush1.bf16.msra.mxu0 %v1152
      %1188 = vmatprep.subr.bf16.mxu0 0
      %1189 = vmatpush1.bf16.msra.mxu0 %v1153
      %1190 = vmatprep.subr.bf16.mxu0 0
      %1191 = vmatpush1.bf16.msra.mxu0 0
      %1192 = vmatprep.subr.bf16.mxu0 0
      %1193 = vmatpush1.bf16.msra.mxu0 0
      %1194 = vmatprep.subr.bf16.mxu0 0
      %1195 = vmatpush1.bf16.msra.mxu0 0
      %1196 = vmatprep.subr.bf16.mxu0 0
      %1197 = vmatpush1.bf16.msra.mxu0 0
      %1198 = vmatprep.subr.bf16.mxu0 0
      %1199 = vmatpush1.bf16.msra.mxu0 0
      %1200 = vmatprep.subr.bf16.mxu0 0
      %1201 = vmatpush1.bf16.msra.mxu0 0
      %1202 = vmatprep.subr.bf16.mxu0 0
      %1203 = vmatpush1.bf16.msra.mxu0 0
      %1204 = vmatprep.subr.bf16.mxu0 0
      %1205 = vmatpush1.bf16.msra.mxu0 0
      %1206 = vmatprep.subr.bf16.mxu0 0
      %1207 = vmatpush1.bf16.msra.mxu0 0
      %1208 = vmatprep.subr.bf16.mxu0 0
      %1209 = vmatpush1.bf16.msra.mxu0 0
      %1210 = vmatprep.subr.bf16.mxu0 0
      %1211 = vmatpush1.bf16.msra.mxu0 0
      %1212 = vmatprep.subr.bf16.mxu0 0
      %1213 = vmatpush1.bf16.msra.mxu0 0
      %1214 = vmatprep.mubr.bf16.mxu0 0
      %1215 = vmatmul.mubr.bf16.gmra.mrb[0].mxu0 %v1159
      %v1216 = vpop.f32.mrb[0].mxu0
      %v1217 = vadd.f32 0.0, %v1216
      %v1218 = vpop.f32.mrb[0].mxu0
      %v1219 = vpop.f32.mrb[0].mxu0
      %v1220 = vadd.f32 0.0, %v1219
      %v1221 = vpop.f32.mrb[0].mxu0
      %1222 = vmatprep.mubr.bf16.mxu0 0
      %1223 = vmatmul.mubr.bf16.gmra.mrb[0].mxu0 %v1162
      %v1224 = vpop.f32.mrb[0].mxu0
      %v1225 = vadd.f32 0.0, %v1224
      %v1226 = vpop.f32.mrb[0].mxu0
      %v1227 = vpop.f32.mrb[0].mxu0
      %v1228 = vadd.f32 0.0, %v1227
      %v1229 = vpop.f32.mrb[0].mxu0
      %1230 = vmatprep.mubr.bf16.mxu0 0
      %1231 = vmatmul.mubr.bf16.gmra.mrb[0].mxu0 %v1165
      %v1232 = vpop.f32.mrb[0].mxu0
      %v1233 = vadd.f32 0.0, %v1232
      %v1234 = vpop.f32.mrb[0].mxu0
      %v1235 = vpop.f32.mrb[0].mxu0
      %v1236 = vadd.f32 0.0, %v1235
      %v1237 = vpop.f32.mrb[0].mxu0
      %1238 = vmatprep.mubr.bf16.mxu0 0
      %1239 = vmatmul.mubr.bf16.gmra.mrb[0].mxu0 %v1168
      %v1240 = vpop.f32.mrb[0].mxu0
      %v1241 = vadd.f32 0.0, %v1240
      %v1242 = vpop.f32.mrb[0].mxu0
      %v1243 = vpop.f32.mrb[0].mxu0
      %v1244 = vadd.f32 0.0, %v1243
      %v1245 = vpop.f32.mrb[0].mxu0
      %1246 = vmatprep.mubr.bf16.mxu0 0
      %1247 = vmatmul.mubr.bf16.gmra.mrb[0].mxu0 %v1171
      %v1248 = vpop.f32.mrb[0].mxu0
      %v1249 = vadd.f32 0.0, %v1248
      %v1250 = vpop.f32.mrb[0].mxu0
      %v1251 = vpop.f32.mrb[0].mxu0
      %v1252 = vadd.f32 0.0, %v1251
      %v1253 = vpop.f32.mrb[0].mxu0
      %1254 = vmatprep.mubr.bf16.mxu0 0
      %1255 = vmatmul.mubr.bf16.gmra.mrb[0].mxu0 %v1174
      %v1256 = vpop.f32.mrb[0].mxu0
      %v1257 = vadd.f32 0.0, %v1256
      %v1258 = vpop.f32.mrb[0].mxu0
      %v1259 = vpop.f32.mrb[0].mxu0
      %v1260 = vadd.f32 0.0, %v1259
      %v1261 = vpop.f32.mrb[0].mxu0
      %1262 = vmatprep.mubr.bf16.mxu0 0
      %1263 = vmatmul.mubr.bf16.gmra.mrb[0].mxu0 %v1177
      %v1264 = vpop.f32.mrb[0].mxu0
      %v1265 = vadd.f32 0.0, %v1264
      %v1266 = vpop.f32.mrb[0].mxu0
      %v1267 = vpop.f32.mrb[0].mxu0
      %v1268 = vadd.f32 0.0, %v1267
      %v1269 = vpop.f32.mrb[0].mxu0
      %1270 = vmatprep.mubr.bf16.mxu0 0
      %1271 = vmatmul.mubr.bf16.gmra.mrb[0].mxu0 %v1180
      %v1272 = vpop.f32.mrb[0].mxu0
      %v1273 = vadd.f32 0.0, %v1272
      %v1274 = vpop.f32.mrb[0].mxu0
      %v1275 = vpop.f32.mrb[0].mxu0
      %v1276 = vadd.f32 0.0, %v1275
      %v1277 = vpop.f32.mrb[0].mxu0
      %1278 = vdwg.mxu0
      %v1279 = vadd.f32 %v1024, %v1217
      %v1280 = vadd.f32 %v1025, %v1220
      %v1281 = vadd.f32 %v1026, %v1225
      %v1282 = vadd.f32 %v1027, %v1228
      %v1283 = vadd.f32 %v1028, %v1233
      %v1284 = vadd.f32 %v1029, %v1236
      %v1285 = vadd.f32 %v1030, %v1241
      %v1286 = vadd.f32 %v1031, %v1244
      %v1287 = vadd.f32 %v1032, %v1249
      %v1288 = vadd.f32 %v1033, %v1252
      %v1289 = vadd.f32 %v1034, %v1257
      %v1290 = vadd.f32 %v1035, %v1260
      %v1291 = vadd.f32 %v1036, %v1265
      %v1292 = vadd.f32 %v1037, %v1268
      %v1293 = vadd.f32 %v1038, %v1273
      %v1294 = vadd.f32 %v1039, %v1276
      %v1295 = vld [vmem:[%s165 + $0x8] sm:$0xc]
      %s1296 = scalar_lea.vmem %s1, 160
      %v1297 = vld [vmem:[%s1296] sm:$0xf]
      %v1298 = vld [vmem:[%s1296 + $0x4] sm:$0xf]
      %v1299 = vld [vmem:[%s1296 + $0x8] sm:$0xf]
      %v1300 = vld [vmem:[%s1296 + $0xc] sm:$0xf]
      %v1301 = vld [vmem:[%s1296 + $0x10] sm:$0xf]
      %v1302 = vld [vmem:[%s1296 + $0x14] sm:$0xf]
      %v1303 = vld [vmem:[%s1296 + $0x18] sm:$0xf]
      %v1304 = vld [vmem:[%s1296 + $0x1c] sm:$0xf]
      %v1306 = vunpack.c.l.b16 %v1295
      %v1307 = vpack.c.b16 %v837, %v1306
      %vm1308 = vcmask 1045504
      %v1309 = vrot.slane %v1307, 2
      %v1310 = vrot.slane %v854, 2
      %v1311 = vsel %vm1308, %v1309, %v1310
      %v1312 = vrot.slane %v855, 2
      %v1313 = vsel %vm1308, %v1310, %v1312
      %v1314 = vrot.slane %v856, 2
      %v1315 = vsel %vm1308, %v1312, %v1314
      %v1316 = vrot.slane %v857, 2
      %v1317 = vsel %vm1308, %v1314, %v1316
      %v1318 = vrot.slane %v858, 2
      %v1319 = vsel %vm1308, %v1316, %v1318
      %v1320 = vrot.slane %v859, 2
      %v1321 = vsel %vm1308, %v1318, %v1320
      %v1322 = vrot.slane %v860, 2
      %v1323 = vsel %vm1308, %v1320, %v1322
      %v1324 = vrot.slane %v1052, 2
      %v1325 = vsel %vm1308, %v1322, %v1324
      %v1334 = vunpack.c.l.b16 %v1297
      %v1335 = vunpack.c.l.b16 %v1298
      %v1336 = vunpack.c.l.b16 %v1299
      %v1337 = vunpack.c.l.b16 %v1300
      %v1338 = vunpack.c.l.b16 %v1301
      %v1339 = vunpack.c.l.b16 %v1302
      %v1340 = vunpack.c.l.b16 %v1303
      %v1341 = vunpack.c.l.b16 %v1304
      %v1342 = vpack.c.b16 %v1335, %v1334
      %v1343 = vpack.c.b16 %v1337, %v1336
      %v1344 = vpack.c.b16 %v1339, %v1338
      %v1345 = vpack.c.b16 %v1341, %v1340
      %v1351 = vsel %vm342, %v1311, 0
      %v1354 = vsel %vm342, %v1313, 0
      %v1357 = vsel %vm342, %v1315, 0
      %v1360 = vsel %vm342, %v1317, 0
      %v1363 = vsel %vm342, %v1319, 0
      %v1366 = vsel %vm342, %v1321, 0
      %v1369 = vsel %vm342, %v1323, 0
      %v1372 = vsel %vm342, %v1325, 0
      %1374 = vmatprep.subr.bf16.mxu0 0
      %1375 = vmatpush1.bf16.msra.mxu0 %v1342
      %1376 = vmatprep.subr.bf16.mxu0 0
      %1377 = vmatpush1.bf16.msra.mxu0 %v1343
      %1378 = vmatprep.subr.bf16.mxu0 0
      %1379 = vmatpush1.bf16.msra.mxu0 %v1344
      %1380 = vmatprep.subr.bf16.mxu0 0
      %1381 = vmatpush1.bf16.msra.mxu0 %v1345
      %1382 = vmatprep.subr.bf16.mxu0 0
      %1383 = vmatpush1.bf16.msra.mxu0 0
      %1384 = vmatprep.subr.bf16.mxu0 0
      %1385 = vmatpush1.bf16.msra.mxu0 0
      %1386 = vmatprep.subr.bf16.mxu0 0
      %1387 = vmatpush1.bf16.msra.mxu0 0
      %1388 = vmatprep.subr.bf16.mxu0 0
      %1389 = vmatpush1.bf16.msra.mxu0 0
      %1390 = vmatprep.subr.bf16.mxu0 0
      %1391 = vmatpush1.bf16.msra.mxu0 0
      %1392 = vmatprep.subr.bf16.mxu0 0
      %1393 = vmatpush1.bf16.msra.mxu0 0
      %1394 = vmatprep.subr.bf16.mxu0 0
      %1395 = vmatpush1.bf16.msra.mxu0 0
      %1396 = vmatprep.subr.bf16.mxu0 0
      %1397 = vmatpush1.bf16.msra.mxu0 0
      %1398 = vmatprep.subr.bf16.mxu0 0
      %1399 = vmatpush1.bf16.msra.mxu0 0
      %1400 = vmatprep.subr.bf16.mxu0 0
      %1401 = vmatpush1.bf16.msra.mxu0 0
      %1402 = vmatprep.subr.bf16.mxu0 0
      %1403 = vmatpush1.bf16.msra.mxu0 0
      %1404 = vmatprep.subr.bf16.mxu0 0
      %1405 = vmatpush1.bf16.msra.mxu0 0
      %1406 = vmatprep.mubr.bf16.mxu0 0
      %1407 = vmatmul.mubr.bf16.gmra.mrb[0].mxu0 %v1351
      %v1408 = vpop.f32.mrb[0].mxu0
      %v1409 = vadd.f32 0.0, %v1408
      %v1410 = vpop.f32.mrb[0].mxu0
      %v1411 = vpop.f32.mrb[0].mxu0
      %v1412 = vadd.f32 0.0, %v1411
      %v1413 = vpop.f32.mrb[0].mxu0
      %1414 = vmatprep.mubr.bf16.mxu0 0
      %1415 = vmatmul.mubr.bf16.gmra.mrb[0].mxu0 %v1354
      %v1416 = vpop.f32.mrb[0].mxu0
      %v1417 = vadd.f32 0.0, %v1416
      %v1418 = vpop.f32.mrb[0].mxu0
      %v1419 = vpop.f32.mrb[0].mxu0
      %v1420 = vadd.f32 0.0, %v1419
      %v1421 = vpop.f32.mrb[0].mxu0
      %1422 = vmatprep.mubr.bf16.mxu0 0
      %1423 = vmatmul.mubr.bf16.gmra.mrb[0].mxu0 %v1357
      %v1424 = vpop.f32.mrb[0].mxu0
      %v1425 = vadd.f32 0.0, %v1424
      %v1426 = vpop.f32.mrb[0].mxu0
      %v1427 = vpop.f32.mrb[0].mxu0
      %v1428 = vadd.f32 0.0, %v1427
      %v1429 = vpop.f32.mrb[0].mxu0
      %1430 = vmatprep.mubr.bf16.mxu0 0
      %1431 = vmatmul.mubr.bf16.gmra.mrb[0].mxu0 %v1360
      %v1432 = vpop.f32.mrb[0].mxu0
      %v1433 = vadd.f32 0.0, %v1432
      %v1434 = vpop.f32.mrb[0].mxu0
      %v1435 = vpop.f32.mrb[0].mxu0
      %v1436 = vadd.f32 0.0, %v1435
      %v1437 = vpop.f32.mrb[0].mxu0
      %1438 = vmatprep.mubr.bf16.mxu0 0
      %1439 = vmatmul.mubr.bf16.gmra.mrb[0].mxu0 %v1363
      %v1440 = vpop.f32.mrb[0].mxu0
      %v1441 = vadd.f32 0.0, %v1440
      %v1442 = vpop.f32.mrb[0].mxu0
      %v1443 = vpop.f32.mrb[0].mxu0
      %v1444 = vadd.f32 0.0, %v1443
      %v1445 = vpop.f32.mrb[0].mxu0
      %1446 = vmatprep.mubr.bf16.mxu0 0
      %1447 = vmatmul.mubr.bf16.gmra.mrb[0].mxu0 %v1366
      %v1448 = vpop.f32.mrb[0].mxu0
      %v1449 = vadd.f32 0.0, %v1448
      %v1450 = vpop.f32.mrb[0].mxu0
      %v1451 = vpop.f32.mrb[0].mxu0
      %v1452 = vadd.f32 0.0, %v1451
      %v1453 = vpop.f32.mrb[0].mxu0
      %1454 = vmatprep.mubr.bf16.mxu0 0
      %1455 = vmatmul.mubr.bf16.gmra.mrb[0].mxu0 %v1369
      %v1456 = vpop.f32.mrb[0].mxu0
      %v1457 = vadd.f32 0.0, %v1456
      %v1458 = vpop.f32.mrb[0].mxu0
      %v1459 = vpop.f32.mrb[0].mxu0
      %v1460 = vadd.f32 0.0, %v1459
      %v1461 = vpop.f32.mrb[0].mxu0
      %1462 = vmatprep.mubr.bf16.mxu0 0
      %1463 = vmatmul.mubr.bf16.gmra.mrb[0].mxu0 %v1372
      %v1464 = vpop.f32.mrb[0].mxu0
      %v1465 = vadd.f32 0.0, %v1464
      %v1466 = vpop.f32.mrb[0].mxu0
      %v1467 = vpop.f32.mrb[0].mxu0
      %v1468 = vadd.f32 0.0, %v1467
      %v1469 = vpop.f32.mrb[0].mxu0
      %1470 = vdwg.mxu0
      %v1471 = vadd.f32 %v1279, %v1409
      %v1472 = vadd.f32 %v1280, %v1412
      %v1473 = vadd.f32 %v1281, %v1417
      %v1474 = vadd.f32 %v1282, %v1420
      %v1475 = vadd.f32 %v1283, %v1425
      %v1476 = vadd.f32 %v1284, %v1428
      %v1477 = vadd.f32 %v1285, %v1433
      %v1478 = vadd.f32 %v1286, %v1436
      %v1479 = vadd.f32 %v1287, %v1441
      %v1480 = vadd.f32 %v1288, %v1444
      %v1481 = vadd.f32 %v1289, %v1449
      %v1482 = vadd.f32 %v1290, %v1452
      %v1483 = vadd.f32 %v1291, %v1457
      %v1484 = vadd.f32 %v1292, %v1460
      %v1485 = vadd.f32 %v1293, %v1465
      %v1486 = vadd.f32 %v1294, %v1468
      %v1487 = vld [vmem:[%s165 + $0x10] sm:$0xc]
      %v1488 = vld [vmem:[%s165 + $0x14] sm:$0xf]
      %v1489 = vld [vmem:[%s165 + $0x18] sm:$0xf]
      %v1490 = vld [vmem:[%s165 + $0x1c] sm:$0xf]
      %v1491 = vld [vmem:[%s165 + $0x20] sm:$0xf]
      %v1492 = vld [vmem:[%s165 + $0x24] sm:$0xf]
      %v1493 = vld [vmem:[%s165 + $0x28] sm:$0xf]
      %v1494 = vld [vmem:[%s165 + $0x2c] sm:$0xf]
      %v1495 = vld [vmem:[%s165 + $0x30] sm:$0xf]
      %v1496 = vld [vmem:[%s165 + $0x34] sm:$0xf]
      %v1497 = vld [vmem:[%s165 + $0x38] sm:$0xf]
      %v1498 = vld [vmem:[%s165 + $0x3c] sm:$0xf]
      %v1499 = vld [vmem:[%s165 + $0x40] sm:$0xf]
      %v1500 = vld [vmem:[%s165 + $0x44] sm:$0xf]
      %v1501 = vld [vmem:[%s165 + $0x48] sm:$0xf]
      %v1502 = vld [vmem:[%s165 + $0x4c] sm:$0xf]
      %v1503 = vld [vmem:[%s165 + $0x50] sm:$0x3]
      %s1504 = scalar_lea.vmem %s1, 192
      %v1505 = vld [vmem:[%s1504] sm:$0xf]
      %v1506 = vld [vmem:[%s1504 + $0x4] sm:$0xf]
      %v1507 = vld [vmem:[%s1504 + $0x8] sm:$0xf]
      %v1508 = vld [vmem:[%s1504 + $0xc] sm:$0xf]
      %v1509 = vld [vmem:[%s1504 + $0x10] sm:$0xf]
      %v1510 = vld [vmem:[%s1504 + $0x14] sm:$0xf]
      %v1511 = vld [vmem:[%s1504 + $0x18] sm:$0xf]
      %v1512 = vld [vmem:[%s1504 + $0x1c] sm:$0xf]
      %v1530 = vunpack.c.l.b16 %v1487
      %v1531 = vunpack.c.l.b16 %v1488
      %v1532 = vunpack.c.l.b16 %v1489
      %v1533 = vunpack.c.l.b16 %v1490
      %v1534 = vunpack.c.l.b16 %v1491
      %v1535 = vunpack.c.l.b16 %v1492
      %v1536 = vunpack.c.l.b16 %v1493
      %v1537 = vunpack.c.l.b16 %v1494
      %v1538 = vunpack.c.l.b16 %v1495
      %v1539 = vunpack.c.l.b16 %v1496
      %v1540 = vunpack.c.l.b16 %v1497
      %v1541 = vunpack.c.l.b16 %v1498
      %v1542 = vunpack.c.l.b16 %v1499
      %v1543 = vunpack.c.l.b16 %v1500
      %v1544 = vunpack.c.l.b16 %v1501
      %v1545 = vunpack.c.l.b16 %v1502
      %v1546 = vunpack.c.l.b16 %v1503
      %v1547 = vpack.c.b16 %v1531, %v1530
      %v1548 = vpack.c.b16 %v1533, %v1532
      %v1549 = vpack.c.b16 %v1535, %v1534
      %v1550 = vpack.c.b16 %v1537, %v1536
      %v1551 = vpack.c.b16 %v1539, %v1538
      %v1552 = vpack.c.b16 %v1541, %v1540
      %v1553 = vpack.c.b16 %v1543, %v1542
      %v1554 = vpack.c.b16 %v1545, %v1544
      %v1555 = vpack.c.b16 %v1546, %v1546
      %v1556 = vrot.slane %v1547, 2
      %v1557 = vrot.slane %v1548, 2
      %v1558 = vsel %vm1308, %v1556, %v1557
      %v1559 = vrot.slane %v1549, 2
      %v1560 = vsel %vm1308, %v1557, %v1559
      %v1561 = vrot.slane %v1550, 2
      %v1562 = vsel %vm1308, %v1559, %v1561
      %v1563 = vrot.slane %v1551, 2
      %v1564 = vsel %vm1308, %v1561, %v1563
      %v1565 = vrot.slane %v1552, 2
      %v1566 = vsel %vm1308, %v1563, %v1565
      %v1567 = vrot.slane %v1553, 2
      %v1568 = vsel %vm1308, %v1565, %v1567
      %v1569 = vrot.slane %v1554, 2
      %v1570 = vsel %vm1308, %v1567, %v1569
      %v1571 = vrot.slane %v1555, 2
      %v1572 = vsel %vm1308, %v1569, %v1571
      %v1581 = vunpack.c.l.b16 %v1505
      %v1582 = vunpack.c.l.b16 %v1506
      %v1583 = vunpack.c.l.b16 %v1507
      %v1584 = vunpack.c.l.b16 %v1508
      %v1585 = vunpack.c.l.b16 %v1509
      %v1586 = vunpack.c.l.b16 %v1510
      %v1587 = vunpack.c.l.b16 %v1511
      %v1588 = vunpack.c.l.b16 %v1512
      %v1589 = vpack.c.b16 %v1582, %v1581
      %v1590 = vpack.c.b16 %v1584, %v1583
      %v1591 = vpack.c.b16 %v1586, %v1585
      %v1592 = vpack.c.b16 %v1588, %v1587
      %v1598 = vsel %vm342, %v1558, 0
      %v1601 = vsel %vm342, %v1560, 0
      %v1604 = vsel %vm342, %v1562, 0
      %v1607 = vsel %vm342, %v1564, 0
      %v1610 = vsel %vm342, %v1566, 0
      %v1613 = vsel %vm342, %v1568, 0
      %v1616 = vsel %vm342, %v1570, 0
      %v1619 = vsel %vm342, %v1572, 0
      %1621 = vmatprep.subr.bf16.mxu0 0
      %1622 = vmatpush1.bf16.msra.mxu0 %v1589
      %1623 = vmatprep.subr.bf16.mxu0 0
      %1624 = vmatpush1.bf16.msra.mxu0 %v1590
      %1625 = vmatprep.subr.bf16.mxu0 0
      %1626 = vmatpush1.bf16.msra.mxu0 %v1591
      %1627 = vmatprep.subr.bf16.mxu0 0
      %1628 = vmatpush1.bf16.msra.mxu0 %v1592
      %1629 = vmatprep.subr.bf16.mxu0 0
      %1630 = vmatpush1.bf16.msra.mxu0 0
      %1631 = vmatprep.subr.bf16.mxu0 0
      %1632 = vmatpush1.bf16.msra.mxu0 0
      %1633 = vmatprep.subr.bf16.mxu0 0
      %1634 = vmatpush1.bf16.msra.mxu0 0
      %1635 = vmatprep.subr.bf16.mxu0 0
      %1636 = vmatpush1.bf16.msra.mxu0 0
      %1637 = vmatprep.subr.bf16.mxu0 0
      %1638 = vmatpush1.bf16.msra.mxu0 0
      %1639 = vmatprep.subr.bf16.mxu0 0
      %1640 = vmatpush1.bf16.msra.mxu0 0
      %1641 = vmatprep.subr.bf16.mxu0 0
      %1642 = vmatpush1.bf16.msra.mxu0 0
      %1643 = vmatprep.subr.bf16.mxu0 0
      %1644 = vmatpush1.bf16.msra.mxu0 0
      %1645 = vmatprep.subr.bf16.mxu0 0
      %1646 = vmatpush1.bf16.msra.mxu0 0
      %1647 = vmatprep.subr.bf16.mxu0 0
      %1648 = vmatpush1.bf16.msra.mxu0 0
      %1649 = vmatprep.subr.bf16.mxu0 0
      %1650 = vmatpush1.bf16.msra.mxu0 0
      %1651 = vmatprep.subr.bf16.mxu0 0
      %1652 = vmatpush1.bf16.msra.mxu0 0
      %1653 = vmatprep.mubr.bf16.mxu0 0
      %1654 = vmatmul.mubr.bf16.gmra.mrb[0].mxu0 %v1598
      %v1655 = vpop.f32.mrb[0].mxu0
      %v1656 = vadd.f32 0.0, %v1655
      %v1657 = vpop.f32.mrb[0].mxu0
      %v1658 = vpop.f32.mrb[0].mxu0
      %v1659 = vadd.f32 0.0, %v1658
      %v1660 = vpop.f32.mrb[0].mxu0
      %1661 = vmatprep.mubr.bf16.mxu0 0
      %1662 = vmatmul.mubr.bf16.gmra.mrb[0].mxu0 %v1601
      %v1663 = vpop.f32.mrb[0].mxu0
      %v1664 = vadd.f32 0.0, %v1663
      %v1665 = vpop.f32.mrb[0].mxu0
      %v1666 = vpop.f32.mrb[0].mxu0
      %v1667 = vadd.f32 0.0, %v1666
      %v1668 = vpop.f32.mrb[0].mxu0
      %1669 = vmatprep.mubr.bf16.mxu0 0
      %1670 = vmatmul.mubr.bf16.gmra.mrb[0].mxu0 %v1604
      %v1671 = vpop.f32.mrb[0].mxu0
      %v1672 = vadd.f32 0.0, %v1671
      %v1673 = vpop.f32.mrb[0].mxu0
      %v1674 = vpop.f32.mrb[0].mxu0
      %v1675 = vadd.f32 0.0, %v1674
      %v1676 = vpop.f32.mrb[0].mxu0
      %1677 = vmatprep.mubr.bf16.mxu0 0
      %1678 = vmatmul.mubr.bf16.gmra.mrb[0].mxu0 %v1607
      %v1679 = vpop.f32.mrb[0].mxu0
      %v1680 = vadd.f32 0.0, %v1679
      %v1681 = vpop.f32.mrb[0].mxu0
      %v1682 = vpop.f32.mrb[0].mxu0
      %v1683 = vadd.f32 0.0, %v1682
      %v1684 = vpop.f32.mrb[0].mxu0
      %1685 = vmatprep.mubr.bf16.mxu0 0
      %1686 = vmatmul.mubr.bf16.gmra.mrb[0].mxu0 %v1610
      %v1687 = vpop.f32.mrb[0].mxu0
      %v1688 = vadd.f32 0.0, %v1687
      %v1689 = vpop.f32.mrb[0].mxu0
      %v1690 = vpop.f32.mrb[0].mxu0
      %v1691 = vadd.f32 0.0, %v1690
      %v1692 = vpop.f32.mrb[0].mxu0
      %1693 = vmatprep.mubr.bf16.mxu0 0
      %1694 = vmatmul.mubr.bf16.gmra.mrb[0].mxu0 %v1613
      %v1695 = vpop.f32.mrb[0].mxu0
      %v1696 = vadd.f32 0.0, %v1695
      %v1697 = vpop.f32.mrb[0].mxu0
      %v1698 = vpop.f32.mrb[0].mxu0
      %v1699 = vadd.f32 0.0, %v1698
      %v1700 = vpop.f32.mrb[0].mxu0
      %1701 = vmatprep.mubr.bf16.mxu0 0
      %1702 = vmatmul.mubr.bf16.gmra.mrb[0].mxu0 %v1616
      %v1703 = vpop.f32.mrb[0].mxu0
      %v1704 = vadd.f32 0.0, %v1703
      %v1705 = vpop.f32.mrb[0].mxu0
      %v1706 = vpop.f32.mrb[0].mxu0
      %v1707 = vadd.f32 0.0, %v1706
      %v1708 = vpop.f32.mrb[0].mxu0
      %1709 = vmatprep.mubr.bf16.mxu0 0
      %1710 = vmatmul.mubr.bf16.gmra.mrb[0].mxu0 %v1619
      %v1711 = vpop.f32.mrb[0].mxu0
      %v1712 = vadd.f32 0.0, %v1711
      %v1713 = vpop.f32.mrb[0].mxu0
      %v1714 = vpop.f32.mrb[0].mxu0
      %v1715 = vadd.f32 0.0, %v1714
      %v1716 = vpop.f32.mrb[0].mxu0
      %1717 = vdwg.mxu0
      %v1718 = vadd.f32 %v1471, %v1656
      %v1719 = vadd.f32 %v1472, %v1659
      %v1720 = vadd.f32 %v1473, %v1664
      %v1721 = vadd.f32 %v1474, %v1667
      %v1722 = vadd.f32 %v1475, %v1672
      %v1723 = vadd.f32 %v1476, %v1675
      %v1724 = vadd.f32 %v1477, %v1680
      %v1725 = vadd.f32 %v1478, %v1683
      %v1726 = vadd.f32 %v1479, %v1688
      %v1727 = vadd.f32 %v1480, %v1691
      %v1728 = vadd.f32 %v1481, %v1696
      %v1729 = vadd.f32 %v1482, %v1699
      %v1730 = vadd.f32 %v1483, %v1704
      %v1731 = vadd.f32 %v1484, %v1707
      %v1732 = vadd.f32 %v1485, %v1712
      %v1733 = vadd.f32 %v1486, %v1715
      %v1734 = vld [vmem:[%s165 + $0x50] sm:$0x7]
      %s1735 = scalar_lea.vmem %s1, 224
      %v1736 = vld [vmem:[%s1735] sm:$0xf]
      %v1737 = vld [vmem:[%s1735 + $0x4] sm:$0xf]
      %v1738 = vld [vmem:[%s1735 + $0x8] sm:$0xf]
      %v1739 = vld [vmem:[%s1735 + $0xc] sm:$0xf]
      %v1740 = vld [vmem:[%s1735 + $0x10] sm:$0xf]
      %v1741 = vld [vmem:[%s1735 + $0x14] sm:$0xf]
      %v1742 = vld [vmem:[%s1735 + $0x18] sm:$0xf]
      %v1743 = vld [vmem:[%s1735 + $0x1c] sm:$0xf]
      %v1745 = vunpack.c.l.b16 %v1734
      %v1746 = vpack.c.b16 %v1745, %v1745
      %vm1747 = vsmask.f32 5376
      %v1749 = vshrl.u32 %v1547, 16
      %v1751 = vrot.slane %v1749, 2
      %v1752 = vshll.u32 %v1547, 16
      %v1754 = vrot.slane %v1752, 3
      %v1755 = vor.u32 %v1751, %v1754
      %v1757 = vshrl.u32 %v1548, 16
      %v1759 = vrot.slane %v1757, 2
      %v1760 = vshll.u32 %v1548, 16
      %v1762 = vrot.slane %v1760, 3
      %v1763 = vor.u32 %v1759, %v1762
      %v1764 = vsel %vm1747, %v1755, %v1763
      %v1766 = vshrl.u32 %v1549, 16
      %v1768 = vrot.slane %v1766, 2
      %v1769 = vshll.u32 %v1549, 16
      %v1771 = vrot.slane %v1769, 3
      %v1772 = vor.u32 %v1768, %v1771
      %v1773 = vsel %vm1747, %v1763, %v1772
      %v1775 = vshrl.u32 %v1550, 16
      %v1777 = vrot.slane %v1775, 2
      %v1778 = vshll.u32 %v1550, 16
      %v1780 = vrot.slane %v1778, 3
      %v1781 = vor.u32 %v1777, %v1780
      %v1782 = vsel %vm1747, %v1772, %v1781
      %v1784 = vshrl.u32 %v1551, 16
      %v1786 = vrot.slane %v1784, 2
      %v1787 = vshll.u32 %v1551, 16
      %v1789 = vrot.slane %v1787, 3
      %v1790 = vor.u32 %v1786, %v1789
      %v1791 = vsel %vm1747, %v1781, %v1790
      %v1793 = vshrl.u32 %v1552, 16
      %v1795 = vrot.slane %v1793, 2
      %v1796 = vshll.u32 %v1552, 16
      %v1798 = vrot.slane %v1796, 3
      %v1799 = vor.u32 %v1795, %v1798
      %v1800 = vsel %vm1747, %v1790, %v1799
      %v1802 = vshrl.u32 %v1553, 16
      %v1804 = vrot.slane %v1802, 2
      %v1805 = vshll.u32 %v1553, 16
      %v1807 = vrot.slane %v1805, 3
      %v1808 = vor.u32 %v1804, %v1807
      %v1809 = vsel %vm1747, %v1799, %v1808
      %v1811 = vshrl.u32 %v1554, 16
      %v1813 = vrot.slane %v1811, 2
      %v1814 = vshll.u32 %v1554, 16
      %v1816 = vrot.slane %v1814, 3
      %v1817 = vor.u32 %v1813, %v1816
      %v1818 = vsel %vm1747, %v1808, %v1817
      %v1820 = vshrl.u32 %v1746, 16
      %v1822 = vrot.slane %v1820, 2
      %v1823 = vshll.u32 %v1746, 16
      %v1825 = vrot.slane %v1823, 3
      %v1826 = vor.u32 %v1822, %v1825
      %v1827 = vsel %vm1747, %v1817, %v1826
      %v1836 = vunpack.c.l.b16 %v1736
      %v1837 = vunpack.c.l.b16 %v1737
      %v1838 = vunpack.c.l.b16 %v1738
      %v1839 = vunpack.c.l.b16 %v1739
      %v1840 = vunpack.c.l.b16 %v1740
      %v1841 = vunpack.c.l.b16 %v1741
      %v1842 = vunpack.c.l.b16 %v1742
      %v1843 = vunpack.c.l.b16 %v1743
      %v1844 = vpack.c.b16 %v1837, %v1836
      %v1845 = vpack.c.b16 %v1839, %v1838
      %v1846 = vpack.c.b16 %v1841, %v1840
      %v1847 = vpack.c.b16 %v1843, %v1842
      %v1853 = vsel %vm342, %v1764, 0
      %v1856 = vsel %vm342, %v1773, 0
      %v1859 = vsel %vm342, %v1782, 0
      %v1862 = vsel %vm342, %v1791, 0
      %v1865 = vsel %vm342, %v1800, 0
      %v1868 = vsel %vm342, %v1809, 0
      %v1871 = vsel %vm342, %v1818, 0
      %v1874 = vsel %vm342, %v1827, 0
      %1876 = vmatprep.subr.bf16.mxu0 0
      %1877 = vmatpush1.bf16.msra.mxu0 %v1844
      %1878 = vmatprep.subr.bf16.mxu0 0
      %1879 = vmatpush1.bf16.msra.mxu0 %v1845
      %1880 = vmatprep.subr.bf16.mxu0 0
      %1881 = vmatpush1.bf16.msra.mxu0 %v1846
      %1882 = vmatprep.subr.bf16.mxu0 0
      %1883 = vmatpush1.bf16.msra.mxu0 %v1847
      %1884 = vmatprep.subr.bf16.mxu0 0
      %1885 = vmatpush1.bf16.msra.mxu0 0
      %1886 = vmatprep.subr.bf16.mxu0 0
      %1887 = vmatpush1.bf16.msra.mxu0 0
      %1888 = vmatprep.subr.bf16.mxu0 0
      %1889 = vmatpush1.bf16.msra.mxu0 0
      %1890 = vmatprep.subr.bf16.mxu0 0
      %1891 = vmatpush1.bf16.msra.mxu0 0
      %1892 = vmatprep.subr.bf16.mxu0 0
      %1893 = vmatpush1.bf16.msra.mxu0 0
      %1894 = vmatprep.subr.bf16.mxu0 0
      %1895 = vmatpush1.bf16.msra.mxu0 0
      %1896 = vmatprep.subr.bf16.mxu0 0
      %1897 = vmatpush1.bf16.msra.mxu0 0
      %1898 = vmatprep.subr.bf16.mxu0 0
      %1899 = vmatpush1.bf16.msra.mxu0 0
      %1900 = vmatprep.subr.bf16.mxu0 0
      %1901 = vmatpush1.bf16.msra.mxu0 0
      %1902 = vmatprep.subr.bf16.mxu0 0
      %1903 = vmatpush1.bf16.msra.mxu0 0
      %1904 = vmatprep.subr.bf16.mxu0 0
      %1905 = vmatpush1.bf16.msra.mxu0 0
      %1906 = vmatprep.subr.bf16.mxu0 0
      %1907 = vmatpush1.bf16.msra.mxu0 0
      %1908 = vmatprep.mubr.bf16.mxu0 0
      %1909 = vmatmul.mubr.bf16.gmra.mrb[0].mxu0 %v1853
      %v1910 = vpop.f32.mrb[0].mxu0
      %v1911 = vadd.f32 0.0, %v1910
      %v1912 = vpop.f32.mrb[0].mxu0
      %v1913 = vpop.f32.mrb[0].mxu0
      %v1914 = vadd.f32 0.0, %v1913
      %v1915 = vpop.f32.mrb[0].mxu0
      %1916 = vmatprep.mubr.bf16.mxu0 0
      %1917 = vmatmul.mubr.bf16.gmra.mrb[0].mxu0 %v1856
      %v1918 = vpop.f32.mrb[0].mxu0
      %v1919 = vadd.f32 0.0, %v1918
      %v1920 = vpop.f32.mrb[0].mxu0
      %v1921 = vpop.f32.mrb[0].mxu0
      %v1922 = vadd.f32 0.0, %v1921
      %v1923 = vpop.f32.mrb[0].mxu0
      %1924 = vmatprep.mubr.bf16.mxu0 0
      %1925 = vmatmul.mubr.bf16.gmra.mrb[0].mxu0 %v1859
      %v1926 = vpop.f32.mrb[0].mxu0
      %v1927 = vadd.f32 0.0, %v1926
      %v1928 = vpop.f32.mrb[0].mxu0
      %v1929 = vpop.f32.mrb[0].mxu0
      %v1930 = vadd.f32 0.0, %v1929
      %v1931 = vpop.f32.mrb[0].mxu0
      %1932 = vmatprep.mubr.bf16.mxu0 0
      %1933 = vmatmul.mubr.bf16.gmra.mrb[0].mxu0 %v1862
      %v1934 = vpop.f32.mrb[0].mxu0
      %v1935 = vadd.f32 0.0, %v1934
      %v1936 = vpop.f32.mrb[0].mxu0
      %v1937 = vpop.f32.mrb[0].mxu0
      %v1938 = vadd.f32 0.0, %v1937
      %v1939 = vpop.f32.mrb[0].mxu0
      %1940 = vmatprep.mubr.bf16.mxu0 0
      %1941 = vmatmul.mubr.bf16.gmra.mrb[0].mxu0 %v1865
      %v1942 = vpop.f32.mrb[0].mxu0
      %v1943 = vadd.f32 0.0, %v1942
      %v1944 = vpop.f32.mrb[0].mxu0
      %v1945 = vpop.f32.mrb[0].mxu0
      %v1946 = vadd.f32 0.0, %v1945
      %v1947 = vpop.f32.mrb[0].mxu0
      %1948 = vmatprep.mubr.bf16.mxu0 0
      %1949 = vmatmul.mubr.bf16.gmra.mrb[0].mxu0 %v1868
      %v1950 = vpop.f32.mrb[0].mxu0
      %v1951 = vadd.f32 0.0, %v1950
      %v1952 = vpop.f32.mrb[0].mxu0
      %v1953 = vpop.f32.mrb[0].mxu0
      %v1954 = vadd.f32 0.0, %v1953
      %v1955 = vpop.f32.mrb[0].mxu0
      %1956 = vmatprep.mubr.bf16.mxu0 0
      %1957 = vmatmul.mubr.bf16.gmra.mrb[0].mxu0 %v1871
      %v1958 = vpop.f32.mrb[0].mxu0
      %v1959 = vadd.f32 0.0, %v1958
      %v1960 = vpop.f32.mrb[0].mxu0
      %v1961 = vpop.f32.mrb[0].mxu0
      %v1962 = vadd.f32 0.0, %v1961
      %v1963 = vpop.f32.mrb[0].mxu0
      %1964 = vmatprep.mubr.bf16.mxu0 0
      %1965 = vmatmul.mubr.bf16.gmra.mrb[0].mxu0 %v1874
      %v1966 = vpop.f32.mrb[0].mxu0
      %v1967 = vadd.f32 0.0, %v1966
      %v1968 = vpop.f32.mrb[0].mxu0
      %v1969 = vpop.f32.mrb[0].mxu0
      %v1970 = vadd.f32 0.0, %v1969
      %v1971 = vpop.f32.mrb[0].mxu0
      %1972 = vdwg.mxu0
      %v1973 = vadd.f32 %v1718, %v1911
      %v1974 = vadd.f32 %v1719, %v1914
      %v1975 = vadd.f32 %v1720, %v1919
      %v1976 = vadd.f32 %v1721, %v1922
      %v1977 = vadd.f32 %v1722, %v1927
      %v1978 = vadd.f32 %v1723, %v1930
      %v1979 = vadd.f32 %v1724, %v1935
      %v1980 = vadd.f32 %v1725, %v1938
      %v1981 = vadd.f32 %v1726, %v1943
      %v1982 = vadd.f32 %v1727, %v1946
      %v1983 = vadd.f32 %v1728, %v1951
      %v1984 = vadd.f32 %v1729, %v1954
      %v1985 = vadd.f32 %v1730, %v1959
      %v1986 = vadd.f32 %v1731, %v1962
      %v1987 = vadd.f32 %v1732, %v1967
      %v1988 = vadd.f32 %v1733, %v1970
      %v1989 = vld [vmem:[%s165 + $0x10] sm:$0x8]
      %s1990 = scalar_lea.vmem %s1, 256
      %v1991 = vld [vmem:[%s1990] sm:$0xf]
      %v1992 = vld [vmem:[%s1990 + $0x4] sm:$0xf]
      %v1993 = vld [vmem:[%s1990 + $0x8] sm:$0xf]
      %v1994 = vld [vmem:[%s1990 + $0xc] sm:$0xf]
      %v1995 = vld [vmem:[%s1990 + $0x10] sm:$0xf]
      %v1996 = vld [vmem:[%s1990 + $0x14] sm:$0xf]
      %v1997 = vld [vmem:[%s1990 + $0x18] sm:$0xf]
      %v1998 = vld [vmem:[%s1990 + $0x1c] sm:$0xf]
      %v2000 = vunpack.c.l.b16 %v1989
      %v2001 = vpack.c.b16 %v1531, %v2000
      %vm2002 = vcmask 1044480
      %v2003 = vrot.slane %v2001, 3
      %v2004 = vrot.slane %v1548, 3
      %v2005 = vsel %vm2002, %v2003, %v2004
      %v2006 = vrot.slane %v1549, 3
      %v2007 = vsel %vm2002, %v2004, %v2006
      %v2008 = vrot.slane %v1550, 3
      %v2009 = vsel %vm2002, %v2006, %v2008
      %v2010 = vrot.slane %v1551, 3
      %v2011 = vsel %vm2002, %v2008, %v2010
      %v2012 = vrot.slane %v1552, 3
      %v2013 = vsel %vm2002, %v2010, %v2012
      %v2014 = vrot.slane %v1553, 3
      %v2015 = vsel %vm2002, %v2012, %v2014
      %v2016 = vrot.slane %v1554, 3
      %v2017 = vsel %vm2002, %v2014, %v2016
      %v2018 = vrot.slane %v1746, 3
      %v2019 = vsel %vm2002, %v2016, %v2018
      %v2028 = vunpack.c.l.b16 %v1991
      %v2029 = vunpack.c.l.b16 %v1992
      %v2030 = vunpack.c.l.b16 %v1993
      %v2031 = vunpack.c.l.b16 %v1994
      %v2032 = vunpack.c.l.b16 %v1995
      %v2033 = vunpack.c.l.b16 %v1996
      %v2034 = vunpack.c.l.b16 %v1997
      %v2035 = vunpack.c.l.b16 %v1998
      %v2036 = vpack.c.b16 %v2029, %v2028
      %v2037 = vpack.c.b16 %v2031, %v2030
      %v2038 = vpack.c.b16 %v2033, %v2032
      %v2039 = vpack.c.b16 %v2035, %v2034
      %v2045 = vsel %vm342, %v2005, 0
      %v2048 = vsel %vm342, %v2007, 0
      %v2051 = vsel %vm342, %v2009, 0
      %v2054 = vsel %vm342, %v2011, 0
      %v2057 = vsel %vm342, %v2013, 0
      %v2060 = vsel %vm342, %v2015, 0
      %v2063 = vsel %vm342, %v2017, 0
      %v2066 = vsel %vm342, %v2019, 0
      %2068 = vmatprep.subr.bf16.mxu0 0
      %2069 = vmatpush1.bf16.msra.mxu0 %v2036
      %2070 = vmatprep.subr.bf16.mxu0 0
      %2071 = vmatpush1.bf16.msra.mxu0 %v2037
      %2072 = vmatprep.subr.bf16.mxu0 0
      %2073 = vmatpush1.bf16.msra.mxu0 %v2038
      %2074 = vmatprep.subr.bf16.mxu0 0
      %2075 = vmatpush1.bf16.msra.mxu0 %v2039
      %2076 = vmatprep.subr.bf16.mxu0 0
      %2077 = vmatpush1.bf16.msra.mxu0 0
      %2078 = vmatprep.subr.bf16.mxu0 0
      %2079 = vmatpush1.bf16.msra.mxu0 0
      %2080 = vmatprep.subr.bf16.mxu0 0
      %2081 = vmatpush1.bf16.msra.mxu0 0
      %2082 = vmatprep.subr.bf16.mxu0 0
      %2083 = vmatpush1.bf16.msra.mxu0 0
      %2084 = vmatprep.subr.bf16.mxu0 0
      %2085 = vmatpush1.bf16.msra.mxu0 0
      %2086 = vmatprep.subr.bf16.mxu0 0
      %2087 = vmatpush1.bf16.msra.mxu0 0
      %2088 = vmatprep.subr.bf16.mxu0 0
      %2089 = vmatpush1.bf16.msra.mxu0 0
      %2090 = vmatprep.subr.bf16.mxu0 0
      %2091 = vmatpush1.bf16.msra.mxu0 0
      %2092 = vmatprep.subr.bf16.mxu0 0
      %2093 = vmatpush1.bf16.msra.mxu0 0
      %2094 = vmatprep.subr.bf16.mxu0 0
      %2095 = vmatpush1.bf16.msra.mxu0 0
      %2096 = vmatprep.subr.bf16.mxu0 0
      %2097 = vmatpush1.bf16.msra.mxu0 0
      %2098 = vmatprep.subr.bf16.mxu0 0
      %2099 = vmatpush1.bf16.msra.mxu0 0
      %2100 = vmatprep.mubr.bf16.mxu0 0
      %2101 = vmatmul.mubr.bf16.gmra.mrb[0].mxu0 %v2045
      %v2102 = vpop.f32.mrb[0].mxu0
      %v2103 = vadd.f32 0.0, %v2102
      %v2104 = vpop.f32.mrb[0].mxu0
      %v2105 = vpop.f32.mrb[0].mxu0
      %v2106 = vadd.f32 0.0, %v2105
      %v2107 = vpop.f32.mrb[0].mxu0
      %2108 = vmatprep.mubr.bf16.mxu0 0
      %2109 = vmatmul.mubr.bf16.gmra.mrb[0].mxu0 %v2048
      %v2110 = vpop.f32.mrb[0].mxu0
      %v2111 = vadd.f32 0.0, %v2110
      %v2112 = vpop.f32.mrb[0].mxu0
      %v2113 = vpop.f32.mrb[0].mxu0
      %v2114 = vadd.f32 0.0, %v2113
      %v2115 = vpop.f32.mrb[0].mxu0
      %2116 = vmatprep.mubr.bf16.mxu0 0
      %2117 = vmatmul.mubr.bf16.gmra.mrb[0].mxu0 %v2051
      %v2118 = vpop.f32.mrb[0].mxu0
      %v2119 = vadd.f32 0.0, %v2118
      %v2120 = vpop.f32.mrb[0].mxu0
      %v2121 = vpop.f32.mrb[0].mxu0
      %v2122 = vadd.f32 0.0, %v2121
      %v2123 = vpop.f32.mrb[0].mxu0
      %2124 = vmatprep.mubr.bf16.mxu0 0
      %2125 = vmatmul.mubr.bf16.gmra.mrb[0].mxu0 %v2054
      %v2126 = vpop.f32.mrb[0].mxu0
      %v2127 = vadd.f32 0.0, %v2126
      %v2128 = vpop.f32.mrb[0].mxu0
      %v2129 = vpop.f32.mrb[0].mxu0
      %v2130 = vadd.f32 0.0, %v2129
      %v2131 = vpop.f32.mrb[0].mxu0
      %2132 = vmatprep.mubr.bf16.mxu0 0
      %2133 = vmatmul.mubr.bf16.gmra.mrb[0].mxu0 %v2057
      %v2134 = vpop.f32.mrb[0].mxu0
      %v2135 = vadd.f32 0.0, %v2134
      %v2136 = vpop.f32.mrb[0].mxu0
      %v2137 = vpop.f32.mrb[0].mxu0
      %v2138 = vadd.f32 0.0, %v2137
      %v2139 = vpop.f32.mrb[0].mxu0
      %2140 = vmatprep.mubr.bf16.mxu0 0
      %2141 = vmatmul.mubr.bf16.gmra.mrb[0].mxu0 %v2060
      %v2142 = vpop.f32.mrb[0].mxu0
      %v2143 = vadd.f32 0.0, %v2142
      %v2144 = vpop.f32.mrb[0].mxu0
      %v2145 = vpop.f32.mrb[0].mxu0
      %v2146 = vadd.f32 0.0, %v2145
      %v2147 = vpop.f32.mrb[0].mxu0
      %2148 = vmatprep.mubr.bf16.mxu0 0
      %2149 = vmatmul.mubr.bf16.gmra.mrb[0].mxu0 %v2063
      %v2150 = vpop.f32.mrb[0].mxu0
      %v2151 = vadd.f32 0.0, %v2150
      %v2152 = vpop.f32.mrb[0].mxu0
      %v2153 = vpop.f32.mrb[0].mxu0
      %v2154 = vadd.f32 0.0, %v2153
      %v2155 = vpop.f32.mrb[0].mxu0
      %2156 = vmatprep.mubr.bf16.mxu0 0
      %2157 = vmatmul.mubr.bf16.gmra.mrb[0].mxu0 %v2066
      %v2158 = vpop.f32.mrb[0].mxu0
      %v2159 = vadd.f32 0.0, %v2158
      %v2160 = vpop.f32.mrb[0].mxu0
      %v2161 = vpop.f32.mrb[0].mxu0
      %v2162 = vadd.f32 0.0, %v2161
      %v2163 = vpop.f32.mrb[0].mxu0
      %2164 = vdwg.mxu0
      %v2165 = vadd.f32 %v1973, %v2103
      %v2166 = vadd.f32 %v1974, %v2106
      %v2167 = vadd.f32 %v1975, %v2111
      %v2168 = vadd.f32 %v1976, %v2114
      %v2169 = vadd.f32 %v1977, %v2119
      %v2170 = vadd.f32 %v1978, %v2122
      %v2171 = vadd.f32 %v1979, %v2127
      %v2172 = vadd.f32 %v1980, %v2130
      %v2173 = vadd.f32 %v1981, %v2135
      %v2174 = vadd.f32 %v1982, %v2138
      %v2175 = vadd.f32 %v1983, %v2143
      %v2176 = vadd.f32 %v1984, %v2146
      %v2177 = vadd.f32 %v1985, %v2151
      %v2178 = vadd.f32 %v1986, %v2154
      %v2179 = vadd.f32 %v1987, %v2159
      %v2180 = vadd.f32 %v1988, %v2162
      %v2181 = vld [vmem:[%s2] sm:$0x1]
      %v2183 = vlaneseq
      %v2184 = vshrl.u32 %v2183, 7
      %v2185 = vsub.s32 0, %v2184
      %v2186 = vrot.slane %v2181, %v2185
      %v2188 = vadd.f32 %v2165, %v2186
      %v2189 = vadd.f32 %v2166, %v2186
      %v2190 = vadd.f32 %v2167, %v2186
      %v2191 = vadd.f32 %v2168, %v2186
      %v2192 = vadd.f32 %v2169, %v2186
      %v2193 = vadd.f32 %v2170, %v2186
      %v2194 = vadd.f32 %v2171, %v2186
      %v2195 = vadd.f32 %v2172, %v2186
      %v2196 = vadd.f32 %v2173, %v2186
      %v2197 = vadd.f32 %v2174, %v2186
      %v2198 = vadd.f32 %v2175, %v2186
      %v2199 = vadd.f32 %v2176, %v2186
      %v2200 = vadd.f32 %v2177, %v2186
      %v2201 = vadd.f32 %v2178, %v2186
      %v2202 = vadd.f32 %v2179, %v2186
      %v2203 = vadd.f32 %v2180, %v2186
      %v2204 = vmax.f32 %v2188, 0.0
      %v2205 = vmax.f32 %v2189, 0.0
      %v2206 = vmax.f32 %v2190, 0.0
      %v2207 = vmax.f32 %v2191, 0.0
      %v2208 = vmax.f32 %v2192, 0.0
      %v2209 = vmax.f32 %v2193, 0.0
      %v2210 = vmax.f32 %v2194, 0.0
      %v2211 = vmax.f32 %v2195, 0.0
      %v2212 = vmax.f32 %v2196, 0.0
      %v2213 = vmax.f32 %v2197, 0.0
      %v2214 = vmax.f32 %v2198, 0.0
      %v2215 = vmax.f32 %v2199, 0.0
      %v2216 = vmax.f32 %v2200, 0.0
      %v2217 = vmax.f32 %v2201, 0.0
      %v2218 = vmax.f32 %v2202, 0.0
      %v2219 = vmax.f32 %v2203, 0.0
      %vm2220 = vcmask 261120
      %2221 = vst.msk [vmem:[%s170] sm:$0xff] %vm2220, %v2204
      %2222 = vst.msk [vmem:[%s170 + $0x8] sm:$0xff] %vm2220, %v2205
      %2223 = vst.msk [vmem:[%s170 + $0x10] sm:$0xff] %vm2220, %v2206
      %2224 = vst.msk [vmem:[%s170 + $0x18] sm:$0xff] %vm2220, %v2207
      %2225 = vst.msk [vmem:[%s170 + $0x20] sm:$0xff] %vm2220, %v2208
      %2226 = vst.msk [vmem:[%s170 + $0x28] sm:$0xff] %vm2220, %v2209
      %2227 = vst.msk [vmem:[%s170 + $0x30] sm:$0xff] %vm2220, %v2210
      %2228 = vst.msk [vmem:[%s170 + $0x38] sm:$0xff] %vm2220, %v2211
      %2229 = vst.msk [vmem:[%s170 + $0x40] sm:$0xff] %vm2220, %v2212
      %2230 = vst.msk [vmem:[%s170 + $0x48] sm:$0xff] %vm2220, %v2213
      %2231 = vst.msk [vmem:[%s170 + $0x50] sm:$0xff] %vm2220, %v2214
      %2232 = vst.msk [vmem:[%s170 + $0x58] sm:$0xff] %vm2220, %v2215
      %2233 = vst.msk [vmem:[%s170 + $0x60] sm:$0xff] %vm2220, %v2216
      %2234 = vst.msk [vmem:[%s170 + $0x68] sm:$0xff] %vm2220, %v2217
      %2235 = vst.msk [vmem:[%s170 + $0x70] sm:$0xff] %vm2220, %v2218
      %2236 = vst.msk [vmem:[%s170 + $0x78] sm:$0xff] %vm2220, %v2219
      %p2237 = scmp.lt.s32.totalorder %s14, 5
      %s2238 = scalar_select %p2237, %s14, 5
      %s2239 = smul.addr %s2238, 16
      %s2240 = smul.addr %s2239, 8
      %s2241 = scalar_lea.vmem %s3, %s2240
      // Predicated region
      $region33: #{encoder_forward.5} parent=31 // pred_check
        %p2242 = pneg %p100
      $region34: #{encoder_forward.5} parent=31 // pred_check_branch
        %2244 = sbr.rel (%p2242) target = $region36
      $region35: #{encoder_forward.5} parent=31 // pred_region
        _
      $region36: #{encoder_forward.5} parent=31 // pred_fallthru
        _
    $region32: #{encoder_forward.5} parent=5 // pred_fallthru
      _
    %p2245 = scmp.le.s32.totalorder 2, %s9
    // Predicated region
    $region37: #{encoder_forward.5} parent=5 // pred_check
      %p2246 = pneg %p2245
    $region38: #{encoder_forward.5} parent=5 // pred_check_branch
      %2248 = sbr.rel (%p2246) target = $region40
    $region39: #{encoder_forward.5} parent=5 // pred_region
      %s2249 = ssub.s32 %s9, 2
      // Predicated region
      $region41: #{encoder_forward.5} parent=39 // pred_check
        %p2250 = pneg %p106
      $region42: #{encoder_forward.5} parent=39 // pred_check_branch
        %2252 = sbr.rel (%p2250) target = $region44
      $region43: #{encoder_forward.5} parent=39 // pred_region
        %p2253 = scmp.lt.s32.totalorder %s15, 5
        %s2254 = scalar_select %p2253, %s15, 5
        %s2255 = smul.addr %s2254, 16
        %s2256 = smul.addr %s2255, 8
        %s2257 = scalar_lea.vmem %s3, %s2256
      $region44: #{encoder_forward.5} parent=39 // pred_fallthru
        _
    $region40: #{encoder_forward.5} parent=5 // pred_fallthru
      _
  $region6: #{encoder_forward.5} parent=0 // loop_footer
    %s13 = sadd.s32 1, %s9
  $region7: #{encoder_forward.5} parent=0 // loop_footer_branch
    %8 = sbr.rel target = $region3
  $region8: #{encoder_forward.5} parent=0 // loop_exit
    _

</llo_original>
